<compile_context>
chip_gen: v7x
topology: tpu7x:2x2x1
jax: 0.10.0
libtpu: 0.0.40
codegen_flags: <defaults>
</compile_context>

<pallas_src>
import math
import functools

import jax
import jax.numpy as jnp
from jax.experimental import pallas as pl
from jax.experimental.pallas import tpu as pltpu


# ----------------------------------------------------------------------------
# Kernel: one wide MXU matmul + fused phase/cos/scale epilogue.
# ----------------------------------------------------------------------------
def _fastfood_kernel(x_ref, w_ref, u_ref, o_ref, *, nonlinearity, out_scale):
    # x_ref : (tb, d)        bf16   batch tile (streamed)
    # w_ref : (d, md_pad)    bf16   fully folded Fastfood matrix (VMEM-resident)
    # u_ref : (1, md_pad)    f32    random phase, zero-padded past output_dim
    # o_ref : (tb, md_pad)   f32    lane-dense output block
    vx = jnp.dot(x_ref[...], w_ref[...], preferred_element_type=jnp.float32)  # MXU
    if nonlinearity:
        vx = jnp.cos(vx + u_ref[...]) * out_scale                             # VPU + EUP
    o_ref[...] = vx.astype(o_ref.dtype)                                       # single 128-lane-dense store


# ----------------------------------------------------------------------------
# Wrapper
# ----------------------------------------------------------------------------
def _round_up(x, n):
    return ((x + n - 1) // n) * n


def _pick_tb(batch):
    """Batch tile: >=16, multiple of 8 (128 for big batches), >=2 grid steps when possible."""
    if batch >= 1024:
        return 512
    if batch >= 256:
        return min(512, max(128, 128 * ((batch // 2) // 128)))
    if batch > 32:
        return max(16, _round_up(pl.cdiv(batch, 2), 8))
    return max(16, _round_up(batch, 8))


def fastfood_forward(x, W, U_pad, *, output_dim, nonlinearity=True, tb=None,
                     out_dtype=jnp.float32):
    """x: (batch, d) -> (batch, output_dim), matching FastfoodLayer.forward."""
    batch, d = x.shape
    md_pad = W.shape[1]
    out_scale = math.sqrt(2.0 / output_dim)

    if tb is None:
        tb = _pick_tb(batch)
    tb = max(16, (tb // 8) * 8)
    padded = pl.cdiv(batch, tb) * tb

    xp = x.astype(jnp.bfloat16)
    if padded != batch:
        xp = jnp.pad(xp, ((0, padded - batch), (0, 0)))
    wb = W.astype(jnp.bfloat16)
    u2 = U_pad.reshape(1, md_pad).astype(jnp.float32)

    kernel = functools.partial(_fastfood_kernel,
                               nonlinearity=nonlinearity, out_scale=out_scale)

    # ---- VMEM budget (weights/U conservatively counted double-buffered) ----
    out_itemsize = jnp.dtype(out_dtype).itemsize
    vmem_need = (2 * tb * d * 2                   # x tile, bf16, double-buffered
                 + 2 * tb * md_pad * out_itemsize  # out tile, double-buffered
                 + 2 * d * md_pad * 2              # W (bf16)
                 + 2 * md_pad * 4                  # U (f32)
                 + (4 << 20))                      # headroom for compiler scratch
    try:
        vmem_cap = int(pltpu.get_tpu_info().vmem_capacity_bytes)
    except Exception:
        vmem_cap = 64 << 20
    vmem_limit = int(min(int(0.8 * vmem_cap), max(32 << 20, vmem_need)))

    # ---- cost estimate for XLA scheduling ----
    cost = pl.CostEstimate(
        flops=2 * padded * d * md_pad,
        transcendentals=(padded * md_pad) if nonlinearity else 0,
        bytes_accessed=(padded * d * 2 + d * md_pad * 2 + md_pad * 4
                        + padded * md_pad * out_itemsize),
    )

    def build_call(single_buffer_params):
        pk = {"pipeline_mode": pl.Buffered(1)} if single_buffer_params else {}
        return pl.pallas_call(
            kernel,
            out_shape=jax.ShapeDtypeStruct((padded, md_pad), out_dtype),
            grid_spec=pltpu.PrefetchScalarGridSpec(
                num_scalar_prefetch=0,
                grid=(padded // tb,),
                in_specs=[
                    pl.BlockSpec((tb, d), lambda i: (i, 0)),              # x (streamed)
                    pl.BlockSpec((d, md_pad), lambda i: (0, 0), **pk),    # W (resident)
                    pl.BlockSpec((1, md_pad), lambda i: (0, 0), **pk),    # U (resident)
                ],
                out_specs=pl.BlockSpec((tb, md_pad), lambda i: (i, 0)),
            ),
            compiler_params=pltpu.CompilerParams(
                dimension_semantics=("parallel",),
                vmem_limit_bytes=vmem_limit),
            cost_estimate=cost,
        )

    try:
        out = build_call(True)(xp, wb, u2)
    except Exception:
        # Fallback if single-buffered resident params are rejected by this JAX build.
        out = build_call(False)(xp, wb, u2)

    return out[:batch, :output_dim]


# ----------------------------------------------------------------------------
# Parameter construction + offline folding (mirrors FastfoodLayer.__init__)
# ----------------------------------------------------------------------------
def sylvester_hadamard(d):
    Hm = jnp.array([[1.0]], dtype=jnp.float32)
    while Hm.shape[0] < d:
        Hm = jnp.block([[Hm, Hm], [Hm, -Hm]])
    return Hm


def make_fastfood_params(key, input_dim, output_dim):
    """Non-learnable path of FastfoodLayer.new_feature_map, sampled with jax.random."""
    m = math.ceil(output_dim / input_dim)
    d = input_dim
    kP, kB, kG, kS, kU = jax.random.split(key, 5)

    P = jnp.stack([jax.random.permutation(k, d)
                   for k in jax.random.split(kP, m)])                    # (m, d) int32
    B = 2.0 * jax.random.bernoulli(kB, 0.5, (m, d)).astype(jnp.float32) - 1.0
    G = jax.random.normal(kG, (m, d), dtype=jnp.float32)
    chi2 = 2.0 * jax.random.gamma(kS, d / 2.0, (m, d), dtype=jnp.float32)
    S = jnp.sqrt(chi2) / jnp.linalg.norm(G, axis=1, keepdims=True)
    U = 2.0 * jnp.pi * jax.random.uniform(kU, (output_dim,), dtype=jnp.float32)

    H = sylvester_hadamard(d)
    return dict(m=m, d=d, P=P, B=B, G=G, S=S, U=U, H=H)


def fold_fastfood_weights(params, *, scale=1.0):
    """Fold B, H, Pi, G, H, S and 1/(sigma*sqrt(d)) into ONE (d, md_pad) matrix (f32),
    with md = m*d padded up to a multiple of 128 lanes.  Also returns the matching
    zero-padded phase vector U_pad of length md_pad."""
    H, B, G, S, P = params["H"], params["B"], params["G"], params["S"], params["P"]
    m, d = B.shape
    norm = 1.0 / (scale * math.sqrt(d))
    # One-hot permutation matrices: Pmat[j, p, k] = 1 iff P[j, k] == p
    Pmat = jnp.transpose(jax.nn.one_hot(P, d, dtype=jnp.float32), (0, 2, 1))
    BH = B[:, :, None] * H[None, :, :]                     # diag(B_j) @ H
    BHP = jnp.einsum('jde,jef->jdf', BH, Pmat)             # ... @ Pmat_j
    W1 = BHP * G[:, None, :]                               # ... @ diag(G_j)
    W2 = H[None, :, :] * (S * norm)[:, None, :]            # H @ diag(S_j * norm)
    Wfull = jnp.einsum('jde,jef->jdf', W1, W2)             # (m, d, d)  full fold in f32
    W = jnp.transpose(Wfull, (1, 0, 2)).reshape(d, m * d)  # column-stacked: (d, m*d)

    output_dim = params["U"].shape[0]
    md_pad = _round_up(m * d, 128)
    if md_pad != m * d:
        W = jnp.pad(W, ((0, 0), (0, md_pad - m * d)))
    U_pad = jnp.zeros((md_pad,), jnp.float32).at[:output_dim].set(params["U"])
    return W, U_pad


# ----------------------------------------------------------------------------
# References for verification
# ----------------------------------------------------------------------------
def fastfood_reference(x, params, *, output_dim, scale=1.0, nonlinearity=True):
    """Faithful f32 mirror of the PyTorch forward."""
    H, B, G, S, P, U = (params["H"], params["B"], params["G"],
                        params["S"], params["P"], params["U"])
    m = params["m"]
    batch, d = x.shape
    xr = x.reshape(batch, 1, d)
    Bx = xr * B
    HBx = Bx @ H                                           # H symmetric
    idx = jnp.broadcast_to(P[None], (batch, m, d))
    PHBx = jnp.take_along_axis(HBx, idx, axis=-1)
    GP = PHBx * G
    HG = GP @ H
    SH = HG * S
    Vx = SH.reshape(batch, m * d) * (1.0 / (scale * math.sqrt(d)))
    res = Vx[:, :output_dim]
    if nonlinearity:
        res = jnp.cos(res + U) * math.sqrt(2.0 / output_dim)
    return res


def fastfood_folded_reference(x, W, U_pad, *, output_dim, nonlinearity=True):
    """Same folded bf16-operand math as the kernel, in plain XLA (tight check of
    the Pallas tiling / residency / padding plumbing)."""
    vx = jnp.dot(x.astype(jnp.bfloat16), W.astype(jnp.bfloat16),
                 preferred_element_type=jnp.float32)
    if nonlinearity:
        vx = jnp.cos(vx + U_pad[None, :]) * math.sqrt(2.0 / output_dim)
    return vx[:, :output_dim]


# ----------------------------------------------------------------------------
if __name__ == "__main__":
    batch = 200          # not a tile multiple -> exercises batch padding
    input_dim = 32       # must be a power of 2 (Hadamard)
    output_dim = 80      # -> m = 3, m*d = 96 -> md_pad = 128 (exercises lane padding + truncation)
    scale = 1.0

    key = jax.random.PRNGKey(0)
    kx, kp = jax.random.split(key)
    x = jax.random.normal(kx, (batch, input_dim), dtype=jnp.float32)
    params = make_fastfood_params(kp, input_dim, output_dim)
    W, U_pad = fold_fastfood_weights(params, scale=scale)

    out = fastfood_forward(x, W, U_pad, output_dim=output_dim, nonlinearity=True)
    out = jax.block_until_ready(out)
    assert out.shape == (batch, output_dim)

    # Tight check: identical folded bf16 math in plain XLA (verifies kernel plumbing).
    folded_ref = fastfood_folded_reference(x, W, U_pad,
                                           output_dim=output_dim, nonlinearity=True)
    assert jnp.allclose(out, folded_ref, atol=2e-3, rtol=0.0), \
        "mismatch vs folded (bf16) reference"

    # Loose check: faithful f32 PyTorch-style forward (verifies the algebraic fold;
    # slack accounts for the intentional bf16 matmul-operand optimization).
    ref = fastfood_reference(x, params, output_dim=output_dim, scale=scale,
                             nonlinearity=True)
    assert jnp.allclose(out, ref, atol=5e-2, rtol=0.0), "mismatch vs f32 reference"

    print("KERNEL_OK")
</pallas_src>

<mosaic_0001>
module attributes {stable_mosaic.version = 11 : i64} {
  func.func @_fastfood_kernel(%arg0: i32, %arg1: memref<104x32xbf16, #tpu.memory_space<vmem>>, %arg2: memref<32x128xbf16, #tpu.memory_space<vmem>>, %arg3: memref<1x128xf32, #tpu.memory_space<vmem>>, %arg4: memref<104x128xf32, #tpu.memory_space<vmem>>) attributes {dimension_semantics = [#tpu.dimension_semantics<parallel>], iteration_bounds = array<i64: 2>, scalar_prefetch = 0 : i64, scratch_operands = 0 : i64, tpu.core_type = #tpu.core_type<tc>, window_params = [{transform_indices = @transform_0, window_bounds = array<i64: 104, 32>}, {pipeline_mode = #tpu.pipeline_mode<synchronous>, transform_indices = @transform_1, window_bounds = array<i64: 32, 128>}, {pipeline_mode = #tpu.pipeline_mode<synchronous>, transform_indices = @transform_2, window_bounds = array<i64: 1, 128>}, {transform_indices = @transform_3, window_bounds = array<i64: 104, 128>}]} {
    %c0 = arith.constant 0 : index
    %c0_0 = arith.constant 0 : index
    %0 = vector.load %arg1[%c0, %c0_0] : memref<104x32xbf16, #tpu.memory_space<vmem>>, vector<104x32xbf16>
    %c0_1 = arith.constant 0 : index
    %c0_2 = arith.constant 0 : index
    %1 = vector.load %arg2[%c0_1, %c0_2] : memref<32x128xbf16, #tpu.memory_space<vmem>>, vector<32x128xbf16>
    %cst = arith.constant dense<0.000000e+00> : vector<104x128xf32>
    %2 = tpu.matmul %0, %1, %cst {dimension_numbers = #tpu.dot_dimension_numbers<[1], [0], [0], [1], [0, 0, 1, 1], [], []>} : vector<104x32xbf16>, vector<32x128xbf16>, vector<104x128xf32> -> vector<104x128xf32>
    %c0_3 = arith.constant 0 : index
    %c0_4 = arith.constant 0 : index
    %3 = vector.load %arg3[%c0_3, %c0_4] : memref<1x128xf32, #tpu.memory_space<vmem>>, vector<1x128xf32>
    %4 = vector.broadcast %3 : vector<1x128xf32> to vector<104x128xf32>
    %5 = arith.addf %2, %4 : vector<104x128xf32>
    %6 = math.cos %5 : vector<104x128xf32>
    %cst_5 = arith.constant 0.158113882 : f32
    %7 = vector.broadcast %cst_5 : f32 to vector<104x128xf32>
    %8 = arith.mulf %6, %7 : vector<104x128xf32>
    %c0_6 = arith.constant 0 : index
    %c0_7 = arith.constant 0 : index
    %9 = vector.load %arg4[%c0_6, %c0_7] : memref<104x128xf32, #tpu.memory_space<vmem>>, vector<104x128xf32>
    tpu.vector_store %arg4[%c0_6, %c0_7], %8 {strides = array<i32>} : memref<104x128xf32, #tpu.memory_space<vmem>>, vector<104x128xf32>,
    return
  }
  func.func @transform_0(%arg0: i32) -> (i32, i32) {
    %c0_i32 = arith.constant 0 : i32
    %c0_i32_0 = arith.constant 0 : i32
    return %arg0, %c0_i32 : i32, i32
  }
  func.func @transform_1(%arg0: i32) -> (i32, i32) {
    %c0_i32 = arith.constant 0 : i32
    %c0_i32_0 = arith.constant 0 : i32
    %c0_i32_1 = arith.constant 0 : i32
    return %c0_i32, %c0_i32_0 : i32, i32
  }
  func.func @transform_2(%arg0: i32) -> (i32, i32) {
    %c0_i32 = arith.constant 0 : i32
    %c0_i32_0 = arith.constant 0 : i32
    %c0_i32_1 = arith.constant 0 : i32
    return %c0_i32, %c0_i32_0 : i32, i32
  }
  func.func @transform_3(%arg0: i32) -> (i32, i32) {
    %c0_i32 = arith.constant 0 : i32
    %c0_i32_0 = arith.constant 0 : i32
    return %arg0, %c0_i32 : i32, i32
  }
}

module attributes {stable_mosaic.version = 11 : i64} {
  func.func @_fastfood_kernel(%arg0: i32, %arg1: memref<104x32xbf16, #tpu.memory_space<vmem>>, %arg2: memref<32x128xbf16, #tpu.memory_space<vmem>>, %arg3: memref<1x128xf32, #tpu.memory_space<vmem>>, %arg4: memref<104x128xf32, #tpu.memory_space<vmem>>) attributes {dimension_semantics = [#tpu.dimension_semantics<parallel>], iteration_bounds = array<i64: 2>, scalar_prefetch = 0 : i64, scratch_operands = 0 : i64, tpu.core_type = #tpu.core_type<tc>, window_params = [{transform_indices = @transform_0, window_bounds = array<i64: 104, 32>}, {pipeline_mode = #tpu.pipeline_mode<synchronous>, transform_indices = @transform_1, window_bounds = array<i64: 32, 128>}, {pipeline_mode = #tpu.pipeline_mode<synchronous>, transform_indices = @transform_2, window_bounds = array<i64: 1, 128>}, {transform_indices = @transform_3, window_bounds = array<i64: 104, 128>}]} {
    %c0 = arith.constant 0 : index
    %c0_0 = arith.constant 0 : index
    %0 = vector.load %arg1[%c0, %c0_0] : memref<104x32xbf16, #tpu.memory_space<vmem>>, vector<104x32xbf16>
    %c0_1 = arith.constant 0 : index
    %c0_2 = arith.constant 0 : index
    %1 = vector.load %arg2[%c0_1, %c0_2] : memref<32x128xbf16, #tpu.memory_space<vmem>>, vector<32x128xbf16>
    %cst = arith.constant dense<0.000000e+00> : vector<104x128xf32>
    %2 = tpu.matmul %0, %1, %cst {dimension_numbers = #tpu.dot_dimension_numbers<[1], [0], [0], [1], [0, 0, 1, 1], [], []>} : vector<104x32xbf16>, vector<32x128xbf16>, vector<104x128xf32> -> vector<104x128xf32>
    %c0_3 = arith.constant 0 : index
    %c0_4 = arith.constant 0 : index
    %3 = vector.load %arg3[%c0_3, %c0_4] : memref<1x128xf32, #tpu.memory_space<vmem>>, vector<1x128xf32>
    %4 = vector.broadcast %3 : vector<1x128xf32> to vector<104x128xf32>
    %5 = arith.addf %2, %4 : vector<104x128xf32>
    %6 = math.cos %5 : vector<104x128xf32>
    %cst_5 = arith.constant 0.158113882 : f32
    %7 = vector.broadcast %cst_5 : f32 to vector<104x128xf32>
    %8 = arith.mulf %6, %7 : vector<104x128xf32>
    %c0_6 = arith.constant 0 : index
    %c0_7 = arith.constant 0 : index
    %9 = vector.load %arg4[%c0_6, %c0_7] : memref<104x128xf32, #tpu.memory_space<vmem>>, vector<104x128xf32>
    tpu.vector_store %arg4[%c0_6, %c0_7], %8 {strides = array<i32>} : memref<104x128xf32, #tpu.memory_space<vmem>>, vector<104x128xf32>,
    return
  }
  func.func @transform_0(%arg0: i32) -> (i32, i32) {
    %c0_i32 = arith.constant 0 : i32
    %c0_i32_0 = arith.constant 0 : i32
    return %arg0, %c0_i32 : i32, i32
  }
  func.func @transform_1(%arg0: i32) -> (i32, i32) {
    %c0_i32 = arith.constant 0 : i32
    %c0_i32_0 = arith.constant 0 : i32
    %c0_i32_1 = arith.constant 0 : i32
    return %c0_i32, %c0_i32_0 : i32, i32
  }
  func.func @transform_2(%arg0: i32) -> (i32, i32) {
    %c0_i32 = arith.constant 0 : i32
    %c0_i32_0 = arith.constant 0 : i32
    %c0_i32_1 = arith.constant 0 : i32
    return %c0_i32, %c0_i32_0 : i32, i32
  }
  func.func @transform_3(%arg0: i32) -> (i32, i32) {
    %c0_i32 = arith.constant 0 : i32
    %c0_i32_0 = arith.constant 0 : i32
    return %arg0, %c0_i32 : i32, i32
  }
}

</mosaic_0001>

<llo_original>
// kernel: tpu_custom_call.1
$region0: #{tpu_custom_call.1}
  #allocation0 [shape = 'u32[]', space=smem, size = 0x4, offset = 0x4, fixed_abs, tag = 'smem constant byte address 0x4 - core index']
  #allocation1 [shape = 'u32[144,128]{1,0:T(1,128)}', space=vmem, size = 0x12000, scoped, tag = 'internal scratch']
  %s0 = inlined_call_operand.vmem [shape: bf16[208,32], index: 0, kind: input, shape index: {}]
  %s1 = inlined_call_operand.vmem [shape: bf16[32,128], index: 1, kind: input, shape index: {}]
  %s2 = inlined_call_operand.vmem [shape: f32[1,128], index: 2, kind: input, shape index: {}]
  %s3 = inlined_call_operand.hbm [shape: f32[208,128], index: 3, kind: output, shape index: {}]
  %s4 = sld [smem:[#allocation0]]
  $region45: #{tpu_custom_call.1} parent=0
    _
  %s6 = ssub.s32 1, %s4
  %s7 = scalar_select 0, %s6, %s4
  $region1: #{tpu_custom_call.1} parent=0
    #allocation2 [shape = 'u8[106496]{0}', space=vmem, size = 0x1a000, scoped, tag = 'output window, operand 0']
    #allocation3 [shape = 's32[2]{0}', space=sflag, size = 0x8, scoped, tag = 'scoped memory for tpu_custom_call.1']
    %8 = vsyncpa [#allocation3], 0
    %s9 = scalar_lea.sflag [#allocation3], 1
    %10 = vsyncpa %s9, 0
    loop: start=0, step=1, limit=4
    $region2: #{tpu_custom_call.1} parent=1 // loop_pre_header
      _
    $region3: #{tpu_custom_call.1} parent=1 // loop_header
      %s12 = sphi 0, %s16
      %p13 = scmp.ge.s32.totalorder %s12, 4
      %s22 = sphi 0, %s24
      %s25 = sphi 0, %s22
      %s26 = sphi 0, %s25
      %s42 = sphi 0, %s26
      %s46 = sphi 0, %s46
      %s48 = sphi 0, %s46
      %s49 = sphi 0, %s48
      %s63 = sphi 0, %s49
      %s67 = sphi 0, %s67
      %s69 = sphi 0, %s67
      %s70 = sphi 0, %s69
      %s84 = sphi 0, %s70
      %s90 = sphi 0, %s92
      %s93 = sphi 0, %s90
      %s94 = sphi 0, %s93
      %s110 = sphi 0, %s94
    $region4: #{tpu_custom_call.1} parent=1 // loop_header_branch
      %15 = sbr.rel (%p13) target = $region8
    $region5: #{tpu_custom_call.1} parent=1 // loop_body
      %s17 = ssub.s32 %s12, 1
      %s18 = ssub.s32 %s12, 2
      %s19 = sadd.s32 %s12, 1
      %s20 = ssub.s32 %s12, %s19
      %p21 = scmp.eq.s32.totalorder %s20, 0
      %s23 = sadd.s32 %s22, 1
      %s24 = scalar_select %p21, %s22, %s23
      %p27 = pneg %p21
      %p28 = scmp.eq.s32.totalorder %s12, 1
      %p29 = por %p27, %p28
      %p30 = scmp.ne.s32.totalorder %s22, %s25
      %p31 = scmp.eq.s32.totalorder %s12, 0
      %p32 = por %p30, %p31
      %p33 = scmp.ne.s32.totalorder %s22, %s25
      %p34 = scmp.eq.s32.totalorder %s17, 1
      %p35 = por %p33, %p34
      %p36 = scmp.ne.s32.totalorder %s25, %s26
      %p37 = scmp.eq.s32.totalorder %s17, 0
      %p38 = por %p36, %p37
      %p39 = scmp.ne.s32.totalorder %s25, %s26
      %p40 = scmp.eq.s32.totalorder %s18, 1
      %p41 = por %p39, %p40
      %p43 = scmp.ne.s32.totalorder %s26, %s42
      %p44 = scmp.eq.s32.totalorder %s18, 0
      %p45 = por %p43, %p44
      %s47 = sadd.s32 %s46, 1
      %p50 = scmp.eq.s32.totalorder %s12, 1
      %p51 = scmp.ne.s32.totalorder %s46, %s48
      %p52 = scmp.eq.s32.totalorder %s12, 0
      %p53 = por %p51, %p52
      %p54 = scmp.ne.s32.totalorder %s46, %s48
      %p55 = scmp.eq.s32.totalorder %s17, 1
      %p56 = por %p54, %p55
      %p57 = scmp.ne.s32.totalorder %s48, %s49
      %p58 = scmp.eq.s32.totalorder %s17, 0
      %p59 = por %p57, %p58
      %p60 = scmp.ne.s32.totalorder %s48, %s49
      %p61 = scmp.eq.s32.totalorder %s18, 1
      %p62 = por %p60, %p61
      %p64 = scmp.ne.s32.totalorder %s49, %s63
      %p65 = scmp.eq.s32.totalorder %s18, 0
      %p66 = por %p64, %p65
      %s68 = sadd.s32 %s67, 1
      %p71 = scmp.eq.s32.totalorder %s12, 1
      %p72 = scmp.ne.s32.totalorder %s67, %s69
      %p73 = scmp.eq.s32.totalorder %s12, 0
      %p74 = por %p72, %p73
      %p75 = scmp.ne.s32.totalorder %s67, %s69
      %p76 = scmp.eq.s32.totalorder %s17, 1
      %p77 = por %p75, %p76
      %p78 = scmp.ne.s32.totalorder %s69, %s70
      %p79 = scmp.eq.s32.totalorder %s17, 0
      %p80 = por %p78, %p79
      %p81 = scmp.ne.s32.totalorder %s69, %s70
      %p82 = scmp.eq.s32.totalorder %s18, 1
      %p83 = por %p81, %p82
      %p85 = scmp.ne.s32.totalorder %s70, %s84
      %p86 = scmp.eq.s32.totalorder %s18, 0
      %p87 = por %p85, %p86
      %s88 = ssub.s32 %s12, %s19
      %p89 = scmp.eq.s32.totalorder %s88, 0
      %s91 = sadd.s32 %s90, 1
      %s92 = scalar_select %p89, %s90, %s91
      %p95 = pneg %p89
      %p96 = scmp.eq.s32.totalorder %s12, 1
      %p97 = por %p95, %p96
      %p98 = scmp.ne.s32.totalorder %s90, %s93
      %p99 = scmp.eq.s32.totalorder %s12, 0
      %p100 = por %p98, %p99
      %p101 = scmp.ne.s32.totalorder %s90, %s93
      %p102 = scmp.eq.s32.totalorder %s17, 1
      %p103 = por %p101, %p102
      %p104 = scmp.ne.s32.totalorder %s93, %s94
      %p105 = scmp.eq.s32.totalorder %s17, 0
      %p106 = por %p104, %p105
      %p107 = scmp.ne.s32.totalorder %s93, %s94
      %p108 = scmp.eq.s32.totalorder %s18, 1
      %p109 = por %p107, %p108
      %p111 = scmp.ne.s32.totalorder %s94, %s110
      %p112 = scmp.eq.s32.totalorder %s18, 0
      %p113 = por %p111, %p112
      %p114 = scmp.le.s32.totalorder 1, %s12
      %p115 = scmp.lt.s32.totalorder %s12, 3
      %p116 = pnand %p114, %p115
      %p117 = pneg %p116
      // Predicated region
      $region9: #{tpu_custom_call.1} parent=5 // pred_check
        _
      $region10: #{tpu_custom_call.1} parent=5 // pred_check_branch
        %119 = sbr.rel (%p116) target = $region12
      $region11: #{tpu_custom_call.1} parent=5 // pred_region
        %s120 = ssub.s32 %s12, 1
        // Predicated region
        $region13: #{tpu_custom_call.1} parent=11 // pred_check
          %p121 = pneg %p59
        $region14: #{tpu_custom_call.1} parent=11 // pred_check_branch
          %123 = sbr.rel (%p121) target = $region16
        $region15: #{tpu_custom_call.1} parent=11 // pred_region
          _
        $region16: #{tpu_custom_call.1} parent=11 // pred_fallthru
          _
        // Predicated region
        $region17: #{tpu_custom_call.1} parent=11 // pred_check
          %p124 = pneg %p80
        $region18: #{tpu_custom_call.1} parent=11 // pred_check_branch
          %126 = sbr.rel (%p124) target = $region20
        $region19: #{tpu_custom_call.1} parent=11 // pred_region
          _
        $region20: #{tpu_custom_call.1} parent=11 // pred_fallthru
          _
      $region12: #{tpu_custom_call.1} parent=5 // pred_fallthru
        _
      %p127 = scmp.lt.s32.totalorder %s12, 2
      // Predicated region
      $region21: #{tpu_custom_call.1} parent=5 // pred_check
        %p128 = pneg %p127
      $region22: #{tpu_custom_call.1} parent=5 // pred_check_branch
        %130 = sbr.rel (%p128) target = $region24
      $region23: #{tpu_custom_call.1} parent=5 // pred_region
        // Predicated region
        $region25: #{tpu_custom_call.1} parent=23 // pred_check
          %p131 = pneg %p32
        $region26: #{tpu_custom_call.1} parent=23 // pred_check_branch
          %133 = sbr.rel (%p131) target = $region28
        $region27: #{tpu_custom_call.1} parent=23 // pred_region
          %s134 = smul.u32 13, %s12
          %p135 = scmp.lt.s32.totalorder %s134, 25
          %s136 = scalar_select %p135, %s134, 25
          %s137 = smul.addr %s136, 4
          %s138 = scalar_lea.vmem %s0, %s137
          %s139 = smul.u32 13, %s12
        $region28: #{tpu_custom_call.1} parent=23 // pred_fallthru
          _
      $region24: #{tpu_custom_call.1} parent=5 // pred_fallthru
        _
      %p140 = scmp.le.s32.totalorder 1, %s12
      %p141 = scmp.lt.s32.totalorder %s12, 3
      %p142 = pnand %p140, %p141
      %p143 = pneg %p142
      // Predicated region
      $region29: #{tpu_custom_call.1} parent=5 // pred_check
        _
      $region30: #{tpu_custom_call.1} parent=5 // pred_check_branch
        %145 = sbr.rel (%p142) target = $region32
      $region31: #{tpu_custom_call.1} parent=5 // pred_region
        %s146 = ssub.s32 %s12, 1
        %s147 = smul.u32 13, %s17
        %p148 = scmp.lt.s32.totalorder %s147, 25
        %s149 = scalar_select %p148, %s147, 25
        %s150 = smul.addr %s149, 4
        %s151 = scalar_lea.vmem %s0, %s150
        %p152 = pneg %p38
        %p153 = pneg %p35
        %p154 = pneg %p59
        %p155 = pneg %p56
        %p156 = pneg %p80
        %p157 = pneg %p77
        %p158 = pneg %p106
        %p159 = pneg %p103
        %s160 = sand.u32 %s93, 1
        %s161 = scalar_lea.sflag [#allocation3], %s160
        %s162 = sand.u32 %s93, 1
        %s163 = smul.addr %s162, 104
        %s164 = scalar_lea.vmem [#allocation2], %s163
        %s165 = smul.u32 13, %s17
        %p166 = scmp.lt.s32.totalorder %s165, 25
        %s167 = scalar_select %p166, %s165, 25
        %s168 = smul.addr %s167, 4
        %s169 = scalar_lea.vmem %s0, %s168
        %s170 = smul.u32 13, %s17
        %s171 = smul.u32 13, %s17
        %v173 = vld [vmem:[%s169] sm:$0xf]
        %v174 = vld [vmem:[%s169 + $0x4] sm:$0xf]
        %v175 = vld [vmem:[%s169 + $0x8] sm:$0xf]
        %v176 = vld [vmem:[%s169 + $0xc] sm:$0xf]
        %v177 = vld [vmem:[%s169 + $0x10] sm:$0xf]
        %v178 = vld [vmem:[%s169 + $0x14] sm:$0xf]
        %v179 = vld [vmem:[%s169 + $0x18] sm:$0xf]
        %v180 = vld [vmem:[%s169 + $0x1c] sm:$0xf]
        %v181 = vld [vmem:[%s169 + $0x20] sm:$0xf]
        %v182 = vld [vmem:[%s169 + $0x24] sm:$0xf]
        %v183 = vld [vmem:[%s169 + $0x28] sm:$0xf]
        %v184 = vld [vmem:[%s169 + $0x2c] sm:$0xf]
        %v185 = vld [vmem:[%s169 + $0x30] sm:$0xf]
        %v186 = vld [vmem:[%s1] sm:$0xf]
        %v187 = vld [vmem:[%s1 + $0x4] sm:$0xf]
        %v188 = vld [vmem:[%s1 + $0x8] sm:$0xf]
        %v189 = vld [vmem:[%s1 + $0xc] sm:$0xf]
        %v190 = vld [vmem:[%s2] sm:$0x1]
        %v192 = vlaneseq
        %v193 = vshrl.u32 %v192, 7
        %v194 = vsub.s32 0, %v193
        %v195 = vrot.slane %v190, %v194
        %v210 = vunpack.c.l.b16 %v173
        %v211 = vunpack.c.l.b16 %v174
        %v212 = vunpack.c.l.b16 %v175
        %v213 = vunpack.c.l.b16 %v176
        %v214 = vunpack.c.l.b16 %v177
        %v215 = vunpack.c.l.b16 %v178
        %v216 = vunpack.c.l.b16 %v179
        %v217 = vunpack.c.l.b16 %v180
        %v218 = vunpack.c.l.b16 %v181
        %v219 = vunpack.c.l.b16 %v182
        %v220 = vunpack.c.l.b16 %v183
        %v221 = vunpack.c.l.b16 %v184
        %v222 = vunpack.c.l.b16 %v185
        %v223 = vpack.c.b16 %v211, %v210
        %v224 = vpack.c.b16 %v213, %v212
        %v225 = vpack.c.b16 %v215, %v214
        %v226 = vpack.c.b16 %v217, %v216
        %v227 = vpack.c.b16 %v219, %v218
        %v228 = vpack.c.b16 %v221, %v220
        %v229 = vpack.c.b16 %v222, %v222
        %v234 = vunpack.c.l.b16 %v186
        %v235 = vunpack.c.l.b16 %v187
        %v236 = vunpack.c.l.b16 %v188
        %v237 = vunpack.c.l.b16 %v189
        %v238 = vpack.c.b16 %v235, %v234
        %v239 = vpack.c.b16 %v237, %v236
        %vm242 = vcmask 261120
        %v244 = vsel %vm242, %v223, 0
        %v247 = vsel %vm242, %v224, 0
        %v250 = vsel %vm242, %v225, 0
        %v253 = vsel %vm242, %v226, 0
        %v256 = vsel %vm242, %v227, 0
        %v259 = vsel %vm242, %v228, 0
        %v262 = vsel %vm242, %v229, 0
        %264 = vmatprep.subr.bf16.mxu0 0
        %265 = vmatpush1.bf16.msra.mxu0 %v238
        %266 = vmatprep.subr.bf16.mxu0 0
        %267 = vmatpush1.bf16.msra.mxu0 %v239
        %268 = vmatprep.subr.bf16.mxu0 0
        %269 = vmatpush1.bf16.msra.mxu0 0
        %270 = vmatprep.subr.bf16.mxu0 0
        %271 = vmatpush1.bf16.msra.mxu0 0
        %272 = vmatprep.subr.bf16.mxu0 0
        %273 = vmatpush1.bf16.msra.mxu0 0
        %274 = vmatprep.subr.bf16.mxu0 0
        %275 = vmatpush1.bf16.msra.mxu0 0
        %276 = vmatprep.subr.bf16.mxu0 0
        %277 = vmatpush1.bf16.msra.mxu0 0
        %278 = vmatprep.subr.bf16.mxu0 0
        %279 = vmatpush1.bf16.msra.mxu0 0
        %280 = vmatprep.subr.bf16.mxu0 0
        %281 = vmatpush1.bf16.msra.mxu0 0
        %282 = vmatprep.subr.bf16.mxu0 0
        %283 = vmatpush1.bf16.msra.mxu0 0
        %284 = vmatprep.subr.bf16.mxu0 0
        %285 = vmatpush1.bf16.msra.mxu0 0
        %286 = vmatprep.subr.bf16.mxu0 0
        %287 = vmatpush1.bf16.msra.mxu0 0
        %288 = vmatprep.subr.bf16.mxu0 0
        %289 = vmatpush1.bf16.msra.mxu0 0
        %290 = vmatprep.subr.bf16.mxu0 0
        %291 = vmatpush1.bf16.msra.mxu0 0
        %292 = vmatprep.subr.bf16.mxu0 0
        %293 = vmatpush1.bf16.msra.mxu0 0
        %294 = vmatprep.subr.bf16.mxu0 0
        %295 = vmatpush1.bf16.msra.mxu0 0
        %296 = vmatprep.mubr.bf16.mxu0 0
        %297 = vmatmul.mubr.bf16.gmra.mrb[0].mxu0 %v244
        %v298 = vpop.f32.mrb[0].mxu0
        %v299 = vadd.f32 %v195, %v298
        %v300 = vpop.f32.mrb[0].mxu0
        %v301 = vpop.f32.mrb[0].mxu0
        %v302 = vadd.f32 %v195, %v301
        %v303 = vpop.f32.mrb[0].mxu0
        %304 = vmatprep.mubr.bf16.mxu0 0
        %305 = vmatmul.mubr.bf16.gmra.mrb[0].mxu0 %v247
        %v306 = vpop.f32.mrb[0].mxu0
        %v307 = vadd.f32 %v195, %v306
        %v308 = vpop.f32.mrb[0].mxu0
        %v309 = vpop.f32.mrb[0].mxu0
        %v310 = vadd.f32 %v195, %v309
        %v311 = vpop.f32.mrb[0].mxu0
        %312 = vmatprep.mubr.bf16.mxu0 0
        %313 = vmatmul.mubr.bf16.gmra.mrb[0].mxu0 %v250
        %v314 = vpop.f32.mrb[0].mxu0
        %v315 = vadd.f32 %v195, %v314
        %v316 = vpop.f32.mrb[0].mxu0
        %v317 = vpop.f32.mrb[0].mxu0
        %v318 = vadd.f32 %v195, %v317
        %v319 = vpop.f32.mrb[0].mxu0
        %320 = vmatprep.mubr.bf16.mxu0 0
        %321 = vmatmul.mubr.bf16.gmra.mrb[0].mxu0 %v253
        %v322 = vpop.f32.mrb[0].mxu0
        %v323 = vadd.f32 %v195, %v322
        %v324 = vpop.f32.mrb[0].mxu0
        %v325 = vpop.f32.mrb[0].mxu0
        %v326 = vadd.f32 %v195, %v325
        %v327 = vpop.f32.mrb[0].mxu0
        %328 = vmatprep.mubr.bf16.mxu0 0
        %329 = vmatmul.mubr.bf16.gmra.mrb[0].mxu0 %v256
        %v330 = vpop.f32.mrb[0].mxu0
        %v331 = vadd.f32 %v195, %v330
        %v332 = vpop.f32.mrb[0].mxu0
        %v333 = vpop.f32.mrb[0].mxu0
        %v334 = vadd.f32 %v195, %v333
        %v335 = vpop.f32.mrb[0].mxu0
        %336 = vmatprep.mubr.bf16.mxu0 0
        %337 = vmatmul.mubr.bf16.gmra.mrb[0].mxu0 %v259
        %v338 = vpop.f32.mrb[0].mxu0
        %v339 = vadd.f32 %v195, %v338
        %v340 = vpop.f32.mrb[0].mxu0
        %v341 = vpop.f32.mrb[0].mxu0
        %v342 = vadd.f32 %v195, %v341
        %v343 = vpop.f32.mrb[0].mxu0
        %344 = vmatprep.mubr.bf16.mxu0 0
        %345 = vmatmul.mubr.bf16.gmra.mrb[0].mxu0 %v262
        %v346 = vpop.f32.mrb[0].mxu0
        %v347 = vadd.f32 %v195, %v346
        %v348 = vpop.f32.mrb[0].mxu0
        %v349 = vpop.f32.mrb[0].mxu0
        %v350 = vpop.f32.mrb[0].mxu0
        %351 = vdwg.mxu0
        %v352 = vand.u32 2147483647, %v299
        %vm353 = vcmp.le.f32.partialorder %v352, 0.7853982
        %vm354 = vcmp.lt.s32.totalorder %v299, 0
        %v355 = vand.u32 %v299, 2139095040
        %v356 = vshrl.u32 %v355, 23
        %v357 = vsub.s32 %v356, 127
        %v358 = vand.u32 2147483647, %v299
        %v359 = vand.u32 %v358, 8388607
        %v360 = vor.u32 %v359, 8388608
        %v361 = vsub.s32 0, %v360
        %v362 = vadd.s32 %v357, 1
        %vm363 = vcmp.gt.s32.totalorder %v362, 0
        %v364 = vsel %vm363, %v362, 0
        %v365 = vshrl.u32 %v364, 5
        %v366 = vand.u32 %v364, 31
        %v367 = vsub.s32 32, %v366
        %v368 = vshrl.u32 683565275, %v367
        %v369 = vshll.u32 683565275, %v366
        %v370 = vshrl.u32 2475754826, %v367
        %v371 = vor.u32 %v369, %v370
        %v372 = vshll.u32 2475754826, %v366
        %v373 = vshrl.u32 2131351028, %v367
        %v374 = vor.u32 %v372, %v373
        %v375 = vshll.u32 2131351028, %v366
        %v376 = vshrl.u32 2102212464, %v367
        %v377 = vor.u32 %v375, %v376
        %v378 = vshll.u32 2102212464, %v366
        %v379 = vshrl.u32 920167782, %v367
        %v380 = vor.u32 %v378, %v379
        %v381 = vshll.u32 920167782, %v366
        %v382 = vshrl.u32 1326507024, %v367
        %v383 = vor.u32 %v381, %v382
        %vm384 = vcmp.lt.s32.totalorder %v365, 1
        %vm385 = vcmp.lt.s32.totalorder %v365, 2
        %vm386 = vcmp.lt.s32.totalorder %v365, 3
        %vm387 = vcmp.lt.s32.totalorder %v365, 4
        %v388 = vsel %vm384, %v368, %v371
        %v389 = vsel %vm387, %v377, 2102212464
        %v390 = vsel %vm386, %v374, %v389
        %v391 = vsel %vm385, %v388, %v390
        %v392 = vsel %vm384, %v371, %v374
        %v393 = vsel %vm387, %v380, 920167782
        %v394 = vsel %vm386, %v377, %v393
        %v395 = vsel %vm385, %v392, %v394
        %v396 = vsel %vm384, %v374, %v377
        %v397 = vsel %vm387, %v383, 1326507024
        %v398 = vsel %vm386, %v380, %v397
        %v399 = vsel %vm385, %v396, %v398
        %v400 = vshll.u32 %v360, 8
        %v401 = vmul.u32.u64.compose %v400, %v399
        %v402 = vextract.low.u32 %v401
        %v403 = vextract.high.u32 %v401
        %v404 = vmul.u32.u64.compose %v400, %v395
        %v405 = vextract.low.u32 %v404
        %v406 = vextract.high.u32 %v404
        %v407 = vmul.u32 %v400, %v391
        %v408 = vadd.s32 %v403, %v405
        %vm409 = vc.u32 %v403, %v405
        %v410 = vadd.s32 %v406, 1
        %v411 = vsel %vm409, %v410, %v406
        %v412 = vadd.s32 %v407, %v411
        %v413 = vadd.s32 %v412, 536870912
        %v414 = vshrl.u32 %v413, 30
        %v415 = vshll.u32 %v414, 30
        %v416 = vsub.s32 %v412, %v415
        %vm417 = vcmp.lt.s32.totalorder %v416, 0
        %v418 = vsub.s32 0, %v416
        %v419 = vsel %vm417, %v418, %v416
        %v420 = vclz %v419
        %v421 = vsub.s32 %v420, 2
        %vm422 = vcmp.gt.s32.totalorder 0, %v421
        %v423 = vsel %vm422, 0, %v421
        %v424 = vsub.s32 32, %v423
        %v425 = vshll.u32 %v416, %v423
        %v426 = vshrl.u32 %v408, %v424
        %v427 = vor.u32 %v425, %v426
        %v428 = vsub.s32 4294967266, %v423
        %v429 = vadd.s32 %v428, 127
        %v430 = vshll.u32 %v429, 23
        %v431 = vor.u32 4788187, %v430
        %v432 = vand.u32 2147483647, %v431
        %v434 = vcvt.s32.f32 %v427
        %v435 = vmul.f32 %v434, %v432
        %v436 = vxor.u32 %v435, 2147483648
        %v437 = vsel %vm354, %v436, %v435
        %v438 = vsub.s32 4, %v414
        %v439 = vsel %vm354, %v438, %v414
        %v440 = vsel %vm353, %v299, %v437
        %v441 = vsel %vm353, 0, %v439
        %v442 = vcosq.f32.pop %v440
        %v443 = vsinq.f32.pop %v440
        %vm444 = vweird.f32 %v299
        %v445 = vand.u32 %v441, 3
        %vm446 = vcmp.lt.s32.totalorder %v445, 2
        %vm447 = vcmp.eq.s32.totalorder %v445, 0
        %v448 = vxor.u32 %v443, 2147483648
        %v449 = vsel %vm447, %v442, %v448
        %vm450 = vcmp.eq.s32.totalorder %v445, 2
        %v451 = vxor.u32 %v442, 2147483648
        %v452 = vsel %vm450, %v451, %v443
        %v453 = vsel %vm446, %v449, %v452
        %v454 = vsel %vm444, nan, %v453
        %v455 = vand.u32 2147483647, %v302
        %vm456 = vcmp.le.f32.partialorder %v455, 0.7853982
        %vm457 = vcmp.lt.s32.totalorder %v302, 0
        %v458 = vand.u32 %v302, 2139095040
        %v459 = vshrl.u32 %v458, 23
        %v460 = vsub.s32 %v459, 127
        %v461 = vand.u32 2147483647, %v302
        %v462 = vand.u32 %v461, 8388607
        %v463 = vor.u32 %v462, 8388608
        %v464 = vsub.s32 0, %v463
        %v465 = vadd.s32 %v460, 1
        %vm466 = vcmp.gt.s32.totalorder %v465, 0
        %v467 = vsel %vm466, %v465, 0
        %v468 = vshrl.u32 %v467, 5
        %v469 = vand.u32 %v467, 31
        %v470 = vsub.s32 32, %v469
        %v471 = vshrl.u32 683565275, %v470
        %v472 = vshll.u32 683565275, %v469
        %v473 = vshrl.u32 2475754826, %v470
        %v474 = vor.u32 %v472, %v473
        %v475 = vshll.u32 2475754826, %v469
        %v476 = vshrl.u32 2131351028, %v470
        %v477 = vor.u32 %v475, %v476
        %v478 = vshll.u32 2131351028, %v469
        %v479 = vshrl.u32 2102212464, %v470
        %v480 = vor.u32 %v478, %v479
        %v481 = vshll.u32 2102212464, %v469
        %v482 = vshrl.u32 920167782, %v470
        %v483 = vor.u32 %v481, %v482
        %v484 = vshll.u32 920167782, %v469
        %v485 = vshrl.u32 1326507024, %v470
        %v486 = vor.u32 %v484, %v485
        %vm487 = vcmp.lt.s32.totalorder %v468, 1
        %vm488 = vcmp.lt.s32.totalorder %v468, 2
        %vm489 = vcmp.lt.s32.totalorder %v468, 3
        %vm490 = vcmp.lt.s32.totalorder %v468, 4
        %v491 = vsel %vm487, %v471, %v474
        %v492 = vsel %vm490, %v480, 2102212464
        %v493 = vsel %vm489, %v477, %v492
        %v494 = vsel %vm488, %v491, %v493
        %v495 = vsel %vm487, %v474, %v477
        %v496 = vsel %vm490, %v483, 920167782
        %v497 = vsel %vm489, %v480, %v496
        %v498 = vsel %vm488, %v495, %v497
        %v499 = vsel %vm487, %v477, %v480
        %v500 = vsel %vm490, %v486, 1326507024
        %v501 = vsel %vm489, %v483, %v500
        %v502 = vsel %vm488, %v499, %v501
        %v503 = vshll.u32 %v463, 8
        %v504 = vmul.u32.u64.compose %v503, %v502
        %v505 = vextract.low.u32 %v504
        %v506 = vextract.high.u32 %v504
        %v507 = vmul.u32.u64.compose %v503, %v498
        %v508 = vextract.low.u32 %v507
        %v509 = vextract.high.u32 %v507
        %v510 = vmul.u32 %v503, %v494
        %v511 = vadd.s32 %v506, %v508
        %vm512 = vc.u32 %v506, %v508
        %v513 = vadd.s32 %v509, 1
        %v514 = vsel %vm512, %v513, %v509
        %v515 = vadd.s32 %v510, %v514
        %v516 = vadd.s32 %v515, 536870912
        %v517 = vshrl.u32 %v516, 30
        %v518 = vshll.u32 %v517, 30
        %v519 = vsub.s32 %v515, %v518
        %vm520 = vcmp.lt.s32.totalorder %v519, 0
        %v521 = vsub.s32 0, %v519
        %v522 = vsel %vm520, %v521, %v519
        %v523 = vclz %v522
        %v524 = vsub.s32 %v523, 2
        %vm525 = vcmp.gt.s32.totalorder 0, %v524
        %v526 = vsel %vm525, 0, %v524
        %v527 = vsub.s32 32, %v526
        %v528 = vshll.u32 %v519, %v526
        %v529 = vshrl.u32 %v511, %v527
        %v530 = vor.u32 %v528, %v529
        %v531 = vsub.s32 4294967266, %v526
        %v532 = vadd.s32 %v531, 127
        %v533 = vshll.u32 %v532, 23
        %v534 = vor.u32 4788187, %v533
        %v535 = vand.u32 2147483647, %v534
        %v537 = vcvt.s32.f32 %v530
        %v538 = vmul.f32 %v537, %v535
        %v539 = vxor.u32 %v538, 2147483648
        %v540 = vsel %vm457, %v539, %v538
        %v541 = vsub.s32 4, %v517
        %v542 = vsel %vm457, %v541, %v517
        %v543 = vsel %vm456, %v302, %v540
        %v544 = vsel %vm456, 0, %v542
        %v545 = vcosq.f32.pop %v543
        %v546 = vsinq.f32.pop %v543
        %vm547 = vweird.f32 %v302
        %v548 = vand.u32 %v544, 3
        %vm549 = vcmp.lt.s32.totalorder %v548, 2
        %vm550 = vcmp.eq.s32.totalorder %v548, 0
        %v551 = vxor.u32 %v546, 2147483648
        %v552 = vsel %vm550, %v545, %v551
        %vm553 = vcmp.eq.s32.totalorder %v548, 2
        %v554 = vxor.u32 %v545, 2147483648
        %v555 = vsel %vm553, %v554, %v546
        %v556 = vsel %vm549, %v552, %v555
        %v557 = vsel %vm547, nan, %v556
        %v558 = vand.u32 2147483647, %v307
        %vm559 = vcmp.le.f32.partialorder %v558, 0.7853982
        %vm560 = vcmp.lt.s32.totalorder %v307, 0
        %v561 = vand.u32 %v307, 2139095040
        %v562 = vshrl.u32 %v561, 23
        %v563 = vsub.s32 %v562, 127
        %v564 = vand.u32 2147483647, %v307
        %v565 = vand.u32 %v564, 8388607
        %v566 = vor.u32 %v565, 8388608
        %v567 = vsub.s32 0, %v566
        %v568 = vadd.s32 %v563, 1
        %vm569 = vcmp.gt.s32.totalorder %v568, 0
        %v570 = vsel %vm569, %v568, 0
        %v571 = vshrl.u32 %v570, 5
        %v572 = vand.u32 %v570, 31
        %v573 = vsub.s32 32, %v572
        %v574 = vshrl.u32 683565275, %v573
        %v575 = vshll.u32 683565275, %v572
        %v576 = vshrl.u32 2475754826, %v573
        %v577 = vor.u32 %v575, %v576
        %v578 = vshll.u32 2475754826, %v572
        %v579 = vshrl.u32 2131351028, %v573
        %v580 = vor.u32 %v578, %v579
        %v581 = vshll.u32 2131351028, %v572
        %v582 = vshrl.u32 2102212464, %v573
        %v583 = vor.u32 %v581, %v582
        %v584 = vshll.u32 2102212464, %v572
        %v585 = vshrl.u32 920167782, %v573
        %v586 = vor.u32 %v584, %v585
        %v587 = vshll.u32 920167782, %v572
        %v588 = vshrl.u32 1326507024, %v573
        %v589 = vor.u32 %v587, %v588
        %vm590 = vcmp.lt.s32.totalorder %v571, 1
        %vm591 = vcmp.lt.s32.totalorder %v571, 2
        %vm592 = vcmp.lt.s32.totalorder %v571, 3
        %vm593 = vcmp.lt.s32.totalorder %v571, 4
        %v594 = vsel %vm590, %v574, %v577
        %v595 = vsel %vm593, %v583, 2102212464
        %v596 = vsel %vm592, %v580, %v595
        %v597 = vsel %vm591, %v594, %v596
        %v598 = vsel %vm590, %v577, %v580
        %v599 = vsel %vm593, %v586, 920167782
        %v600 = vsel %vm592, %v583, %v599
        %v601 = vsel %vm591, %v598, %v600
        %v602 = vsel %vm590, %v580, %v583
        %v603 = vsel %vm593, %v589, 1326507024
        %v604 = vsel %vm592, %v586, %v603
        %v605 = vsel %vm591, %v602, %v604
        %v606 = vshll.u32 %v566, 8
        %v607 = vmul.u32.u64.compose %v606, %v605
        %v608 = vextract.low.u32 %v607
        %v609 = vextract.high.u32 %v607
        %v610 = vmul.u32.u64.compose %v606, %v601
        %v611 = vextract.low.u32 %v610
        %v612 = vextract.high.u32 %v610
        %v613 = vmul.u32 %v606, %v597
        %v614 = vadd.s32 %v609, %v611
        %vm615 = vc.u32 %v609, %v611
        %v616 = vadd.s32 %v612, 1
        %v617 = vsel %vm615, %v616, %v612
        %v618 = vadd.s32 %v613, %v617
        %v619 = vadd.s32 %v618, 536870912
        %v620 = vshrl.u32 %v619, 30
        %v621 = vshll.u32 %v620, 30
        %v622 = vsub.s32 %v618, %v621
        %vm623 = vcmp.lt.s32.totalorder %v622, 0
        %v624 = vsub.s32 0, %v622
        %v625 = vsel %vm623, %v624, %v622
        %v626 = vclz %v625
        %v627 = vsub.s32 %v626, 2
        %vm628 = vcmp.gt.s32.totalorder 0, %v627
        %v629 = vsel %vm628, 0, %v627
        %v630 = vsub.s32 32, %v629
        %v631 = vshll.u32 %v622, %v629
        %v632 = vshrl.u32 %v614, %v630
        %v633 = vor.u32 %v631, %v632
        %v634 = vsub.s32 4294967266, %v629
        %v635 = vadd.s32 %v634, 127
        %v636 = vshll.u32 %v635, 23
        %v637 = vor.u32 4788187, %v636
        %v638 = vand.u32 2147483647, %v637
        %v640 = vcvt.s32.f32 %v633
        %v641 = vmul.f32 %v640, %v638
        %v642 = vxor.u32 %v641, 2147483648
        %v643 = vsel %vm560, %v642, %v641
        %v644 = vsub.s32 4, %v620
        %v645 = vsel %vm560, %v644, %v620
        %v646 = vsel %vm559, %v307, %v643
        %v647 = vsel %vm559, 0, %v645
        %v648 = vcosq.f32.pop %v646
        %v649 = vsinq.f32.pop %v646
        %vm650 = vweird.f32 %v307
        %v651 = vand.u32 %v647, 3
        %vm652 = vcmp.lt.s32.totalorder %v651, 2
        %vm653 = vcmp.eq.s32.totalorder %v651, 0
        %v654 = vxor.u32 %v649, 2147483648
        %v655 = vsel %vm653, %v648, %v654
        %vm656 = vcmp.eq.s32.totalorder %v651, 2
        %v657 = vxor.u32 %v648, 2147483648
        %v658 = vsel %vm656, %v657, %v649
        %v659 = vsel %vm652, %v655, %v658
        %v660 = vsel %vm650, nan, %v659
        %v661 = vand.u32 2147483647, %v310
        %vm662 = vcmp.le.f32.partialorder %v661, 0.7853982
        %vm663 = vcmp.lt.s32.totalorder %v310, 0
        %v664 = vand.u32 %v310, 2139095040
        %v665 = vshrl.u32 %v664, 23
        %v666 = vsub.s32 %v665, 127
        %v667 = vand.u32 2147483647, %v310
        %v668 = vand.u32 %v667, 8388607
        %v669 = vor.u32 %v668, 8388608
        %v670 = vsub.s32 0, %v669
        %v671 = vadd.s32 %v666, 1
        %vm672 = vcmp.gt.s32.totalorder %v671, 0
        %v673 = vsel %vm672, %v671, 0
        %v674 = vshrl.u32 %v673, 5
        %v675 = vand.u32 %v673, 31
        %v676 = vsub.s32 32, %v675
        %v677 = vshrl.u32 683565275, %v676
        %v678 = vshll.u32 683565275, %v675
        %v679 = vshrl.u32 2475754826, %v676
        %v680 = vor.u32 %v678, %v679
        %v681 = vshll.u32 2475754826, %v675
        %v682 = vshrl.u32 2131351028, %v676
        %v683 = vor.u32 %v681, %v682
        %v684 = vshll.u32 2131351028, %v675
        %v685 = vshrl.u32 2102212464, %v676
        %v686 = vor.u32 %v684, %v685
        %v687 = vshll.u32 2102212464, %v675
        %v688 = vshrl.u32 920167782, %v676
        %v689 = vor.u32 %v687, %v688
        %v690 = vshll.u32 920167782, %v675
        %v691 = vshrl.u32 1326507024, %v676
        %v692 = vor.u32 %v690, %v691
        %vm693 = vcmp.lt.s32.totalorder %v674, 1
        %vm694 = vcmp.lt.s32.totalorder %v674, 2
        %vm695 = vcmp.lt.s32.totalorder %v674, 3
        %vm696 = vcmp.lt.s32.totalorder %v674, 4
        %v697 = vsel %vm693, %v677, %v680
        %v698 = vsel %vm696, %v686, 2102212464
        %v699 = vsel %vm695, %v683, %v698
        %v700 = vsel %vm694, %v697, %v699
        %v701 = vsel %vm693, %v680, %v683
        %v702 = vsel %vm696, %v689, 920167782
        %v703 = vsel %vm695, %v686, %v702
        %v704 = vsel %vm694, %v701, %v703
        %v705 = vsel %vm693, %v683, %v686
        %v706 = vsel %vm696, %v692, 1326507024
        %v707 = vsel %vm695, %v689, %v706
        %v708 = vsel %vm694, %v705, %v707
        %v709 = vshll.u32 %v669, 8
        %v710 = vmul.u32.u64.compose %v709, %v708
        %v711 = vextract.low.u32 %v710
        %v712 = vextract.high.u32 %v710
        %v713 = vmul.u32.u64.compose %v709, %v704
        %v714 = vextract.low.u32 %v713
        %v715 = vextract.high.u32 %v713
        %v716 = vmul.u32 %v709, %v700
        %v717 = vadd.s32 %v712, %v714
        %vm718 = vc.u32 %v712, %v714
        %v719 = vadd.s32 %v715, 1
        %v720 = vsel %vm718, %v719, %v715
        %v721 = vadd.s32 %v716, %v720
        %v722 = vadd.s32 %v721, 536870912
        %v723 = vshrl.u32 %v722, 30
        %v724 = vshll.u32 %v723, 30
        %v725 = vsub.s32 %v721, %v724
        %vm726 = vcmp.lt.s32.totalorder %v725, 0
        %v727 = vsub.s32 0, %v725
        %v728 = vsel %vm726, %v727, %v725
        %v729 = vclz %v728
        %v730 = vsub.s32 %v729, 2
        %vm731 = vcmp.gt.s32.totalorder 0, %v730
        %v732 = vsel %vm731, 0, %v730
        %v733 = vsub.s32 32, %v732
        %v734 = vshll.u32 %v725, %v732
        %v735 = vshrl.u32 %v717, %v733
        %v736 = vor.u32 %v734, %v735
        %v737 = vsub.s32 4294967266, %v732
        %v738 = vadd.s32 %v737, 127
        %v739 = vshll.u32 %v738, 23
        %v740 = vor.u32 4788187, %v739
        %v741 = vand.u32 2147483647, %v740
        %v743 = vcvt.s32.f32 %v736
        %v744 = vmul.f32 %v743, %v741
        %v745 = vxor.u32 %v744, 2147483648
        %v746 = vsel %vm663, %v745, %v744
        %v747 = vsub.s32 4, %v723
        %v748 = vsel %vm663, %v747, %v723
        %v749 = vsel %vm662, %v310, %v746
        %v750 = vsel %vm662, 0, %v748
        %v751 = vcosq.f32.pop %v749
        %v752 = vsinq.f32.pop %v749
        %vm753 = vweird.f32 %v310
        %v754 = vand.u32 %v750, 3
        %vm755 = vcmp.lt.s32.totalorder %v754, 2
        %vm756 = vcmp.eq.s32.totalorder %v754, 0
        %v757 = vxor.u32 %v752, 2147483648
        %v758 = vsel %vm756, %v751, %v757
        %vm759 = vcmp.eq.s32.totalorder %v754, 2
        %v760 = vxor.u32 %v751, 2147483648
        %v761 = vsel %vm759, %v760, %v752
        %v762 = vsel %vm755, %v758, %v761
        %v763 = vsel %vm753, nan, %v762
        %v764 = vand.u32 2147483647, %v315
        %vm765 = vcmp.le.f32.partialorder %v764, 0.7853982
        %vm766 = vcmp.lt.s32.totalorder %v315, 0
        %v767 = vand.u32 %v315, 2139095040
        %v768 = vshrl.u32 %v767, 23
        %v769 = vsub.s32 %v768, 127
        %v770 = vand.u32 2147483647, %v315
        %v771 = vand.u32 %v770, 8388607
        %v772 = vor.u32 %v771, 8388608
        %v773 = vsub.s32 0, %v772
        %v774 = vadd.s32 %v769, 1
        %vm775 = vcmp.gt.s32.totalorder %v774, 0
        %v776 = vsel %vm775, %v774, 0
        %v777 = vshrl.u32 %v776, 5
        %v778 = vand.u32 %v776, 31
        %v779 = vsub.s32 32, %v778
        %v780 = vshrl.u32 683565275, %v779
        %v781 = vshll.u32 683565275, %v778
        %v782 = vshrl.u32 2475754826, %v779
        %v783 = vor.u32 %v781, %v782
        %v784 = vshll.u32 2475754826, %v778
        %v785 = vshrl.u32 2131351028, %v779
        %v786 = vor.u32 %v784, %v785
        %v787 = vshll.u32 2131351028, %v778
        %v788 = vshrl.u32 2102212464, %v779
        %v789 = vor.u32 %v787, %v788
        %v790 = vshll.u32 2102212464, %v778
        %v791 = vshrl.u32 920167782, %v779
        %v792 = vor.u32 %v790, %v791
        %v793 = vshll.u32 920167782, %v778
        %v794 = vshrl.u32 1326507024, %v779
        %v795 = vor.u32 %v793, %v794
        %vm796 = vcmp.lt.s32.totalorder %v777, 1
        %vm797 = vcmp.lt.s32.totalorder %v777, 2
        %vm798 = vcmp.lt.s32.totalorder %v777, 3
        %vm799 = vcmp.lt.s32.totalorder %v777, 4
        %v800 = vsel %vm796, %v780, %v783
        %v801 = vsel %vm799, %v789, 2102212464
        %v802 = vsel %vm798, %v786, %v801
        %v803 = vsel %vm797, %v800, %v802
        %v804 = vsel %vm796, %v783, %v786
        %v805 = vsel %vm799, %v792, 920167782
        %v806 = vsel %vm798, %v789, %v805
        %v807 = vsel %vm797, %v804, %v806
        %v808 = vsel %vm796, %v786, %v789
        %v809 = vsel %vm799, %v795, 1326507024
        %v810 = vsel %vm798, %v792, %v809
        %v811 = vsel %vm797, %v808, %v810
        %v812 = vshll.u32 %v772, 8
        %v813 = vmul.u32.u64.compose %v812, %v811
        %v814 = vextract.low.u32 %v813
        %v815 = vextract.high.u32 %v813
        %v816 = vmul.u32.u64.compose %v812, %v807
        %v817 = vextract.low.u32 %v816
        %v818 = vextract.high.u32 %v816
        %v819 = vmul.u32 %v812, %v803
        %v820 = vadd.s32 %v815, %v817
        %vm821 = vc.u32 %v815, %v817
        %v822 = vadd.s32 %v818, 1
        %v823 = vsel %vm821, %v822, %v818
        %v824 = vadd.s32 %v819, %v823
        %v825 = vadd.s32 %v824, 536870912
        %v826 = vshrl.u32 %v825, 30
        %v827 = vshll.u32 %v826, 30
        %v828 = vsub.s32 %v824, %v827
        %vm829 = vcmp.lt.s32.totalorder %v828, 0
        %v830 = vsub.s32 0, %v828
        %v831 = vsel %vm829, %v830, %v828
        %v832 = vclz %v831
        %v833 = vsub.s32 %v832, 2
        %vm834 = vcmp.gt.s32.totalorder 0, %v833
        %v835 = vsel %vm834, 0, %v833
        %v836 = vsub.s32 32, %v835
        %v837 = vshll.u32 %v828, %v835
        %v838 = vshrl.u32 %v820, %v836
        %v839 = vor.u32 %v837, %v838
        %v840 = vsub.s32 4294967266, %v835
        %v841 = vadd.s32 %v840, 127
        %v842 = vshll.u32 %v841, 23
        %v843 = vor.u32 4788187, %v842
        %v844 = vand.u32 2147483647, %v843
        %v846 = vcvt.s32.f32 %v839
        %v847 = vmul.f32 %v846, %v844
        %v848 = vxor.u32 %v847, 2147483648
        %v849 = vsel %vm766, %v848, %v847
        %v850 = vsub.s32 4, %v826
        %v851 = vsel %vm766, %v850, %v826
        %v852 = vsel %vm765, %v315, %v849
        %v853 = vsel %vm765, 0, %v851
        %v854 = vcosq.f32.pop %v852
        %v855 = vsinq.f32.pop %v852
        %vm856 = vweird.f32 %v315
        %v857 = vand.u32 %v853, 3
        %vm858 = vcmp.lt.s32.totalorder %v857, 2
        %vm859 = vcmp.eq.s32.totalorder %v857, 0
        %v860 = vxor.u32 %v855, 2147483648
        %v861 = vsel %vm859, %v854, %v860
        %vm862 = vcmp.eq.s32.totalorder %v857, 2
        %v863 = vxor.u32 %v854, 2147483648
        %v864 = vsel %vm862, %v863, %v855
        %v865 = vsel %vm858, %v861, %v864
        %v866 = vsel %vm856, nan, %v865
        %v867 = vand.u32 2147483647, %v318
        %vm868 = vcmp.le.f32.partialorder %v867, 0.7853982
        %vm869 = vcmp.lt.s32.totalorder %v318, 0
        %v870 = vand.u32 %v318, 2139095040
        %v871 = vshrl.u32 %v870, 23
        %v872 = vsub.s32 %v871, 127
        %v873 = vand.u32 2147483647, %v318
        %v874 = vand.u32 %v873, 8388607
        %v875 = vor.u32 %v874, 8388608
        %v876 = vsub.s32 0, %v875
        %v877 = vadd.s32 %v872, 1
        %vm878 = vcmp.gt.s32.totalorder %v877, 0
        %v879 = vsel %vm878, %v877, 0
        %v880 = vshrl.u32 %v879, 5
        %v881 = vand.u32 %v879, 31
        %v882 = vsub.s32 32, %v881
        %v883 = vshrl.u32 683565275, %v882
        %v884 = vshll.u32 683565275, %v881
        %v885 = vshrl.u32 2475754826, %v882
        %v886 = vor.u32 %v884, %v885
        %v887 = vshll.u32 2475754826, %v881
        %v888 = vshrl.u32 2131351028, %v882
        %v889 = vor.u32 %v887, %v888
        %v890 = vshll.u32 2131351028, %v881
        %v891 = vshrl.u32 2102212464, %v882
        %v892 = vor.u32 %v890, %v891
        %v893 = vshll.u32 2102212464, %v881
        %v894 = vshrl.u32 920167782, %v882
        %v895 = vor.u32 %v893, %v894
        %v896 = vshll.u32 920167782, %v881
        %v897 = vshrl.u32 1326507024, %v882
        %v898 = vor.u32 %v896, %v897
        %vm899 = vcmp.lt.s32.totalorder %v880, 1
        %vm900 = vcmp.lt.s32.totalorder %v880, 2
        %vm901 = vcmp.lt.s32.totalorder %v880, 3
        %vm902 = vcmp.lt.s32.totalorder %v880, 4
        %v903 = vsel %vm899, %v883, %v886
        %v904 = vsel %vm902, %v892, 2102212464
        %v905 = vsel %vm901, %v889, %v904
        %v906 = vsel %vm900, %v903, %v905
        %v907 = vsel %vm899, %v886, %v889
        %v908 = vsel %vm902, %v895, 920167782
        %v909 = vsel %vm901, %v892, %v908
        %v910 = vsel %vm900, %v907, %v909
        %v911 = vsel %vm899, %v889, %v892
        %v912 = vsel %vm902, %v898, 1326507024
        %v913 = vsel %vm901, %v895, %v912
        %v914 = vsel %vm900, %v911, %v913
        %v915 = vshll.u32 %v875, 8
        %v916 = vmul.u32.u64.compose %v915, %v914
        %v917 = vextract.low.u32 %v916
        %v918 = vextract.high.u32 %v916
        %v919 = vmul.u32.u64.compose %v915, %v910
        %v920 = vextract.low.u32 %v919
        %v921 = vextract.high.u32 %v919
        %v922 = vmul.u32 %v915, %v906
        %v923 = vadd.s32 %v918, %v920
        %vm924 = vc.u32 %v918, %v920
        %v925 = vadd.s32 %v921, 1
        %v926 = vsel %vm924, %v925, %v921
        %v927 = vadd.s32 %v922, %v926
        %v928 = vadd.s32 %v927, 536870912
        %v929 = vshrl.u32 %v928, 30
        %v930 = vshll.u32 %v929, 30
        %v931 = vsub.s32 %v927, %v930
        %vm932 = vcmp.lt.s32.totalorder %v931, 0
        %v933 = vsub.s32 0, %v931
        %v934 = vsel %vm932, %v933, %v931
        %v935 = vclz %v934
        %v936 = vsub.s32 %v935, 2
        %vm937 = vcmp.gt.s32.totalorder 0, %v936
        %v938 = vsel %vm937, 0, %v936
        %v939 = vsub.s32 32, %v938
        %v940 = vshll.u32 %v931, %v938
        %v941 = vshrl.u32 %v923, %v939
        %v942 = vor.u32 %v940, %v941
        %v943 = vsub.s32 4294967266, %v938
        %v944 = vadd.s32 %v943, 127
        %v945 = vshll.u32 %v944, 23
        %v946 = vor.u32 4788187, %v945
        %v947 = vand.u32 2147483647, %v946
        %v949 = vcvt.s32.f32 %v942
        %v950 = vmul.f32 %v949, %v947
        %v951 = vxor.u32 %v950, 2147483648
        %v952 = vsel %vm869, %v951, %v950
        %v953 = vsub.s32 4, %v929
        %v954 = vsel %vm869, %v953, %v929
        %v955 = vsel %vm868, %v318, %v952
        %v956 = vsel %vm868, 0, %v954
        %v957 = vcosq.f32.pop %v955
        %v958 = vsinq.f32.pop %v955
        %vm959 = vweird.f32 %v318
        %v960 = vand.u32 %v956, 3
        %vm961 = vcmp.lt.s32.totalorder %v960, 2
        %vm962 = vcmp.eq.s32.totalorder %v960, 0
        %v963 = vxor.u32 %v958, 2147483648
        %v964 = vsel %vm962, %v957, %v963
        %vm965 = vcmp.eq.s32.totalorder %v960, 2
        %v966 = vxor.u32 %v957, 2147483648
        %v967 = vsel %vm965, %v966, %v958
        %v968 = vsel %vm961, %v964, %v967
        %v969 = vsel %vm959, nan, %v968
        %v970 = vand.u32 2147483647, %v323
        %vm971 = vcmp.le.f32.partialorder %v970, 0.7853982
        %vm972 = vcmp.lt.s32.totalorder %v323, 0
        %v973 = vand.u32 %v323, 2139095040
        %v974 = vshrl.u32 %v973, 23
        %v975 = vsub.s32 %v974, 127
        %v976 = vand.u32 2147483647, %v323
        %v977 = vand.u32 %v976, 8388607
        %v978 = vor.u32 %v977, 8388608
        %v979 = vsub.s32 0, %v978
        %v980 = vadd.s32 %v975, 1
        %vm981 = vcmp.gt.s32.totalorder %v980, 0
        %v982 = vsel %vm981, %v980, 0
        %v983 = vshrl.u32 %v982, 5
        %v984 = vand.u32 %v982, 31
        %v985 = vsub.s32 32, %v984
        %v986 = vshrl.u32 683565275, %v985
        %v987 = vshll.u32 683565275, %v984
        %v988 = vshrl.u32 2475754826, %v985
        %v989 = vor.u32 %v987, %v988
        %v990 = vshll.u32 2475754826, %v984
        %v991 = vshrl.u32 2131351028, %v985
        %v992 = vor.u32 %v990, %v991
        %v993 = vshll.u32 2131351028, %v984
        %v994 = vshrl.u32 2102212464, %v985
        %v995 = vor.u32 %v993, %v994
        %v996 = vshll.u32 2102212464, %v984
        %v997 = vshrl.u32 920167782, %v985
        %v998 = vor.u32 %v996, %v997
        %v999 = vshll.u32 920167782, %v984
        %v1000 = vshrl.u32 1326507024, %v985
        %v1001 = vor.u32 %v999, %v1000
        %vm1002 = vcmp.lt.s32.totalorder %v983, 1
        %vm1003 = vcmp.lt.s32.totalorder %v983, 2
        %vm1004 = vcmp.lt.s32.totalorder %v983, 3
        %vm1005 = vcmp.lt.s32.totalorder %v983, 4
        %v1006 = vsel %vm1002, %v986, %v989
        %v1007 = vsel %vm1005, %v995, 2102212464
        %v1008 = vsel %vm1004, %v992, %v1007
        %v1009 = vsel %vm1003, %v1006, %v1008
        %v1010 = vsel %vm1002, %v989, %v992
        %v1011 = vsel %vm1005, %v998, 920167782
        %v1012 = vsel %vm1004, %v995, %v1011
        %v1013 = vsel %vm1003, %v1010, %v1012
        %v1014 = vsel %vm1002, %v992, %v995
        %v1015 = vsel %vm1005, %v1001, 1326507024
        %v1016 = vsel %vm1004, %v998, %v1015
        %v1017 = vsel %vm1003, %v1014, %v1016
        %v1018 = vshll.u32 %v978, 8
        %v1019 = vmul.u32.u64.compose %v1018, %v1017
        %v1020 = vextract.low.u32 %v1019
        %v1021 = vextract.high.u32 %v1019
        %v1022 = vmul.u32.u64.compose %v1018, %v1013
        %v1023 = vextract.low.u32 %v1022
        %v1024 = vextract.high.u32 %v1022
        %v1025 = vmul.u32 %v1018, %v1009
        %v1026 = vadd.s32 %v1021, %v1023
        %vm1027 = vc.u32 %v1021, %v1023
        %v1028 = vadd.s32 %v1024, 1
        %v1029 = vsel %vm1027, %v1028, %v1024
        %v1030 = vadd.s32 %v1025, %v1029
        %v1031 = vadd.s32 %v1030, 536870912
        %v1032 = vshrl.u32 %v1031, 30
        %v1033 = vshll.u32 %v1032, 30
        %v1034 = vsub.s32 %v1030, %v1033
        %vm1035 = vcmp.lt.s32.totalorder %v1034, 0
        %v1036 = vsub.s32 0, %v1034
        %v1037 = vsel %vm1035, %v1036, %v1034
        %v1038 = vclz %v1037
        %v1039 = vsub.s32 %v1038, 2
        %vm1040 = vcmp.gt.s32.totalorder 0, %v1039
        %v1041 = vsel %vm1040, 0, %v1039
        %v1042 = vsub.s32 32, %v1041
        %v1043 = vshll.u32 %v1034, %v1041
        %v1044 = vshrl.u32 %v1026, %v1042
        %v1045 = vor.u32 %v1043, %v1044
        %v1046 = vsub.s32 4294967266, %v1041
        %v1047 = vadd.s32 %v1046, 127
        %v1048 = vshll.u32 %v1047, 23
        %v1049 = vor.u32 4788187, %v1048
        %v1050 = vand.u32 2147483647, %v1049
        %v1052 = vcvt.s32.f32 %v1045
        %v1053 = vmul.f32 %v1052, %v1050
        %v1054 = vxor.u32 %v1053, 2147483648
        %v1055 = vsel %vm972, %v1054, %v1053
        %v1056 = vsub.s32 4, %v1032
        %v1057 = vsel %vm972, %v1056, %v1032
        %v1058 = vsel %vm971, %v323, %v1055
        %v1059 = vsel %vm971, 0, %v1057
        %v1060 = vcosq.f32.pop %v1058
        %v1061 = vsinq.f32.pop %v1058
        %vm1062 = vweird.f32 %v323
        %v1063 = vand.u32 %v1059, 3
        %vm1064 = vcmp.lt.s32.totalorder %v1063, 2
        %vm1065 = vcmp.eq.s32.totalorder %v1063, 0
        %v1066 = vxor.u32 %v1061, 2147483648
        %v1067 = vsel %vm1065, %v1060, %v1066
        %vm1068 = vcmp.eq.s32.totalorder %v1063, 2
        %v1069 = vxor.u32 %v1060, 2147483648
        %v1070 = vsel %vm1068, %v1069, %v1061
        %v1071 = vsel %vm1064, %v1067, %v1070
        %v1072 = vsel %vm1062, nan, %v1071
        %v1073 = vand.u32 2147483647, %v326
        %vm1074 = vcmp.le.f32.partialorder %v1073, 0.7853982
        %vm1075 = vcmp.lt.s32.totalorder %v326, 0
        %v1076 = vand.u32 %v326, 2139095040
        %v1077 = vshrl.u32 %v1076, 23
        %v1078 = vsub.s32 %v1077, 127
        %v1079 = vand.u32 2147483647, %v326
        %v1080 = vand.u32 %v1079, 8388607
        %v1081 = vor.u32 %v1080, 8388608
        %v1082 = vsub.s32 0, %v1081
        %v1083 = vadd.s32 %v1078, 1
        %vm1084 = vcmp.gt.s32.totalorder %v1083, 0
        %v1085 = vsel %vm1084, %v1083, 0
        %v1086 = vshrl.u32 %v1085, 5
        %v1087 = vand.u32 %v1085, 31
        %v1088 = vsub.s32 32, %v1087
        %v1089 = vshrl.u32 683565275, %v1088
        %v1090 = vshll.u32 683565275, %v1087
        %v1091 = vshrl.u32 2475754826, %v1088
        %v1092 = vor.u32 %v1090, %v1091
        %v1093 = vshll.u32 2475754826, %v1087
        %v1094 = vshrl.u32 2131351028, %v1088
        %v1095 = vor.u32 %v1093, %v1094
        %v1096 = vshll.u32 2131351028, %v1087
        %v1097 = vshrl.u32 2102212464, %v1088
        %v1098 = vor.u32 %v1096, %v1097
        %v1099 = vshll.u32 2102212464, %v1087
        %v1100 = vshrl.u32 920167782, %v1088
        %v1101 = vor.u32 %v1099, %v1100
        %v1102 = vshll.u32 920167782, %v1087
        %v1103 = vshrl.u32 1326507024, %v1088
        %v1104 = vor.u32 %v1102, %v1103
        %vm1105 = vcmp.lt.s32.totalorder %v1086, 1
        %vm1106 = vcmp.lt.s32.totalorder %v1086, 2
        %vm1107 = vcmp.lt.s32.totalorder %v1086, 3
        %vm1108 = vcmp.lt.s32.totalorder %v1086, 4
        %v1109 = vsel %vm1105, %v1089, %v1092
        %v1110 = vsel %vm1108, %v1098, 2102212464
        %v1111 = vsel %vm1107, %v1095, %v1110
        %v1112 = vsel %vm1106, %v1109, %v1111
        %v1113 = vsel %vm1105, %v1092, %v1095
        %v1114 = vsel %vm1108, %v1101, 920167782
        %v1115 = vsel %vm1107, %v1098, %v1114
        %v1116 = vsel %vm1106, %v1113, %v1115
        %v1117 = vsel %vm1105, %v1095, %v1098
        %v1118 = vsel %vm1108, %v1104, 1326507024
        %v1119 = vsel %vm1107, %v1101, %v1118
        %v1120 = vsel %vm1106, %v1117, %v1119
        %v1121 = vshll.u32 %v1081, 8
        %v1122 = vmul.u32.u64.compose %v1121, %v1120
        %v1123 = vextract.low.u32 %v1122
        %v1124 = vextract.high.u32 %v1122
        %v1125 = vmul.u32.u64.compose %v1121, %v1116
        %v1126 = vextract.low.u32 %v1125
        %v1127 = vextract.high.u32 %v1125
        %v1128 = vmul.u32 %v1121, %v1112
        %v1129 = vadd.s32 %v1124, %v1126
        %vm1130 = vc.u32 %v1124, %v1126
        %v1131 = vadd.s32 %v1127, 1
        %v1132 = vsel %vm1130, %v1131, %v1127
        %v1133 = vadd.s32 %v1128, %v1132
        %v1134 = vadd.s32 %v1133, 536870912
        %v1135 = vshrl.u32 %v1134, 30
        %v1136 = vshll.u32 %v1135, 30
        %v1137 = vsub.s32 %v1133, %v1136
        %vm1138 = vcmp.lt.s32.totalorder %v1137, 0
        %v1139 = vsub.s32 0, %v1137
        %v1140 = vsel %vm1138, %v1139, %v1137
        %v1141 = vclz %v1140
        %v1142 = vsub.s32 %v1141, 2
        %vm1143 = vcmp.gt.s32.totalorder 0, %v1142
        %v1144 = vsel %vm1143, 0, %v1142
        %v1145 = vsub.s32 32, %v1144
        %v1146 = vshll.u32 %v1137, %v1144
        %v1147 = vshrl.u32 %v1129, %v1145
        %v1148 = vor.u32 %v1146, %v1147
        %v1149 = vsub.s32 4294967266, %v1144
        %v1150 = vadd.s32 %v1149, 127
        %v1151 = vshll.u32 %v1150, 23
        %v1152 = vor.u32 4788187, %v1151
        %v1153 = vand.u32 2147483647, %v1152
        %v1155 = vcvt.s32.f32 %v1148
        %v1156 = vmul.f32 %v1155, %v1153
        %v1157 = vxor.u32 %v1156, 2147483648
        %v1158 = vsel %vm1075, %v1157, %v1156
        %v1159 = vsub.s32 4, %v1135
        %v1160 = vsel %vm1075, %v1159, %v1135
        %v1161 = vsel %vm1074, %v326, %v1158
        %v1162 = vsel %vm1074, 0, %v1160
        %v1163 = vcosq.f32.pop %v1161
        %v1164 = vsinq.f32.pop %v1161
        %vm1165 = vweird.f32 %v326
        %v1166 = vand.u32 %v1162, 3
        %vm1167 = vcmp.lt.s32.totalorder %v1166, 2
        %vm1168 = vcmp.eq.s32.totalorder %v1166, 0
        %v1169 = vxor.u32 %v1164, 2147483648
        %v1170 = vsel %vm1168, %v1163, %v1169
        %vm1171 = vcmp.eq.s32.totalorder %v1166, 2
        %v1172 = vxor.u32 %v1163, 2147483648
        %v1173 = vsel %vm1171, %v1172, %v1164
        %v1174 = vsel %vm1167, %v1170, %v1173
        %v1175 = vsel %vm1165, nan, %v1174
        %v1176 = vand.u32 2147483647, %v331
        %vm1177 = vcmp.le.f32.partialorder %v1176, 0.7853982
        %vm1178 = vcmp.lt.s32.totalorder %v331, 0
        %v1179 = vand.u32 %v331, 2139095040
        %v1180 = vshrl.u32 %v1179, 23
        %v1181 = vsub.s32 %v1180, 127
        %v1182 = vand.u32 2147483647, %v331
        %v1183 = vand.u32 %v1182, 8388607
        %v1184 = vor.u32 %v1183, 8388608
        %v1185 = vsub.s32 0, %v1184
        %v1186 = vadd.s32 %v1181, 1
        %vm1187 = vcmp.gt.s32.totalorder %v1186, 0
        %v1188 = vsel %vm1187, %v1186, 0
        %v1189 = vshrl.u32 %v1188, 5
        %v1190 = vand.u32 %v1188, 31
        %v1191 = vsub.s32 32, %v1190
        %v1192 = vshrl.u32 683565275, %v1191
        %v1193 = vshll.u32 683565275, %v1190
        %v1194 = vshrl.u32 2475754826, %v1191
        %v1195 = vor.u32 %v1193, %v1194
        %v1196 = vshll.u32 2475754826, %v1190
        %v1197 = vshrl.u32 2131351028, %v1191
        %v1198 = vor.u32 %v1196, %v1197
        %v1199 = vshll.u32 2131351028, %v1190
        %v1200 = vshrl.u32 2102212464, %v1191
        %v1201 = vor.u32 %v1199, %v1200
        %v1202 = vshll.u32 2102212464, %v1190
        %v1203 = vshrl.u32 920167782, %v1191
        %v1204 = vor.u32 %v1202, %v1203
        %v1205 = vshll.u32 920167782, %v1190
        %v1206 = vshrl.u32 1326507024, %v1191
        %v1207 = vor.u32 %v1205, %v1206
        %vm1208 = vcmp.lt.s32.totalorder %v1189, 1
        %vm1209 = vcmp.lt.s32.totalorder %v1189, 2
        %vm1210 = vcmp.lt.s32.totalorder %v1189, 3
        %vm1211 = vcmp.lt.s32.totalorder %v1189, 4
        %v1212 = vsel %vm1208, %v1192, %v1195
        %v1213 = vsel %vm1211, %v1201, 2102212464
        %v1214 = vsel %vm1210, %v1198, %v1213
        %v1215 = vsel %vm1209, %v1212, %v1214
        %v1216 = vsel %vm1208, %v1195, %v1198
        %v1217 = vsel %vm1211, %v1204, 920167782
        %v1218 = vsel %vm1210, %v1201, %v1217
        %v1219 = vsel %vm1209, %v1216, %v1218
        %v1220 = vsel %vm1208, %v1198, %v1201
        %v1221 = vsel %vm1211, %v1207, 1326507024
        %v1222 = vsel %vm1210, %v1204, %v1221
        %v1223 = vsel %vm1209, %v1220, %v1222
        %v1224 = vshll.u32 %v1184, 8
        %v1225 = vmul.u32.u64.compose %v1224, %v1223
        %v1226 = vextract.low.u32 %v1225
        %v1227 = vextract.high.u32 %v1225
        %v1228 = vmul.u32.u64.compose %v1224, %v1219
        %v1229 = vextract.low.u32 %v1228
        %v1230 = vextract.high.u32 %v1228
        %v1231 = vmul.u32 %v1224, %v1215
        %v1232 = vadd.s32 %v1227, %v1229
        %vm1233 = vc.u32 %v1227, %v1229
        %v1234 = vadd.s32 %v1230, 1
        %v1235 = vsel %vm1233, %v1234, %v1230
        %v1236 = vadd.s32 %v1231, %v1235
        %v1237 = vadd.s32 %v1236, 536870912
        %v1238 = vshrl.u32 %v1237, 30
        %v1239 = vshll.u32 %v1238, 30
        %v1240 = vsub.s32 %v1236, %v1239
        %vm1241 = vcmp.lt.s32.totalorder %v1240, 0
        %v1242 = vsub.s32 0, %v1240
        %v1243 = vsel %vm1241, %v1242, %v1240
        %v1244 = vclz %v1243
        %v1245 = vsub.s32 %v1244, 2
        %vm1246 = vcmp.gt.s32.totalorder 0, %v1245
        %v1247 = vsel %vm1246, 0, %v1245
        %v1248 = vsub.s32 32, %v1247
        %v1249 = vshll.u32 %v1240, %v1247
        %v1250 = vshrl.u32 %v1232, %v1248
        %v1251 = vor.u32 %v1249, %v1250
        %v1252 = vsub.s32 4294967266, %v1247
        %v1253 = vadd.s32 %v1252, 127
        %v1254 = vshll.u32 %v1253, 23
        %v1255 = vor.u32 4788187, %v1254
        %v1256 = vand.u32 2147483647, %v1255
        %v1258 = vcvt.s32.f32 %v1251
        %v1259 = vmul.f32 %v1258, %v1256
        %v1260 = vxor.u32 %v1259, 2147483648
        %v1261 = vsel %vm1178, %v1260, %v1259
        %v1262 = vsub.s32 4, %v1238
        %v1263 = vsel %vm1178, %v1262, %v1238
        %v1264 = vsel %vm1177, %v331, %v1261
        %v1265 = vsel %vm1177, 0, %v1263
        %v1266 = vcosq.f32.pop %v1264
        %v1267 = vsinq.f32.pop %v1264
        %vm1268 = vweird.f32 %v331
        %v1269 = vand.u32 %v1265, 3
        %vm1270 = vcmp.lt.s32.totalorder %v1269, 2
        %vm1271 = vcmp.eq.s32.totalorder %v1269, 0
        %v1272 = vxor.u32 %v1267, 2147483648
        %v1273 = vsel %vm1271, %v1266, %v1272
        %vm1274 = vcmp.eq.s32.totalorder %v1269, 2
        %v1275 = vxor.u32 %v1266, 2147483648
        %v1276 = vsel %vm1274, %v1275, %v1267
        %v1277 = vsel %vm1270, %v1273, %v1276
        %v1278 = vsel %vm1268, nan, %v1277
        %v1279 = vand.u32 2147483647, %v334
        %vm1280 = vcmp.le.f32.partialorder %v1279, 0.7853982
        %vm1281 = vcmp.lt.s32.totalorder %v334, 0
        %v1282 = vand.u32 %v334, 2139095040
        %v1283 = vshrl.u32 %v1282, 23
        %v1284 = vsub.s32 %v1283, 127
        %v1285 = vand.u32 2147483647, %v334
        %v1286 = vand.u32 %v1285, 8388607
        %v1287 = vor.u32 %v1286, 8388608
        %v1288 = vsub.s32 0, %v1287
        %v1289 = vadd.s32 %v1284, 1
        %vm1290 = vcmp.gt.s32.totalorder %v1289, 0
        %v1291 = vsel %vm1290, %v1289, 0
        %v1292 = vshrl.u32 %v1291, 5
        %v1293 = vand.u32 %v1291, 31
        %v1294 = vsub.s32 32, %v1293
        %v1295 = vshrl.u32 683565275, %v1294
        %v1296 = vshll.u32 683565275, %v1293
        %v1297 = vshrl.u32 2475754826, %v1294
        %v1298 = vor.u32 %v1296, %v1297
        %v1299 = vshll.u32 2475754826, %v1293
        %v1300 = vshrl.u32 2131351028, %v1294
        %v1301 = vor.u32 %v1299, %v1300
        %v1302 = vshll.u32 2131351028, %v1293
        %v1303 = vshrl.u32 2102212464, %v1294
        %v1304 = vor.u32 %v1302, %v1303
        %v1305 = vshll.u32 2102212464, %v1293
        %v1306 = vshrl.u32 920167782, %v1294
        %v1307 = vor.u32 %v1305, %v1306
        %v1308 = vshll.u32 920167782, %v1293
        %v1309 = vshrl.u32 1326507024, %v1294
        %v1310 = vor.u32 %v1308, %v1309
        %vm1311 = vcmp.lt.s32.totalorder %v1292, 1
        %vm1312 = vcmp.lt.s32.totalorder %v1292, 2
        %vm1313 = vcmp.lt.s32.totalorder %v1292, 3
        %vm1314 = vcmp.lt.s32.totalorder %v1292, 4
        %v1315 = vsel %vm1311, %v1295, %v1298
        %v1316 = vsel %vm1314, %v1304, 2102212464
        %v1317 = vsel %vm1313, %v1301, %v1316
        %v1318 = vsel %vm1312, %v1315, %v1317
        %v1319 = vsel %vm1311, %v1298, %v1301
        %v1320 = vsel %vm1314, %v1307, 920167782
        %v1321 = vsel %vm1313, %v1304, %v1320
        %v1322 = vsel %vm1312, %v1319, %v1321
        %v1323 = vsel %vm1311, %v1301, %v1304
        %v1324 = vsel %vm1314, %v1310, 1326507024
        %v1325 = vsel %vm1313, %v1307, %v1324
        %v1326 = vsel %vm1312, %v1323, %v1325
        %v1327 = vshll.u32 %v1287, 8
        %v1328 = vmul.u32.u64.compose %v1327, %v1326
        %v1329 = vextract.low.u32 %v1328
        %v1330 = vextract.high.u32 %v1328
        %v1331 = vmul.u32.u64.compose %v1327, %v1322
        %v1332 = vextract.low.u32 %v1331
        %v1333 = vextract.high.u32 %v1331
        %v1334 = vmul.u32 %v1327, %v1318
        %v1335 = vadd.s32 %v1330, %v1332
        %vm1336 = vc.u32 %v1330, %v1332
        %v1337 = vadd.s32 %v1333, 1
        %v1338 = vsel %vm1336, %v1337, %v1333
        %v1339 = vadd.s32 %v1334, %v1338
        %v1340 = vadd.s32 %v1339, 536870912
        %v1341 = vshrl.u32 %v1340, 30
        %v1342 = vshll.u32 %v1341, 30
        %v1343 = vsub.s32 %v1339, %v1342
        %vm1344 = vcmp.lt.s32.totalorder %v1343, 0
        %v1345 = vsub.s32 0, %v1343
        %v1346 = vsel %vm1344, %v1345, %v1343
        %v1347 = vclz %v1346
        %v1348 = vsub.s32 %v1347, 2
        %vm1349 = vcmp.gt.s32.totalorder 0, %v1348
        %v1350 = vsel %vm1349, 0, %v1348
        %v1351 = vsub.s32 32, %v1350
        %v1352 = vshll.u32 %v1343, %v1350
        %v1353 = vshrl.u32 %v1335, %v1351
        %v1354 = vor.u32 %v1352, %v1353
        %v1355 = vsub.s32 4294967266, %v1350
        %v1356 = vadd.s32 %v1355, 127
        %v1357 = vshll.u32 %v1356, 23
        %v1358 = vor.u32 4788187, %v1357
        %v1359 = vand.u32 2147483647, %v1358
        %v1361 = vcvt.s32.f32 %v1354
        %v1362 = vmul.f32 %v1361, %v1359
        %v1363 = vxor.u32 %v1362, 2147483648
        %v1364 = vsel %vm1281, %v1363, %v1362
        %v1365 = vsub.s32 4, %v1341
        %v1366 = vsel %vm1281, %v1365, %v1341
        %v1367 = vsel %vm1280, %v334, %v1364
        %v1368 = vsel %vm1280, 0, %v1366
        %v1369 = vcosq.f32.pop %v1367
        %v1370 = vsinq.f32.pop %v1367
        %vm1371 = vweird.f32 %v334
        %v1372 = vand.u32 %v1368, 3
        %vm1373 = vcmp.lt.s32.totalorder %v1372, 2
        %vm1374 = vcmp.eq.s32.totalorder %v1372, 0
        %v1375 = vxor.u32 %v1370, 2147483648
        %v1376 = vsel %vm1374, %v1369, %v1375
        %vm1377 = vcmp.eq.s32.totalorder %v1372, 2
        %v1378 = vxor.u32 %v1369, 2147483648
        %v1379 = vsel %vm1377, %v1378, %v1370
        %v1380 = vsel %vm1373, %v1376, %v1379
        %v1381 = vsel %vm1371, nan, %v1380
        %v1382 = vand.u32 2147483647, %v339
        %vm1383 = vcmp.le.f32.partialorder %v1382, 0.7853982
        %vm1384 = vcmp.lt.s32.totalorder %v339, 0
        %v1385 = vand.u32 %v339, 2139095040
        %v1386 = vshrl.u32 %v1385, 23
        %v1387 = vsub.s32 %v1386, 127
        %v1388 = vand.u32 2147483647, %v339
        %v1389 = vand.u32 %v1388, 8388607
        %v1390 = vor.u32 %v1389, 8388608
        %v1391 = vsub.s32 0, %v1390
        %v1392 = vadd.s32 %v1387, 1
        %vm1393 = vcmp.gt.s32.totalorder %v1392, 0
        %v1394 = vsel %vm1393, %v1392, 0
        %v1395 = vshrl.u32 %v1394, 5
        %v1396 = vand.u32 %v1394, 31
        %v1397 = vsub.s32 32, %v1396
        %v1398 = vshrl.u32 683565275, %v1397
        %v1399 = vshll.u32 683565275, %v1396
        %v1400 = vshrl.u32 2475754826, %v1397
        %v1401 = vor.u32 %v1399, %v1400
        %v1402 = vshll.u32 2475754826, %v1396
        %v1403 = vshrl.u32 2131351028, %v1397
        %v1404 = vor.u32 %v1402, %v1403
        %v1405 = vshll.u32 2131351028, %v1396
        %v1406 = vshrl.u32 2102212464, %v1397
        %v1407 = vor.u32 %v1405, %v1406
        %v1408 = vshll.u32 2102212464, %v1396
        %v1409 = vshrl.u32 920167782, %v1397
        %v1410 = vor.u32 %v1408, %v1409
        %v1411 = vshll.u32 920167782, %v1396
        %v1412 = vshrl.u32 1326507024, %v1397
        %v1413 = vor.u32 %v1411, %v1412
        %vm1414 = vcmp.lt.s32.totalorder %v1395, 1
        %vm1415 = vcmp.lt.s32.totalorder %v1395, 2
        %vm1416 = vcmp.lt.s32.totalorder %v1395, 3
        %vm1417 = vcmp.lt.s32.totalorder %v1395, 4
        %v1418 = vsel %vm1414, %v1398, %v1401
        %v1419 = vsel %vm1417, %v1407, 2102212464
        %v1420 = vsel %vm1416, %v1404, %v1419
        %v1421 = vsel %vm1415, %v1418, %v1420
        %v1422 = vsel %vm1414, %v1401, %v1404
        %v1423 = vsel %vm1417, %v1410, 920167782
        %v1424 = vsel %vm1416, %v1407, %v1423
        %v1425 = vsel %vm1415, %v1422, %v1424
        %v1426 = vsel %vm1414, %v1404, %v1407
        %v1427 = vsel %vm1417, %v1413, 1326507024
        %v1428 = vsel %vm1416, %v1410, %v1427
        %v1429 = vsel %vm1415, %v1426, %v1428
        %v1430 = vshll.u32 %v1390, 8
        %v1431 = vmul.u32.u64.compose %v1430, %v1429
        %v1432 = vextract.low.u32 %v1431
        %v1433 = vextract.high.u32 %v1431
        %v1434 = vmul.u32.u64.compose %v1430, %v1425
        %v1435 = vextract.low.u32 %v1434
        %v1436 = vextract.high.u32 %v1434
        %v1437 = vmul.u32 %v1430, %v1421
        %v1438 = vadd.s32 %v1433, %v1435
        %vm1439 = vc.u32 %v1433, %v1435
        %v1440 = vadd.s32 %v1436, 1
        %v1441 = vsel %vm1439, %v1440, %v1436
        %v1442 = vadd.s32 %v1437, %v1441
        %v1443 = vadd.s32 %v1442, 536870912
        %v1444 = vshrl.u32 %v1443, 30
        %v1445 = vshll.u32 %v1444, 30
        %v1446 = vsub.s32 %v1442, %v1445
        %vm1447 = vcmp.lt.s32.totalorder %v1446, 0
        %v1448 = vsub.s32 0, %v1446
        %v1449 = vsel %vm1447, %v1448, %v1446
        %v1450 = vclz %v1449
        %v1451 = vsub.s32 %v1450, 2
        %vm1452 = vcmp.gt.s32.totalorder 0, %v1451
        %v1453 = vsel %vm1452, 0, %v1451
        %v1454 = vsub.s32 32, %v1453
        %v1455 = vshll.u32 %v1446, %v1453
        %v1456 = vshrl.u32 %v1438, %v1454
        %v1457 = vor.u32 %v1455, %v1456
        %v1458 = vsub.s32 4294967266, %v1453
        %v1459 = vadd.s32 %v1458, 127
        %v1460 = vshll.u32 %v1459, 23
        %v1461 = vor.u32 4788187, %v1460
        %v1462 = vand.u32 2147483647, %v1461
        %v1464 = vcvt.s32.f32 %v1457
        %v1465 = vmul.f32 %v1464, %v1462
        %v1466 = vxor.u32 %v1465, 2147483648
        %v1467 = vsel %vm1384, %v1466, %v1465
        %v1468 = vsub.s32 4, %v1444
        %v1469 = vsel %vm1384, %v1468, %v1444
        %v1470 = vsel %vm1383, %v339, %v1467
        %v1471 = vsel %vm1383, 0, %v1469
        %v1472 = vcosq.f32.pop %v1470
        %v1473 = vsinq.f32.pop %v1470
        %vm1474 = vweird.f32 %v339
        %v1475 = vand.u32 %v1471, 3
        %vm1476 = vcmp.lt.s32.totalorder %v1475, 2
        %vm1477 = vcmp.eq.s32.totalorder %v1475, 0
        %v1478 = vxor.u32 %v1473, 2147483648
        %v1479 = vsel %vm1477, %v1472, %v1478
        %vm1480 = vcmp.eq.s32.totalorder %v1475, 2
        %v1481 = vxor.u32 %v1472, 2147483648
        %v1482 = vsel %vm1480, %v1481, %v1473
        %v1483 = vsel %vm1476, %v1479, %v1482
        %v1484 = vsel %vm1474, nan, %v1483
        %v1485 = vand.u32 2147483647, %v342
        %vm1486 = vcmp.le.f32.partialorder %v1485, 0.7853982
        %vm1487 = vcmp.lt.s32.totalorder %v342, 0
        %v1488 = vand.u32 %v342, 2139095040
        %v1489 = vshrl.u32 %v1488, 23
        %v1490 = vsub.s32 %v1489, 127
        %v1491 = vand.u32 2147483647, %v342
        %v1492 = vand.u32 %v1491, 8388607
        %v1493 = vor.u32 %v1492, 8388608
        %v1494 = vsub.s32 0, %v1493
        %v1495 = vadd.s32 %v1490, 1
        %vm1496 = vcmp.gt.s32.totalorder %v1495, 0
        %v1497 = vsel %vm1496, %v1495, 0
        %v1498 = vshrl.u32 %v1497, 5
        %v1499 = vand.u32 %v1497, 31
        %v1500 = vsub.s32 32, %v1499
        %v1501 = vshrl.u32 683565275, %v1500
        %v1502 = vshll.u32 683565275, %v1499
        %v1503 = vshrl.u32 2475754826, %v1500
        %v1504 = vor.u32 %v1502, %v1503
        %v1505 = vshll.u32 2475754826, %v1499
        %v1506 = vshrl.u32 2131351028, %v1500
        %v1507 = vor.u32 %v1505, %v1506
        %v1508 = vshll.u32 2131351028, %v1499
        %v1509 = vshrl.u32 2102212464, %v1500
        %v1510 = vor.u32 %v1508, %v1509
        %v1511 = vshll.u32 2102212464, %v1499
        %v1512 = vshrl.u32 920167782, %v1500
        %v1513 = vor.u32 %v1511, %v1512
        %v1514 = vshll.u32 920167782, %v1499
        %v1515 = vshrl.u32 1326507024, %v1500
        %v1516 = vor.u32 %v1514, %v1515
        %vm1517 = vcmp.lt.s32.totalorder %v1498, 1
        %vm1518 = vcmp.lt.s32.totalorder %v1498, 2
        %vm1519 = vcmp.lt.s32.totalorder %v1498, 3
        %vm1520 = vcmp.lt.s32.totalorder %v1498, 4
        %v1521 = vsel %vm1517, %v1501, %v1504
        %v1522 = vsel %vm1520, %v1510, 2102212464
        %v1523 = vsel %vm1519, %v1507, %v1522
        %v1524 = vsel %vm1518, %v1521, %v1523
        %v1525 = vsel %vm1517, %v1504, %v1507
        %v1526 = vsel %vm1520, %v1513, 920167782
        %v1527 = vsel %vm1519, %v1510, %v1526
        %v1528 = vsel %vm1518, %v1525, %v1527
        %v1529 = vsel %vm1517, %v1507, %v1510
        %v1530 = vsel %vm1520, %v1516, 1326507024
        %v1531 = vsel %vm1519, %v1513, %v1530
        %v1532 = vsel %vm1518, %v1529, %v1531
        %v1533 = vshll.u32 %v1493, 8
        %v1534 = vmul.u32.u64.compose %v1533, %v1532
        %v1535 = vextract.low.u32 %v1534
        %v1536 = vextract.high.u32 %v1534
        %v1537 = vmul.u32.u64.compose %v1533, %v1528
        %v1538 = vextract.low.u32 %v1537
        %v1539 = vextract.high.u32 %v1537
        %v1540 = vmul.u32 %v1533, %v1524
        %v1541 = vadd.s32 %v1536, %v1538
        %vm1542 = vc.u32 %v1536, %v1538
        %v1543 = vadd.s32 %v1539, 1
        %v1544 = vsel %vm1542, %v1543, %v1539
        %v1545 = vadd.s32 %v1540, %v1544
        %v1546 = vadd.s32 %v1545, 536870912
        %v1547 = vshrl.u32 %v1546, 30
        %v1548 = vshll.u32 %v1547, 30
        %v1549 = vsub.s32 %v1545, %v1548
        %vm1550 = vcmp.lt.s32.totalorder %v1549, 0
        %v1551 = vsub.s32 0, %v1549
        %v1552 = vsel %vm1550, %v1551, %v1549
        %v1553 = vclz %v1552
        %v1554 = vsub.s32 %v1553, 2
        %vm1555 = vcmp.gt.s32.totalorder 0, %v1554
        %v1556 = vsel %vm1555, 0, %v1554
        %v1557 = vsub.s32 32, %v1556
        %v1558 = vshll.u32 %v1549, %v1556
        %v1559 = vshrl.u32 %v1541, %v1557
        %v1560 = vor.u32 %v1558, %v1559
        %v1561 = vsub.s32 4294967266, %v1556
        %v1562 = vadd.s32 %v1561, 127
        %v1563 = vshll.u32 %v1562, 23
        %v1564 = vor.u32 4788187, %v1563
        %v1565 = vand.u32 2147483647, %v1564
        %v1567 = vcvt.s32.f32 %v1560
        %v1568 = vmul.f32 %v1567, %v1565
        %v1569 = vxor.u32 %v1568, 2147483648
        %v1570 = vsel %vm1487, %v1569, %v1568
        %v1571 = vsub.s32 4, %v1547
        %v1572 = vsel %vm1487, %v1571, %v1547
        %v1573 = vsel %vm1486, %v342, %v1570
        %v1574 = vsel %vm1486, 0, %v1572
        %v1575 = vcosq.f32.pop %v1573
        %v1576 = vsinq.f32.pop %v1573
        %vm1577 = vweird.f32 %v342
        %v1578 = vand.u32 %v1574, 3
        %vm1579 = vcmp.lt.s32.totalorder %v1578, 2
        %vm1580 = vcmp.eq.s32.totalorder %v1578, 0
        %v1581 = vxor.u32 %v1576, 2147483648
        %v1582 = vsel %vm1580, %v1575, %v1581
        %vm1583 = vcmp.eq.s32.totalorder %v1578, 2
        %v1584 = vxor.u32 %v1575, 2147483648
        %v1585 = vsel %vm1583, %v1584, %v1576
        %v1586 = vsel %vm1579, %v1582, %v1585
        %v1587 = vsel %vm1577, nan, %v1586
        %v1588 = vand.u32 2147483647, %v347
        %vm1589 = vcmp.le.f32.partialorder %v1588, 0.7853982
        %vm1590 = vcmp.lt.s32.totalorder %v347, 0
        %v1591 = vand.u32 %v347, 2139095040
        %v1592 = vshrl.u32 %v1591, 23
        %v1593 = vsub.s32 %v1592, 127
        %v1594 = vand.u32 2147483647, %v347
        %v1595 = vand.u32 %v1594, 8388607
        %v1596 = vor.u32 %v1595, 8388608
        %v1597 = vsub.s32 0, %v1596
        %v1598 = vadd.s32 %v1593, 1
        %vm1599 = vcmp.gt.s32.totalorder %v1598, 0
        %v1600 = vsel %vm1599, %v1598, 0
        %v1601 = vshrl.u32 %v1600, 5
        %v1602 = vand.u32 %v1600, 31
        %v1603 = vsub.s32 32, %v1602
        %v1604 = vshrl.u32 683565275, %v1603
        %v1605 = vshll.u32 683565275, %v1602
        %v1606 = vshrl.u32 2475754826, %v1603
        %v1607 = vor.u32 %v1605, %v1606
        %v1608 = vshll.u32 2475754826, %v1602
        %v1609 = vshrl.u32 2131351028, %v1603
        %v1610 = vor.u32 %v1608, %v1609
        %v1611 = vshll.u32 2131351028, %v1602
        %v1612 = vshrl.u32 2102212464, %v1603
        %v1613 = vor.u32 %v1611, %v1612
        %v1614 = vshll.u32 2102212464, %v1602
        %v1615 = vshrl.u32 920167782, %v1603
        %v1616 = vor.u32 %v1614, %v1615
        %v1617 = vshll.u32 920167782, %v1602
        %v1618 = vshrl.u32 1326507024, %v1603
        %v1619 = vor.u32 %v1617, %v1618
        %vm1620 = vcmp.lt.s32.totalorder %v1601, 1
        %vm1621 = vcmp.lt.s32.totalorder %v1601, 2
        %vm1622 = vcmp.lt.s32.totalorder %v1601, 3
        %vm1623 = vcmp.lt.s32.totalorder %v1601, 4
        %v1624 = vsel %vm1620, %v1604, %v1607
        %v1625 = vsel %vm1623, %v1613, 2102212464
        %v1626 = vsel %vm1622, %v1610, %v1625
        %v1627 = vsel %vm1621, %v1624, %v1626
        %v1628 = vsel %vm1620, %v1607, %v1610
        %v1629 = vsel %vm1623, %v1616, 920167782
        %v1630 = vsel %vm1622, %v1613, %v1629
        %v1631 = vsel %vm1621, %v1628, %v1630
        %v1632 = vsel %vm1620, %v1610, %v1613
        %v1633 = vsel %vm1623, %v1619, 1326507024
        %v1634 = vsel %vm1622, %v1616, %v1633
        %v1635 = vsel %vm1621, %v1632, %v1634
        %v1636 = vshll.u32 %v1596, 8
        %v1637 = vmul.u32.u64.compose %v1636, %v1635
        %v1638 = vextract.low.u32 %v1637
        %v1639 = vextract.high.u32 %v1637
        %v1640 = vmul.u32.u64.compose %v1636, %v1631
        %v1641 = vextract.low.u32 %v1640
        %v1642 = vextract.high.u32 %v1640
        %v1643 = vmul.u32 %v1636, %v1627
        %v1644 = vadd.s32 %v1639, %v1641
        %vm1645 = vc.u32 %v1639, %v1641
        %v1646 = vadd.s32 %v1642, 1
        %v1647 = vsel %vm1645, %v1646, %v1642
        %v1648 = vadd.s32 %v1643, %v1647
        %v1649 = vadd.s32 %v1648, 536870912
        %v1650 = vshrl.u32 %v1649, 30
        %v1651 = vshll.u32 %v1650, 30
        %v1652 = vsub.s32 %v1648, %v1651
        %vm1653 = vcmp.lt.s32.totalorder %v1652, 0
        %v1654 = vsub.s32 0, %v1652
        %v1655 = vsel %vm1653, %v1654, %v1652
        %v1656 = vclz %v1655
        %v1657 = vsub.s32 %v1656, 2
        %vm1658 = vcmp.gt.s32.totalorder 0, %v1657
        %v1659 = vsel %vm1658, 0, %v1657
        %v1660 = vsub.s32 32, %v1659
        %v1661 = vshll.u32 %v1652, %v1659
        %v1662 = vshrl.u32 %v1644, %v1660
        %v1663 = vor.u32 %v1661, %v1662
        %v1664 = vsub.s32 4294967266, %v1659
        %v1665 = vadd.s32 %v1664, 127
        %v1666 = vshll.u32 %v1665, 23
        %v1667 = vor.u32 4788187, %v1666
        %v1668 = vand.u32 2147483647, %v1667
        %v1670 = vcvt.s32.f32 %v1663
        %v1671 = vmul.f32 %v1670, %v1668
        %v1672 = vxor.u32 %v1671, 2147483648
        %v1673 = vsel %vm1590, %v1672, %v1671
        %v1674 = vsub.s32 4, %v1650
        %v1675 = vsel %vm1590, %v1674, %v1650
        %v1676 = vsel %vm1589, %v347, %v1673
        %v1677 = vsel %vm1589, 0, %v1675
        %v1678 = vcosq.f32.pop %v1676
        %v1679 = vsinq.f32.pop %v1676
        %vm1680 = vweird.f32 %v347
        %v1681 = vand.u32 %v1677, 3
        %vm1682 = vcmp.lt.s32.totalorder %v1681, 2
        %vm1683 = vcmp.eq.s32.totalorder %v1681, 0
        %v1684 = vxor.u32 %v1679, 2147483648
        %v1685 = vsel %vm1683, %v1678, %v1684
        %vm1686 = vcmp.eq.s32.totalorder %v1681, 2
        %v1687 = vxor.u32 %v1678, 2147483648
        %v1688 = vsel %vm1686, %v1687, %v1679
        %v1689 = vsel %vm1682, %v1685, %v1688
        %v1690 = vsel %vm1680, nan, %v1689
        %v1691 = vmul.f32 %v454, 0.15811388
        %v1692 = vmul.f32 %v557, 0.15811388
        %v1693 = vmul.f32 %v660, 0.15811388
        %v1694 = vmul.f32 %v763, 0.15811388
        %v1695 = vmul.f32 %v866, 0.15811388
        %v1696 = vmul.f32 %v969, 0.15811388
        %v1697 = vmul.f32 %v1072, 0.15811388
        %v1698 = vmul.f32 %v1175, 0.15811388
        %v1699 = vmul.f32 %v1278, 0.15811388
        %v1700 = vmul.f32 %v1381, 0.15811388
        %v1701 = vmul.f32 %v1484, 0.15811388
        %v1702 = vmul.f32 %v1587, 0.15811388
        %v1703 = vmul.f32 %v1690, 0.15811388
        %1704 = vst [vmem:[%s164] sm:$0xff] %v1691
        %1705 = vst [vmem:[%s164 + $0x8] sm:$0xff] %v1692
        %1706 = vst [vmem:[%s164 + $0x10] sm:$0xff] %v1693
        %1707 = vst [vmem:[%s164 + $0x18] sm:$0xff] %v1694
        %1708 = vst [vmem:[%s164 + $0x20] sm:$0xff] %v1695
        %1709 = vst [vmem:[%s164 + $0x28] sm:$0xff] %v1696
        %1710 = vst [vmem:[%s164 + $0x30] sm:$0xff] %v1697
        %1711 = vst [vmem:[%s164 + $0x38] sm:$0xff] %v1698
        %1712 = vst [vmem:[%s164 + $0x40] sm:$0xff] %v1699
        %1713 = vst [vmem:[%s164 + $0x48] sm:$0xff] %v1700
        %1714 = vst [vmem:[%s164 + $0x50] sm:$0xff] %v1701
        %1715 = vst [vmem:[%s164 + $0x58] sm:$0xff] %v1702
        %1716 = vst [vmem:[%s164 + $0x60] sm:$0xff] %v1703
        %s1717 = sand.u32 %s93, 1
        %s1718 = scalar_lea.sflag [#allocation3], %s1717
        %s1719 = sand.u32 %s93, 1
        %s1720 = smul.addr %s1719, 104
        %s1721 = scalar_lea.vmem [#allocation2], %s1720
        // Predicated region
        $region33: #{tpu_custom_call.1} parent=31 // pred_check
          %p1722 = pneg %p103
        $region34: #{tpu_custom_call.1} parent=31 // pred_check_branch
          %1724 = sbr.rel (%p1722) target = $region36
        $region35: #{tpu_custom_call.1} parent=31 // pred_region
          %s1725 = smul.u32 13, %s17
          %s1727 = ssub.s32 1664, 1664
          %1728 = vsyncadd %s1718, %s1727
          %s1729 = smul.addr %s1725, 128
          %s1730 = scalar_lea.hbm %s3, %s1729
          %s1731 = sshll.u32 %s1721, 4
          %s1732 = int_to_ptr.vmem [resolvable:$true] %s1731
          %1737 = dma.vmem_to_hbm [thread:$0]  %s1732, 1664, %s1730, %s1718, 128, 128, 8
        $region36: #{tpu_custom_call.1} parent=31 // pred_fallthru
          _
      $region32: #{tpu_custom_call.1} parent=5 // pred_fallthru
        _
      %p1738 = scmp.le.s32.totalorder 2, %s12
      // Predicated region
      $region37: #{tpu_custom_call.1} parent=5 // pred_check
        %p1739 = pneg %p1738
      $region38: #{tpu_custom_call.1} parent=5 // pred_check_branch
        %1741 = sbr.rel (%p1739) target = $region40
      $region39: #{tpu_custom_call.1} parent=5 // pred_region
        %s1742 = ssub.s32 %s12, 2
        // Predicated region
        $region41: #{tpu_custom_call.1} parent=39 // pred_check
          %p1743 = pneg %p109
        $region42: #{tpu_custom_call.1} parent=39 // pred_check_branch
          %1745 = sbr.rel (%p1743) target = $region44
        $region43: #{tpu_custom_call.1} parent=39 // pred_region
          %s1746 = sand.u32 %s94, 1
          %s1747 = scalar_lea.sflag [#allocation3], %s1746
          %s1748 = sand.u32 %s94, 1
          %s1749 = smul.addr %s1748, 104
          %s1750 = scalar_lea.vmem [#allocation2], %s1749
          %1751 = dma.done %s1747, 1664
        $region44: #{tpu_custom_call.1} parent=39 // pred_fallthru
          _
      $region40: #{tpu_custom_call.1} parent=5 // pred_fallthru
        _
    $region6: #{tpu_custom_call.1} parent=1 // loop_footer
      %s16 = sadd.s32 1, %s12
    $region7: #{tpu_custom_call.1} parent=1 // loop_footer_branch
      %11 = sbr.rel target = $region3
    $region8: #{tpu_custom_call.1} parent=1 // loop_exit
      _
    %1752 = vsyncpa [#allocation3], 1
    %s1753 = scalar_lea.sflag [#allocation3], 1
    %1754 = vsyncpa %s1753, 1

// kernel: tpu_custom_call.1
$region0: #{tpu_custom_call.1}
  #allocation0 [shape = 'u32[]', space=smem, size = 0x4, offset = 0x4, fixed_abs, tag = 'smem constant byte address 0x4 - core index']
  #allocation1 [shape = 'u32[144,128]{1,0:T(1,128)}', space=vmem, size = 0x12000, scoped, tag = 'internal scratch']
  %s0 = inlined_call_operand.vmem [shape: bf16[208,32], index: 0, kind: input, shape index: {}]
  %s1 = inlined_call_operand.vmem [shape: bf16[32,128], index: 1, kind: input, shape index: {}]
  %s2 = inlined_call_operand.vmem [shape: f32[1,128], index: 2, kind: input, shape index: {}]
  %s3 = inlined_call_operand.hbm [shape: f32[208,128], index: 3, kind: output, shape index: {}]
  %s4 = sld [smem:[#allocation0]]
  $region45: #{tpu_custom_call.1} parent=0
    _
  %s6 = ssub.s32 1, %s4
  %s7 = scalar_select 0, %s6, %s4
  $region1: #{tpu_custom_call.1} parent=0
    #allocation2 [shape = 'u8[106496]{0}', space=vmem, size = 0x1a000, scoped, tag = 'output window, operand 0']
    #allocation3 [shape = 's32[2]{0}', space=sflag, size = 0x8, scoped, tag = 'scoped memory for tpu_custom_call.1']
    %8 = vsyncpa [#allocation3], 0
    %s9 = scalar_lea.sflag [#allocation3], 1
    %10 = vsyncpa %s9, 0
    loop: start=0, step=1, limit=4
    $region2: #{tpu_custom_call.1} parent=1 // loop_pre_header
      _
    $region3: #{tpu_custom_call.1} parent=1 // loop_header
      %s12 = sphi 0, %s16
      %p13 = scmp.ge.s32.totalorder %s12, 4
      %s22 = sphi 0, %s24
      %s25 = sphi 0, %s22
      %s26 = sphi 0, %s25
      %s42 = sphi 0, %s26
      %s46 = sphi 0, %s46
      %s48 = sphi 0, %s46
      %s49 = sphi 0, %s48
      %s63 = sphi 0, %s49
      %s67 = sphi 0, %s67
      %s69 = sphi 0, %s67
      %s70 = sphi 0, %s69
      %s84 = sphi 0, %s70
      %s90 = sphi 0, %s92
      %s93 = sphi 0, %s90
      %s94 = sphi 0, %s93
      %s110 = sphi 0, %s94
    $region4: #{tpu_custom_call.1} parent=1 // loop_header_branch
      %15 = sbr.rel (%p13) target = $region8
    $region5: #{tpu_custom_call.1} parent=1 // loop_body
      %s17 = ssub.s32 %s12, 1
      %s18 = ssub.s32 %s12, 2
      %s19 = sadd.s32 %s12, 1
      %s20 = ssub.s32 %s12, %s19
      %p21 = scmp.eq.s32.totalorder %s20, 0
      %s23 = sadd.s32 %s22, 1
      %s24 = scalar_select %p21, %s22, %s23
      %p27 = pneg %p21
      %p28 = scmp.eq.s32.totalorder %s12, 1
      %p29 = por %p27, %p28
      %p30 = scmp.ne.s32.totalorder %s22, %s25
      %p31 = scmp.eq.s32.totalorder %s12, 0
      %p32 = por %p30, %p31
      %p33 = scmp.ne.s32.totalorder %s22, %s25
      %p34 = scmp.eq.s32.totalorder %s17, 1
      %p35 = por %p33, %p34
      %p36 = scmp.ne.s32.totalorder %s25, %s26
      %p37 = scmp.eq.s32.totalorder %s17, 0
      %p38 = por %p36, %p37
      %p39 = scmp.ne.s32.totalorder %s25, %s26
      %p40 = scmp.eq.s32.totalorder %s18, 1
      %p41 = por %p39, %p40
      %p43 = scmp.ne.s32.totalorder %s26, %s42
      %p44 = scmp.eq.s32.totalorder %s18, 0
      %p45 = por %p43, %p44
      %s47 = sadd.s32 %s46, 1
      %p50 = scmp.eq.s32.totalorder %s12, 1
      %p51 = scmp.ne.s32.totalorder %s46, %s48
      %p52 = scmp.eq.s32.totalorder %s12, 0
      %p53 = por %p51, %p52
      %p54 = scmp.ne.s32.totalorder %s46, %s48
      %p55 = scmp.eq.s32.totalorder %s17, 1
      %p56 = por %p54, %p55
      %p57 = scmp.ne.s32.totalorder %s48, %s49
      %p58 = scmp.eq.s32.totalorder %s17, 0
      %p59 = por %p57, %p58
      %p60 = scmp.ne.s32.totalorder %s48, %s49
      %p61 = scmp.eq.s32.totalorder %s18, 1
      %p62 = por %p60, %p61
      %p64 = scmp.ne.s32.totalorder %s49, %s63
      %p65 = scmp.eq.s32.totalorder %s18, 0
      %p66 = por %p64, %p65
      %s68 = sadd.s32 %s67, 1
      %p71 = scmp.eq.s32.totalorder %s12, 1
      %p72 = scmp.ne.s32.totalorder %s67, %s69
      %p73 = scmp.eq.s32.totalorder %s12, 0
      %p74 = por %p72, %p73
      %p75 = scmp.ne.s32.totalorder %s67, %s69
      %p76 = scmp.eq.s32.totalorder %s17, 1
      %p77 = por %p75, %p76
      %p78 = scmp.ne.s32.totalorder %s69, %s70
      %p79 = scmp.eq.s32.totalorder %s17, 0
      %p80 = por %p78, %p79
      %p81 = scmp.ne.s32.totalorder %s69, %s70
      %p82 = scmp.eq.s32.totalorder %s18, 1
      %p83 = por %p81, %p82
      %p85 = scmp.ne.s32.totalorder %s70, %s84
      %p86 = scmp.eq.s32.totalorder %s18, 0
      %p87 = por %p85, %p86
      %s88 = ssub.s32 %s12, %s19
      %p89 = scmp.eq.s32.totalorder %s88, 0
      %s91 = sadd.s32 %s90, 1
      %s92 = scalar_select %p89, %s90, %s91
      %p95 = pneg %p89
      %p96 = scmp.eq.s32.totalorder %s12, 1
      %p97 = por %p95, %p96
      %p98 = scmp.ne.s32.totalorder %s90, %s93
      %p99 = scmp.eq.s32.totalorder %s12, 0
      %p100 = por %p98, %p99
      %p101 = scmp.ne.s32.totalorder %s90, %s93
      %p102 = scmp.eq.s32.totalorder %s17, 1
      %p103 = por %p101, %p102
      %p104 = scmp.ne.s32.totalorder %s93, %s94
      %p105 = scmp.eq.s32.totalorder %s17, 0
      %p106 = por %p104, %p105
      %p107 = scmp.ne.s32.totalorder %s93, %s94
      %p108 = scmp.eq.s32.totalorder %s18, 1
      %p109 = por %p107, %p108
      %p111 = scmp.ne.s32.totalorder %s94, %s110
      %p112 = scmp.eq.s32.totalorder %s18, 0
      %p113 = por %p111, %p112
      %p114 = scmp.le.s32.totalorder 1, %s12
      %p115 = scmp.lt.s32.totalorder %s12, 3
      %p116 = pnand %p114, %p115
      %p117 = pneg %p116
      // Predicated region
      $region9: #{tpu_custom_call.1} parent=5 // pred_check
        _
      $region10: #{tpu_custom_call.1} parent=5 // pred_check_branch
        %119 = sbr.rel (%p116) target = $region12
      $region11: #{tpu_custom_call.1} parent=5 // pred_region
        %s120 = ssub.s32 %s12, 1
        // Predicated region
        $region13: #{tpu_custom_call.1} parent=11 // pred_check
          %p121 = pneg %p59
        $region14: #{tpu_custom_call.1} parent=11 // pred_check_branch
          %123 = sbr.rel (%p121) target = $region16
        $region15: #{tpu_custom_call.1} parent=11 // pred_region
          _
        $region16: #{tpu_custom_call.1} parent=11 // pred_fallthru
          _
        // Predicated region
        $region17: #{tpu_custom_call.1} parent=11 // pred_check
          %p124 = pneg %p80
        $region18: #{tpu_custom_call.1} parent=11 // pred_check_branch
          %126 = sbr.rel (%p124) target = $region20
        $region19: #{tpu_custom_call.1} parent=11 // pred_region
          _
        $region20: #{tpu_custom_call.1} parent=11 // pred_fallthru
          _
      $region12: #{tpu_custom_call.1} parent=5 // pred_fallthru
        _
      %p127 = scmp.lt.s32.totalorder %s12, 2
      // Predicated region
      $region21: #{tpu_custom_call.1} parent=5 // pred_check
        %p128 = pneg %p127
      $region22: #{tpu_custom_call.1} parent=5 // pred_check_branch
        %130 = sbr.rel (%p128) target = $region24
      $region23: #{tpu_custom_call.1} parent=5 // pred_region
        // Predicated region
        $region25: #{tpu_custom_call.1} parent=23 // pred_check
          %p131 = pneg %p32
        $region26: #{tpu_custom_call.1} parent=23 // pred_check_branch
          %133 = sbr.rel (%p131) target = $region28
        $region27: #{tpu_custom_call.1} parent=23 // pred_region
          %s134 = smul.u32 13, %s12
          %p135 = scmp.lt.s32.totalorder %s134, 25
          %s136 = scalar_select %p135, %s134, 25
          %s137 = smul.addr %s136, 4
          %s138 = scalar_lea.vmem %s0, %s137
          %s139 = smul.u32 13, %s12
        $region28: #{tpu_custom_call.1} parent=23 // pred_fallthru
          _
      $region24: #{tpu_custom_call.1} parent=5 // pred_fallthru
        _
      %p140 = scmp.le.s32.totalorder 1, %s12
      %p141 = scmp.lt.s32.totalorder %s12, 3
      %p142 = pnand %p140, %p141
      %p143 = pneg %p142
      // Predicated region
      $region29: #{tpu_custom_call.1} parent=5 // pred_check
        _
      $region30: #{tpu_custom_call.1} parent=5 // pred_check_branch
        %145 = sbr.rel (%p142) target = $region32
      $region31: #{tpu_custom_call.1} parent=5 // pred_region
        %s146 = ssub.s32 %s12, 1
        %s147 = smul.u32 13, %s17
        %p148 = scmp.lt.s32.totalorder %s147, 25
        %s149 = scalar_select %p148, %s147, 25
        %s150 = smul.addr %s149, 4
        %s151 = scalar_lea.vmem %s0, %s150
        %p152 = pneg %p38
        %p153 = pneg %p35
        %p154 = pneg %p59
        %p155 = pneg %p56
        %p156 = pneg %p80
        %p157 = pneg %p77
        %p158 = pneg %p106
        %p159 = pneg %p103
        %s160 = sand.u32 %s93, 1
        %s161 = scalar_lea.sflag [#allocation3], %s160
        %s162 = sand.u32 %s93, 1
        %s163 = smul.addr %s162, 104
        %s164 = scalar_lea.vmem [#allocation2], %s163
        %s165 = smul.u32 13, %s17
        %p166 = scmp.lt.s32.totalorder %s165, 25
        %s167 = scalar_select %p166, %s165, 25
        %s168 = smul.addr %s167, 4
        %s169 = scalar_lea.vmem %s0, %s168
        %s170 = smul.u32 13, %s17
        %s171 = smul.u32 13, %s17
        %v173 = vld [vmem:[%s169] sm:$0xf]
        %v174 = vld [vmem:[%s169 + $0x4] sm:$0xf]
        %v175 = vld [vmem:[%s169 + $0x8] sm:$0xf]
        %v176 = vld [vmem:[%s169 + $0xc] sm:$0xf]
        %v177 = vld [vmem:[%s169 + $0x10] sm:$0xf]
        %v178 = vld [vmem:[%s169 + $0x14] sm:$0xf]
        %v179 = vld [vmem:[%s169 + $0x18] sm:$0xf]
        %v180 = vld [vmem:[%s169 + $0x1c] sm:$0xf]
        %v181 = vld [vmem:[%s169 + $0x20] sm:$0xf]
        %v182 = vld [vmem:[%s169 + $0x24] sm:$0xf]
        %v183 = vld [vmem:[%s169 + $0x28] sm:$0xf]
        %v184 = vld [vmem:[%s169 + $0x2c] sm:$0xf]
        %v185 = vld [vmem:[%s169 + $0x30] sm:$0xf]
        %v186 = vld [vmem:[%s1] sm:$0xf]
        %v187 = vld [vmem:[%s1 + $0x4] sm:$0xf]
        %v188 = vld [vmem:[%s1 + $0x8] sm:$0xf]
        %v189 = vld [vmem:[%s1 + $0xc] sm:$0xf]
        %v190 = vld [vmem:[%s2] sm:$0x1]
        %v192 = vlaneseq
        %v193 = vshrl.u32 %v192, 7
        %v194 = vsub.s32 0, %v193
        %v195 = vrot.slane %v190, %v194
        %v210 = vunpack.c.l.b16 %v173
        %v211 = vunpack.c.l.b16 %v174
        %v212 = vunpack.c.l.b16 %v175
        %v213 = vunpack.c.l.b16 %v176
        %v214 = vunpack.c.l.b16 %v177
        %v215 = vunpack.c.l.b16 %v178
        %v216 = vunpack.c.l.b16 %v179
        %v217 = vunpack.c.l.b16 %v180
        %v218 = vunpack.c.l.b16 %v181
        %v219 = vunpack.c.l.b16 %v182
        %v220 = vunpack.c.l.b16 %v183
        %v221 = vunpack.c.l.b16 %v184
        %v222 = vunpack.c.l.b16 %v185
        %v223 = vpack.c.b16 %v211, %v210
        %v224 = vpack.c.b16 %v213, %v212
        %v225 = vpack.c.b16 %v215, %v214
        %v226 = vpack.c.b16 %v217, %v216
        %v227 = vpack.c.b16 %v219, %v218
        %v228 = vpack.c.b16 %v221, %v220
        %v229 = vpack.c.b16 %v222, %v222
        %v234 = vunpack.c.l.b16 %v186
        %v235 = vunpack.c.l.b16 %v187
        %v236 = vunpack.c.l.b16 %v188
        %v237 = vunpack.c.l.b16 %v189
        %v238 = vpack.c.b16 %v235, %v234
        %v239 = vpack.c.b16 %v237, %v236
        %vm242 = vcmask 261120
        %v244 = vsel %vm242, %v223, 0
        %v247 = vsel %vm242, %v224, 0
        %v250 = vsel %vm242, %v225, 0
        %v253 = vsel %vm242, %v226, 0
        %v256 = vsel %vm242, %v227, 0
        %v259 = vsel %vm242, %v228, 0
        %v262 = vsel %vm242, %v229, 0
        %264 = vmatprep.subr.bf16.mxu0 0
        %265 = vmatpush1.bf16.msra.mxu0 %v238
        %266 = vmatprep.subr.bf16.mxu0 0
        %267 = vmatpush1.bf16.msra.mxu0 %v239
        %268 = vmatprep.subr.bf16.mxu0 0
        %269 = vmatpush1.bf16.msra.mxu0 0
        %270 = vmatprep.subr.bf16.mxu0 0
        %271 = vmatpush1.bf16.msra.mxu0 0
        %272 = vmatprep.subr.bf16.mxu0 0
        %273 = vmatpush1.bf16.msra.mxu0 0
        %274 = vmatprep.subr.bf16.mxu0 0
        %275 = vmatpush1.bf16.msra.mxu0 0
        %276 = vmatprep.subr.bf16.mxu0 0
        %277 = vmatpush1.bf16.msra.mxu0 0
        %278 = vmatprep.subr.bf16.mxu0 0
        %279 = vmatpush1.bf16.msra.mxu0 0
        %280 = vmatprep.subr.bf16.mxu0 0
        %281 = vmatpush1.bf16.msra.mxu0 0
        %282 = vmatprep.subr.bf16.mxu0 0
        %283 = vmatpush1.bf16.msra.mxu0 0
        %284 = vmatprep.subr.bf16.mxu0 0
        %285 = vmatpush1.bf16.msra.mxu0 0
        %286 = vmatprep.subr.bf16.mxu0 0
        %287 = vmatpush1.bf16.msra.mxu0 0
        %288 = vmatprep.subr.bf16.mxu0 0
        %289 = vmatpush1.bf16.msra.mxu0 0
        %290 = vmatprep.subr.bf16.mxu0 0
        %291 = vmatpush1.bf16.msra.mxu0 0
        %292 = vmatprep.subr.bf16.mxu0 0
        %293 = vmatpush1.bf16.msra.mxu0 0
        %294 = vmatprep.subr.bf16.mxu0 0
        %295 = vmatpush1.bf16.msra.mxu0 0
        %296 = vmatprep.mubr.bf16.mxu0 0
        %297 = vmatmul.mubr.bf16.gmra.mrb[0].mxu0 %v244
        %v298 = vpop.f32.mrb[0].mxu0
        %v299 = vadd.f32 %v195, %v298
        %v300 = vpop.f32.mrb[0].mxu0
        %v301 = vpop.f32.mrb[0].mxu0
        %v302 = vadd.f32 %v195, %v301
        %v303 = vpop.f32.mrb[0].mxu0
        %304 = vmatprep.mubr.bf16.mxu0 0
        %305 = vmatmul.mubr.bf16.gmra.mrb[0].mxu0 %v247
        %v306 = vpop.f32.mrb[0].mxu0
        %v307 = vadd.f32 %v195, %v306
        %v308 = vpop.f32.mrb[0].mxu0
        %v309 = vpop.f32.mrb[0].mxu0
        %v310 = vadd.f32 %v195, %v309
        %v311 = vpop.f32.mrb[0].mxu0
        %312 = vmatprep.mubr.bf16.mxu0 0
        %313 = vmatmul.mubr.bf16.gmra.mrb[0].mxu0 %v250
        %v314 = vpop.f32.mrb[0].mxu0
        %v315 = vadd.f32 %v195, %v314
        %v316 = vpop.f32.mrb[0].mxu0
        %v317 = vpop.f32.mrb[0].mxu0
        %v318 = vadd.f32 %v195, %v317
        %v319 = vpop.f32.mrb[0].mxu0
        %320 = vmatprep.mubr.bf16.mxu0 0
        %321 = vmatmul.mubr.bf16.gmra.mrb[0].mxu0 %v253
        %v322 = vpop.f32.mrb[0].mxu0
        %v323 = vadd.f32 %v195, %v322
        %v324 = vpop.f32.mrb[0].mxu0
        %v325 = vpop.f32.mrb[0].mxu0
        %v326 = vadd.f32 %v195, %v325
        %v327 = vpop.f32.mrb[0].mxu0
        %328 = vmatprep.mubr.bf16.mxu0 0
        %329 = vmatmul.mubr.bf16.gmra.mrb[0].mxu0 %v256
        %v330 = vpop.f32.mrb[0].mxu0
        %v331 = vadd.f32 %v195, %v330
        %v332 = vpop.f32.mrb[0].mxu0
        %v333 = vpop.f32.mrb[0].mxu0
        %v334 = vadd.f32 %v195, %v333
        %v335 = vpop.f32.mrb[0].mxu0
        %336 = vmatprep.mubr.bf16.mxu0 0
        %337 = vmatmul.mubr.bf16.gmra.mrb[0].mxu0 %v259
        %v338 = vpop.f32.mrb[0].mxu0
        %v339 = vadd.f32 %v195, %v338
        %v340 = vpop.f32.mrb[0].mxu0
        %v341 = vpop.f32.mrb[0].mxu0
        %v342 = vadd.f32 %v195, %v341
        %v343 = vpop.f32.mrb[0].mxu0
        %344 = vmatprep.mubr.bf16.mxu0 0
        %345 = vmatmul.mubr.bf16.gmra.mrb[0].mxu0 %v262
        %v346 = vpop.f32.mrb[0].mxu0
        %v347 = vadd.f32 %v195, %v346
        %v348 = vpop.f32.mrb[0].mxu0
        %v349 = vpop.f32.mrb[0].mxu0
        %v350 = vpop.f32.mrb[0].mxu0
        %351 = vdwg.mxu0
        %v352 = vand.u32 2147483647, %v299
        %vm353 = vcmp.le.f32.partialorder %v352, 0.7853982
        %vm354 = vcmp.lt.s32.totalorder %v299, 0
        %v355 = vand.u32 %v299, 2139095040
        %v356 = vshrl.u32 %v355, 23
        %v357 = vsub.s32 %v356, 127
        %v358 = vand.u32 2147483647, %v299
        %v359 = vand.u32 %v358, 8388607
        %v360 = vor.u32 %v359, 8388608
        %v361 = vsub.s32 0, %v360
        %v362 = vadd.s32 %v357, 1
        %vm363 = vcmp.gt.s32.totalorder %v362, 0
        %v364 = vsel %vm363, %v362, 0
        %v365 = vshrl.u32 %v364, 5
        %v366 = vand.u32 %v364, 31
        %v367 = vsub.s32 32, %v366
        %v368 = vshrl.u32 683565275, %v367
        %v369 = vshll.u32 683565275, %v366
        %v370 = vshrl.u32 2475754826, %v367
        %v371 = vor.u32 %v369, %v370
        %v372 = vshll.u32 2475754826, %v366
        %v373 = vshrl.u32 2131351028, %v367
        %v374 = vor.u32 %v372, %v373
        %v375 = vshll.u32 2131351028, %v366
        %v376 = vshrl.u32 2102212464, %v367
        %v377 = vor.u32 %v375, %v376
        %v378 = vshll.u32 2102212464, %v366
        %v379 = vshrl.u32 920167782, %v367
        %v380 = vor.u32 %v378, %v379
        %v381 = vshll.u32 920167782, %v366
        %v382 = vshrl.u32 1326507024, %v367
        %v383 = vor.u32 %v381, %v382
        %vm384 = vcmp.lt.s32.totalorder %v365, 1
        %vm385 = vcmp.lt.s32.totalorder %v365, 2
        %vm386 = vcmp.lt.s32.totalorder %v365, 3
        %vm387 = vcmp.lt.s32.totalorder %v365, 4
        %v388 = vsel %vm384, %v368, %v371
        %v389 = vsel %vm387, %v377, 2102212464
        %v390 = vsel %vm386, %v374, %v389
        %v391 = vsel %vm385, %v388, %v390
        %v392 = vsel %vm384, %v371, %v374
        %v393 = vsel %vm387, %v380, 920167782
        %v394 = vsel %vm386, %v377, %v393
        %v395 = vsel %vm385, %v392, %v394
        %v396 = vsel %vm384, %v374, %v377
        %v397 = vsel %vm387, %v383, 1326507024
        %v398 = vsel %vm386, %v380, %v397
        %v399 = vsel %vm385, %v396, %v398
        %v400 = vshll.u32 %v360, 8
        %v401 = vmul.u32.u64.compose %v400, %v399
        %v402 = vextract.low.u32 %v401
        %v403 = vextract.high.u32 %v401
        %v404 = vmul.u32.u64.compose %v400, %v395
        %v405 = vextract.low.u32 %v404
        %v406 = vextract.high.u32 %v404
        %v407 = vmul.u32 %v400, %v391
        %v408 = vadd.s32 %v403, %v405
        %vm409 = vc.u32 %v403, %v405
        %v410 = vadd.s32 %v406, 1
        %v411 = vsel %vm409, %v410, %v406
        %v412 = vadd.s32 %v407, %v411
        %v413 = vadd.s32 %v412, 536870912
        %v414 = vshrl.u32 %v413, 30
        %v415 = vshll.u32 %v414, 30
        %v416 = vsub.s32 %v412, %v415
        %vm417 = vcmp.lt.s32.totalorder %v416, 0
        %v418 = vsub.s32 0, %v416
        %v419 = vsel %vm417, %v418, %v416
        %v420 = vclz %v419
        %v421 = vsub.s32 %v420, 2
        %vm422 = vcmp.gt.s32.totalorder 0, %v421
        %v423 = vsel %vm422, 0, %v421
        %v424 = vsub.s32 32, %v423
        %v425 = vshll.u32 %v416, %v423
        %v426 = vshrl.u32 %v408, %v424
        %v427 = vor.u32 %v425, %v426
        %v428 = vsub.s32 4294967266, %v423
        %v429 = vadd.s32 %v428, 127
        %v430 = vshll.u32 %v429, 23
        %v431 = vor.u32 4788187, %v430
        %v432 = vand.u32 2147483647, %v431
        %v434 = vcvt.s32.f32 %v427
        %v435 = vmul.f32 %v434, %v432
        %v436 = vxor.u32 %v435, 2147483648
        %v437 = vsel %vm354, %v436, %v435
        %v438 = vsub.s32 4, %v414
        %v439 = vsel %vm354, %v438, %v414
        %v440 = vsel %vm353, %v299, %v437
        %v441 = vsel %vm353, 0, %v439
        %v442 = vcosq.f32.pop %v440
        %v443 = vsinq.f32.pop %v440
        %vm444 = vweird.f32 %v299
        %v445 = vand.u32 %v441, 3
        %vm446 = vcmp.lt.s32.totalorder %v445, 2
        %vm447 = vcmp.eq.s32.totalorder %v445, 0
        %v448 = vxor.u32 %v443, 2147483648
        %v449 = vsel %vm447, %v442, %v448
        %vm450 = vcmp.eq.s32.totalorder %v445, 2
        %v451 = vxor.u32 %v442, 2147483648
        %v452 = vsel %vm450, %v451, %v443
        %v453 = vsel %vm446, %v449, %v452
        %v454 = vsel %vm444, nan, %v453
        %v455 = vand.u32 2147483647, %v302
        %vm456 = vcmp.le.f32.partialorder %v455, 0.7853982
        %vm457 = vcmp.lt.s32.totalorder %v302, 0
        %v458 = vand.u32 %v302, 2139095040
        %v459 = vshrl.u32 %v458, 23
        %v460 = vsub.s32 %v459, 127
        %v461 = vand.u32 2147483647, %v302
        %v462 = vand.u32 %v461, 8388607
        %v463 = vor.u32 %v462, 8388608
        %v464 = vsub.s32 0, %v463
        %v465 = vadd.s32 %v460, 1
        %vm466 = vcmp.gt.s32.totalorder %v465, 0
        %v467 = vsel %vm466, %v465, 0
        %v468 = vshrl.u32 %v467, 5
        %v469 = vand.u32 %v467, 31
        %v470 = vsub.s32 32, %v469
        %v471 = vshrl.u32 683565275, %v470
        %v472 = vshll.u32 683565275, %v469
        %v473 = vshrl.u32 2475754826, %v470
        %v474 = vor.u32 %v472, %v473
        %v475 = vshll.u32 2475754826, %v469
        %v476 = vshrl.u32 2131351028, %v470
        %v477 = vor.u32 %v475, %v476
        %v478 = vshll.u32 2131351028, %v469
        %v479 = vshrl.u32 2102212464, %v470
        %v480 = vor.u32 %v478, %v479
        %v481 = vshll.u32 2102212464, %v469
        %v482 = vshrl.u32 920167782, %v470
        %v483 = vor.u32 %v481, %v482
        %v484 = vshll.u32 920167782, %v469
        %v485 = vshrl.u32 1326507024, %v470
        %v486 = vor.u32 %v484, %v485
        %vm487 = vcmp.lt.s32.totalorder %v468, 1
        %vm488 = vcmp.lt.s32.totalorder %v468, 2
        %vm489 = vcmp.lt.s32.totalorder %v468, 3
        %vm490 = vcmp.lt.s32.totalorder %v468, 4
        %v491 = vsel %vm487, %v471, %v474
        %v492 = vsel %vm490, %v480, 2102212464
        %v493 = vsel %vm489, %v477, %v492
        %v494 = vsel %vm488, %v491, %v493
        %v495 = vsel %vm487, %v474, %v477
        %v496 = vsel %vm490, %v483, 920167782
        %v497 = vsel %vm489, %v480, %v496
        %v498 = vsel %vm488, %v495, %v497
        %v499 = vsel %vm487, %v477, %v480
        %v500 = vsel %vm490, %v486, 1326507024
        %v501 = vsel %vm489, %v483, %v500
        %v502 = vsel %vm488, %v499, %v501
        %v503 = vshll.u32 %v463, 8
        %v504 = vmul.u32.u64.compose %v503, %v502
        %v505 = vextract.low.u32 %v504
        %v506 = vextract.high.u32 %v504
        %v507 = vmul.u32.u64.compose %v503, %v498
        %v508 = vextract.low.u32 %v507
        %v509 = vextract.high.u32 %v507
        %v510 = vmul.u32 %v503, %v494
        %v511 = vadd.s32 %v506, %v508
        %vm512 = vc.u32 %v506, %v508
        %v513 = vadd.s32 %v509, 1
        %v514 = vsel %vm512, %v513, %v509
        %v515 = vadd.s32 %v510, %v514
        %v516 = vadd.s32 %v515, 536870912
        %v517 = vshrl.u32 %v516, 30
        %v518 = vshll.u32 %v517, 30
        %v519 = vsub.s32 %v515, %v518
        %vm520 = vcmp.lt.s32.totalorder %v519, 0
        %v521 = vsub.s32 0, %v519
        %v522 = vsel %vm520, %v521, %v519
        %v523 = vclz %v522
        %v524 = vsub.s32 %v523, 2
        %vm525 = vcmp.gt.s32.totalorder 0, %v524
        %v526 = vsel %vm525, 0, %v524
        %v527 = vsub.s32 32, %v526
        %v528 = vshll.u32 %v519, %v526
        %v529 = vshrl.u32 %v511, %v527
        %v530 = vor.u32 %v528, %v529
        %v531 = vsub.s32 4294967266, %v526
        %v532 = vadd.s32 %v531, 127
        %v533 = vshll.u32 %v532, 23
        %v534 = vor.u32 4788187, %v533
        %v535 = vand.u32 2147483647, %v534
        %v537 = vcvt.s32.f32 %v530
        %v538 = vmul.f32 %v537, %v535
        %v539 = vxor.u32 %v538, 2147483648
        %v540 = vsel %vm457, %v539, %v538
        %v541 = vsub.s32 4, %v517
        %v542 = vsel %vm457, %v541, %v517
        %v543 = vsel %vm456, %v302, %v540
        %v544 = vsel %vm456, 0, %v542
        %v545 = vcosq.f32.pop %v543
        %v546 = vsinq.f32.pop %v543
        %vm547 = vweird.f32 %v302
        %v548 = vand.u32 %v544, 3
        %vm549 = vcmp.lt.s32.totalorder %v548, 2
        %vm550 = vcmp.eq.s32.totalorder %v548, 0
        %v551 = vxor.u32 %v546, 2147483648
        %v552 = vsel %vm550, %v545, %v551
        %vm553 = vcmp.eq.s32.totalorder %v548, 2
        %v554 = vxor.u32 %v545, 2147483648
        %v555 = vsel %vm553, %v554, %v546
        %v556 = vsel %vm549, %v552, %v555
        %v557 = vsel %vm547, nan, %v556
        %v558 = vand.u32 2147483647, %v307
        %vm559 = vcmp.le.f32.partialorder %v558, 0.7853982
        %vm560 = vcmp.lt.s32.totalorder %v307, 0
        %v561 = vand.u32 %v307, 2139095040
        %v562 = vshrl.u32 %v561, 23
        %v563 = vsub.s32 %v562, 127
        %v564 = vand.u32 2147483647, %v307
        %v565 = vand.u32 %v564, 8388607
        %v566 = vor.u32 %v565, 8388608
        %v567 = vsub.s32 0, %v566
        %v568 = vadd.s32 %v563, 1
        %vm569 = vcmp.gt.s32.totalorder %v568, 0
        %v570 = vsel %vm569, %v568, 0
        %v571 = vshrl.u32 %v570, 5
        %v572 = vand.u32 %v570, 31
        %v573 = vsub.s32 32, %v572
        %v574 = vshrl.u32 683565275, %v573
        %v575 = vshll.u32 683565275, %v572
        %v576 = vshrl.u32 2475754826, %v573
        %v577 = vor.u32 %v575, %v576
        %v578 = vshll.u32 2475754826, %v572
        %v579 = vshrl.u32 2131351028, %v573
        %v580 = vor.u32 %v578, %v579
        %v581 = vshll.u32 2131351028, %v572
        %v582 = vshrl.u32 2102212464, %v573
        %v583 = vor.u32 %v581, %v582
        %v584 = vshll.u32 2102212464, %v572
        %v585 = vshrl.u32 920167782, %v573
        %v586 = vor.u32 %v584, %v585
        %v587 = vshll.u32 920167782, %v572
        %v588 = vshrl.u32 1326507024, %v573
        %v589 = vor.u32 %v587, %v588
        %vm590 = vcmp.lt.s32.totalorder %v571, 1
        %vm591 = vcmp.lt.s32.totalorder %v571, 2
        %vm592 = vcmp.lt.s32.totalorder %v571, 3
        %vm593 = vcmp.lt.s32.totalorder %v571, 4
        %v594 = vsel %vm590, %v574, %v577
        %v595 = vsel %vm593, %v583, 2102212464
        %v596 = vsel %vm592, %v580, %v595
        %v597 = vsel %vm591, %v594, %v596
        %v598 = vsel %vm590, %v577, %v580
        %v599 = vsel %vm593, %v586, 920167782
        %v600 = vsel %vm592, %v583, %v599
        %v601 = vsel %vm591, %v598, %v600
        %v602 = vsel %vm590, %v580, %v583
        %v603 = vsel %vm593, %v589, 1326507024
        %v604 = vsel %vm592, %v586, %v603
        %v605 = vsel %vm591, %v602, %v604
        %v606 = vshll.u32 %v566, 8
        %v607 = vmul.u32.u64.compose %v606, %v605
        %v608 = vextract.low.u32 %v607
        %v609 = vextract.high.u32 %v607
        %v610 = vmul.u32.u64.compose %v606, %v601
        %v611 = vextract.low.u32 %v610
        %v612 = vextract.high.u32 %v610
        %v613 = vmul.u32 %v606, %v597
        %v614 = vadd.s32 %v609, %v611
        %vm615 = vc.u32 %v609, %v611
        %v616 = vadd.s32 %v612, 1
        %v617 = vsel %vm615, %v616, %v612
        %v618 = vadd.s32 %v613, %v617
        %v619 = vadd.s32 %v618, 536870912
        %v620 = vshrl.u32 %v619, 30
        %v621 = vshll.u32 %v620, 30
        %v622 = vsub.s32 %v618, %v621
        %vm623 = vcmp.lt.s32.totalorder %v622, 0
        %v624 = vsub.s32 0, %v622
        %v625 = vsel %vm623, %v624, %v622
        %v626 = vclz %v625
        %v627 = vsub.s32 %v626, 2
        %vm628 = vcmp.gt.s32.totalorder 0, %v627
        %v629 = vsel %vm628, 0, %v627
        %v630 = vsub.s32 32, %v629
        %v631 = vshll.u32 %v622, %v629
        %v632 = vshrl.u32 %v614, %v630
        %v633 = vor.u32 %v631, %v632
        %v634 = vsub.s32 4294967266, %v629
        %v635 = vadd.s32 %v634, 127
        %v636 = vshll.u32 %v635, 23
        %v637 = vor.u32 4788187, %v636
        %v638 = vand.u32 2147483647, %v637
        %v640 = vcvt.s32.f32 %v633
        %v641 = vmul.f32 %v640, %v638
        %v642 = vxor.u32 %v641, 2147483648
        %v643 = vsel %vm560, %v642, %v641
        %v644 = vsub.s32 4, %v620
        %v645 = vsel %vm560, %v644, %v620
        %v646 = vsel %vm559, %v307, %v643
        %v647 = vsel %vm559, 0, %v645
        %v648 = vcosq.f32.pop %v646
        %v649 = vsinq.f32.pop %v646
        %vm650 = vweird.f32 %v307
        %v651 = vand.u32 %v647, 3
        %vm652 = vcmp.lt.s32.totalorder %v651, 2
        %vm653 = vcmp.eq.s32.totalorder %v651, 0
        %v654 = vxor.u32 %v649, 2147483648
        %v655 = vsel %vm653, %v648, %v654
        %vm656 = vcmp.eq.s32.totalorder %v651, 2
        %v657 = vxor.u32 %v648, 2147483648
        %v658 = vsel %vm656, %v657, %v649
        %v659 = vsel %vm652, %v655, %v658
        %v660 = vsel %vm650, nan, %v659
        %v661 = vand.u32 2147483647, %v310
        %vm662 = vcmp.le.f32.partialorder %v661, 0.7853982
        %vm663 = vcmp.lt.s32.totalorder %v310, 0
        %v664 = vand.u32 %v310, 2139095040
        %v665 = vshrl.u32 %v664, 23
        %v666 = vsub.s32 %v665, 127
        %v667 = vand.u32 2147483647, %v310
        %v668 = vand.u32 %v667, 8388607
        %v669 = vor.u32 %v668, 8388608
        %v670 = vsub.s32 0, %v669
        %v671 = vadd.s32 %v666, 1
        %vm672 = vcmp.gt.s32.totalorder %v671, 0
        %v673 = vsel %vm672, %v671, 0
        %v674 = vshrl.u32 %v673, 5
        %v675 = vand.u32 %v673, 31
        %v676 = vsub.s32 32, %v675
        %v677 = vshrl.u32 683565275, %v676
        %v678 = vshll.u32 683565275, %v675
        %v679 = vshrl.u32 2475754826, %v676
        %v680 = vor.u32 %v678, %v679
        %v681 = vshll.u32 2475754826, %v675
        %v682 = vshrl.u32 2131351028, %v676
        %v683 = vor.u32 %v681, %v682
        %v684 = vshll.u32 2131351028, %v675
        %v685 = vshrl.u32 2102212464, %v676
        %v686 = vor.u32 %v684, %v685
        %v687 = vshll.u32 2102212464, %v675
        %v688 = vshrl.u32 920167782, %v676
        %v689 = vor.u32 %v687, %v688
        %v690 = vshll.u32 920167782, %v675
        %v691 = vshrl.u32 1326507024, %v676
        %v692 = vor.u32 %v690, %v691
        %vm693 = vcmp.lt.s32.totalorder %v674, 1
        %vm694 = vcmp.lt.s32.totalorder %v674, 2
        %vm695 = vcmp.lt.s32.totalorder %v674, 3
        %vm696 = vcmp.lt.s32.totalorder %v674, 4
        %v697 = vsel %vm693, %v677, %v680
        %v698 = vsel %vm696, %v686, 2102212464
        %v699 = vsel %vm695, %v683, %v698
        %v700 = vsel %vm694, %v697, %v699
        %v701 = vsel %vm693, %v680, %v683
        %v702 = vsel %vm696, %v689, 920167782
        %v703 = vsel %vm695, %v686, %v702
        %v704 = vsel %vm694, %v701, %v703
        %v705 = vsel %vm693, %v683, %v686
        %v706 = vsel %vm696, %v692, 1326507024
        %v707 = vsel %vm695, %v689, %v706
        %v708 = vsel %vm694, %v705, %v707
        %v709 = vshll.u32 %v669, 8
        %v710 = vmul.u32.u64.compose %v709, %v708
        %v711 = vextract.low.u32 %v710
        %v712 = vextract.high.u32 %v710
        %v713 = vmul.u32.u64.compose %v709, %v704
        %v714 = vextract.low.u32 %v713
        %v715 = vextract.high.u32 %v713
        %v716 = vmul.u32 %v709, %v700
        %v717 = vadd.s32 %v712, %v714
        %vm718 = vc.u32 %v712, %v714
        %v719 = vadd.s32 %v715, 1
        %v720 = vsel %vm718, %v719, %v715
        %v721 = vadd.s32 %v716, %v720
        %v722 = vadd.s32 %v721, 536870912
        %v723 = vshrl.u32 %v722, 30
        %v724 = vshll.u32 %v723, 30
        %v725 = vsub.s32 %v721, %v724
        %vm726 = vcmp.lt.s32.totalorder %v725, 0
        %v727 = vsub.s32 0, %v725
        %v728 = vsel %vm726, %v727, %v725
        %v729 = vclz %v728
        %v730 = vsub.s32 %v729, 2
        %vm731 = vcmp.gt.s32.totalorder 0, %v730
        %v732 = vsel %vm731, 0, %v730
        %v733 = vsub.s32 32, %v732
        %v734 = vshll.u32 %v725, %v732
        %v735 = vshrl.u32 %v717, %v733
        %v736 = vor.u32 %v734, %v735
        %v737 = vsub.s32 4294967266, %v732
        %v738 = vadd.s32 %v737, 127
        %v739 = vshll.u32 %v738, 23
        %v740 = vor.u32 4788187, %v739
        %v741 = vand.u32 2147483647, %v740
        %v743 = vcvt.s32.f32 %v736
        %v744 = vmul.f32 %v743, %v741
        %v745 = vxor.u32 %v744, 2147483648
        %v746 = vsel %vm663, %v745, %v744
        %v747 = vsub.s32 4, %v723
        %v748 = vsel %vm663, %v747, %v723
        %v749 = vsel %vm662, %v310, %v746
        %v750 = vsel %vm662, 0, %v748
        %v751 = vcosq.f32.pop %v749
        %v752 = vsinq.f32.pop %v749
        %vm753 = vweird.f32 %v310
        %v754 = vand.u32 %v750, 3
        %vm755 = vcmp.lt.s32.totalorder %v754, 2
        %vm756 = vcmp.eq.s32.totalorder %v754, 0
        %v757 = vxor.u32 %v752, 2147483648
        %v758 = vsel %vm756, %v751, %v757
        %vm759 = vcmp.eq.s32.totalorder %v754, 2
        %v760 = vxor.u32 %v751, 2147483648
        %v761 = vsel %vm759, %v760, %v752
        %v762 = vsel %vm755, %v758, %v761
        %v763 = vsel %vm753, nan, %v762
        %v764 = vand.u32 2147483647, %v315
        %vm765 = vcmp.le.f32.partialorder %v764, 0.7853982
        %vm766 = vcmp.lt.s32.totalorder %v315, 0
        %v767 = vand.u32 %v315, 2139095040
        %v768 = vshrl.u32 %v767, 23
        %v769 = vsub.s32 %v768, 127
        %v770 = vand.u32 2147483647, %v315
        %v771 = vand.u32 %v770, 8388607
        %v772 = vor.u32 %v771, 8388608
        %v773 = vsub.s32 0, %v772
        %v774 = vadd.s32 %v769, 1
        %vm775 = vcmp.gt.s32.totalorder %v774, 0
        %v776 = vsel %vm775, %v774, 0
        %v777 = vshrl.u32 %v776, 5
        %v778 = vand.u32 %v776, 31
        %v779 = vsub.s32 32, %v778
        %v780 = vshrl.u32 683565275, %v779
        %v781 = vshll.u32 683565275, %v778
        %v782 = vshrl.u32 2475754826, %v779
        %v783 = vor.u32 %v781, %v782
        %v784 = vshll.u32 2475754826, %v778
        %v785 = vshrl.u32 2131351028, %v779
        %v786 = vor.u32 %v784, %v785
        %v787 = vshll.u32 2131351028, %v778
        %v788 = vshrl.u32 2102212464, %v779
        %v789 = vor.u32 %v787, %v788
        %v790 = vshll.u32 2102212464, %v778
        %v791 = vshrl.u32 920167782, %v779
        %v792 = vor.u32 %v790, %v791
        %v793 = vshll.u32 920167782, %v778
        %v794 = vshrl.u32 1326507024, %v779
        %v795 = vor.u32 %v793, %v794
        %vm796 = vcmp.lt.s32.totalorder %v777, 1
        %vm797 = vcmp.lt.s32.totalorder %v777, 2
        %vm798 = vcmp.lt.s32.totalorder %v777, 3
        %vm799 = vcmp.lt.s32.totalorder %v777, 4
        %v800 = vsel %vm796, %v780, %v783
        %v801 = vsel %vm799, %v789, 2102212464
        %v802 = vsel %vm798, %v786, %v801
        %v803 = vsel %vm797, %v800, %v802
        %v804 = vsel %vm796, %v783, %v786
        %v805 = vsel %vm799, %v792, 920167782
        %v806 = vsel %vm798, %v789, %v805
        %v807 = vsel %vm797, %v804, %v806
        %v808 = vsel %vm796, %v786, %v789
        %v809 = vsel %vm799, %v795, 1326507024
        %v810 = vsel %vm798, %v792, %v809
        %v811 = vsel %vm797, %v808, %v810
        %v812 = vshll.u32 %v772, 8
        %v813 = vmul.u32.u64.compose %v812, %v811
        %v814 = vextract.low.u32 %v813
        %v815 = vextract.high.u32 %v813
        %v816 = vmul.u32.u64.compose %v812, %v807
        %v817 = vextract.low.u32 %v816
        %v818 = vextract.high.u32 %v816
        %v819 = vmul.u32 %v812, %v803
        %v820 = vadd.s32 %v815, %v817
        %vm821 = vc.u32 %v815, %v817
        %v822 = vadd.s32 %v818, 1
        %v823 = vsel %vm821, %v822, %v818
        %v824 = vadd.s32 %v819, %v823
        %v825 = vadd.s32 %v824, 536870912
        %v826 = vshrl.u32 %v825, 30
        %v827 = vshll.u32 %v826, 30
        %v828 = vsub.s32 %v824, %v827
        %vm829 = vcmp.lt.s32.totalorder %v828, 0
        %v830 = vsub.s32 0, %v828
        %v831 = vsel %vm829, %v830, %v828
        %v832 = vclz %v831
        %v833 = vsub.s32 %v832, 2
        %vm834 = vcmp.gt.s32.totalorder 0, %v833
        %v835 = vsel %vm834, 0, %v833
        %v836 = vsub.s32 32, %v835
        %v837 = vshll.u32 %v828, %v835
        %v838 = vshrl.u32 %v820, %v836
        %v839 = vor.u32 %v837, %v838
        %v840 = vsub.s32 4294967266, %v835
        %v841 = vadd.s32 %v840, 127
        %v842 = vshll.u32 %v841, 23
        %v843 = vor.u32 4788187, %v842
        %v844 = vand.u32 2147483647, %v843
        %v846 = vcvt.s32.f32 %v839
        %v847 = vmul.f32 %v846, %v844
        %v848 = vxor.u32 %v847, 2147483648
        %v849 = vsel %vm766, %v848, %v847
        %v850 = vsub.s32 4, %v826
        %v851 = vsel %vm766, %v850, %v826
        %v852 = vsel %vm765, %v315, %v849
        %v853 = vsel %vm765, 0, %v851
        %v854 = vcosq.f32.pop %v852
        %v855 = vsinq.f32.pop %v852
        %vm856 = vweird.f32 %v315
        %v857 = vand.u32 %v853, 3
        %vm858 = vcmp.lt.s32.totalorder %v857, 2
        %vm859 = vcmp.eq.s32.totalorder %v857, 0
        %v860 = vxor.u32 %v855, 2147483648
        %v861 = vsel %vm859, %v854, %v860
        %vm862 = vcmp.eq.s32.totalorder %v857, 2
        %v863 = vxor.u32 %v854, 2147483648
        %v864 = vsel %vm862, %v863, %v855
        %v865 = vsel %vm858, %v861, %v864
        %v866 = vsel %vm856, nan, %v865
        %v867 = vand.u32 2147483647, %v318
        %vm868 = vcmp.le.f32.partialorder %v867, 0.7853982
        %vm869 = vcmp.lt.s32.totalorder %v318, 0
        %v870 = vand.u32 %v318, 2139095040
        %v871 = vshrl.u32 %v870, 23
        %v872 = vsub.s32 %v871, 127
        %v873 = vand.u32 2147483647, %v318
        %v874 = vand.u32 %v873, 8388607
        %v875 = vor.u32 %v874, 8388608
        %v876 = vsub.s32 0, %v875
        %v877 = vadd.s32 %v872, 1
        %vm878 = vcmp.gt.s32.totalorder %v877, 0
        %v879 = vsel %vm878, %v877, 0
        %v880 = vshrl.u32 %v879, 5
        %v881 = vand.u32 %v879, 31
        %v882 = vsub.s32 32, %v881
        %v883 = vshrl.u32 683565275, %v882
        %v884 = vshll.u32 683565275, %v881
        %v885 = vshrl.u32 2475754826, %v882
        %v886 = vor.u32 %v884, %v885
        %v887 = vshll.u32 2475754826, %v881
        %v888 = vshrl.u32 2131351028, %v882
        %v889 = vor.u32 %v887, %v888
        %v890 = vshll.u32 2131351028, %v881
        %v891 = vshrl.u32 2102212464, %v882
        %v892 = vor.u32 %v890, %v891
        %v893 = vshll.u32 2102212464, %v881
        %v894 = vshrl.u32 920167782, %v882
        %v895 = vor.u32 %v893, %v894
        %v896 = vshll.u32 920167782, %v881
        %v897 = vshrl.u32 1326507024, %v882
        %v898 = vor.u32 %v896, %v897
        %vm899 = vcmp.lt.s32.totalorder %v880, 1
        %vm900 = vcmp.lt.s32.totalorder %v880, 2
        %vm901 = vcmp.lt.s32.totalorder %v880, 3
        %vm902 = vcmp.lt.s32.totalorder %v880, 4
        %v903 = vsel %vm899, %v883, %v886
        %v904 = vsel %vm902, %v892, 2102212464
        %v905 = vsel %vm901, %v889, %v904
        %v906 = vsel %vm900, %v903, %v905
        %v907 = vsel %vm899, %v886, %v889
        %v908 = vsel %vm902, %v895, 920167782
        %v909 = vsel %vm901, %v892, %v908
        %v910 = vsel %vm900, %v907, %v909
        %v911 = vsel %vm899, %v889, %v892
        %v912 = vsel %vm902, %v898, 1326507024
        %v913 = vsel %vm901, %v895, %v912
        %v914 = vsel %vm900, %v911, %v913
        %v915 = vshll.u32 %v875, 8
        %v916 = vmul.u32.u64.compose %v915, %v914
        %v917 = vextract.low.u32 %v916
        %v918 = vextract.high.u32 %v916
        %v919 = vmul.u32.u64.compose %v915, %v910
        %v920 = vextract.low.u32 %v919
        %v921 = vextract.high.u32 %v919
        %v922 = vmul.u32 %v915, %v906
        %v923 = vadd.s32 %v918, %v920
        %vm924 = vc.u32 %v918, %v920
        %v925 = vadd.s32 %v921, 1
        %v926 = vsel %vm924, %v925, %v921
        %v927 = vadd.s32 %v922, %v926
        %v928 = vadd.s32 %v927, 536870912
        %v929 = vshrl.u32 %v928, 30
        %v930 = vshll.u32 %v929, 30
        %v931 = vsub.s32 %v927, %v930
        %vm932 = vcmp.lt.s32.totalorder %v931, 0
        %v933 = vsub.s32 0, %v931
        %v934 = vsel %vm932, %v933, %v931
        %v935 = vclz %v934
        %v936 = vsub.s32 %v935, 2
        %vm937 = vcmp.gt.s32.totalorder 0, %v936
        %v938 = vsel %vm937, 0, %v936
        %v939 = vsub.s32 32, %v938
        %v940 = vshll.u32 %v931, %v938
        %v941 = vshrl.u32 %v923, %v939
        %v942 = vor.u32 %v940, %v941
        %v943 = vsub.s32 4294967266, %v938
        %v944 = vadd.s32 %v943, 127
        %v945 = vshll.u32 %v944, 23
        %v946 = vor.u32 4788187, %v945
        %v947 = vand.u32 2147483647, %v946
        %v949 = vcvt.s32.f32 %v942
        %v950 = vmul.f32 %v949, %v947
        %v951 = vxor.u32 %v950, 2147483648
        %v952 = vsel %vm869, %v951, %v950
        %v953 = vsub.s32 4, %v929
        %v954 = vsel %vm869, %v953, %v929
        %v955 = vsel %vm868, %v318, %v952
        %v956 = vsel %vm868, 0, %v954
        %v957 = vcosq.f32.pop %v955
        %v958 = vsinq.f32.pop %v955
        %vm959 = vweird.f32 %v318
        %v960 = vand.u32 %v956, 3
        %vm961 = vcmp.lt.s32.totalorder %v960, 2
        %vm962 = vcmp.eq.s32.totalorder %v960, 0
        %v963 = vxor.u32 %v958, 2147483648
        %v964 = vsel %vm962, %v957, %v963
        %vm965 = vcmp.eq.s32.totalorder %v960, 2
        %v966 = vxor.u32 %v957, 2147483648
        %v967 = vsel %vm965, %v966, %v958
        %v968 = vsel %vm961, %v964, %v967
        %v969 = vsel %vm959, nan, %v968
        %v970 = vand.u32 2147483647, %v323
        %vm971 = vcmp.le.f32.partialorder %v970, 0.7853982
        %vm972 = vcmp.lt.s32.totalorder %v323, 0
        %v973 = vand.u32 %v323, 2139095040
        %v974 = vshrl.u32 %v973, 23
        %v975 = vsub.s32 %v974, 127
        %v976 = vand.u32 2147483647, %v323
        %v977 = vand.u32 %v976, 8388607
        %v978 = vor.u32 %v977, 8388608
        %v979 = vsub.s32 0, %v978
        %v980 = vadd.s32 %v975, 1
        %vm981 = vcmp.gt.s32.totalorder %v980, 0
        %v982 = vsel %vm981, %v980, 0
        %v983 = vshrl.u32 %v982, 5
        %v984 = vand.u32 %v982, 31
        %v985 = vsub.s32 32, %v984
        %v986 = vshrl.u32 683565275, %v985
        %v987 = vshll.u32 683565275, %v984
        %v988 = vshrl.u32 2475754826, %v985
        %v989 = vor.u32 %v987, %v988
        %v990 = vshll.u32 2475754826, %v984
        %v991 = vshrl.u32 2131351028, %v985
        %v992 = vor.u32 %v990, %v991
        %v993 = vshll.u32 2131351028, %v984
        %v994 = vshrl.u32 2102212464, %v985
        %v995 = vor.u32 %v993, %v994
        %v996 = vshll.u32 2102212464, %v984
        %v997 = vshrl.u32 920167782, %v985
        %v998 = vor.u32 %v996, %v997
        %v999 = vshll.u32 920167782, %v984
        %v1000 = vshrl.u32 1326507024, %v985
        %v1001 = vor.u32 %v999, %v1000
        %vm1002 = vcmp.lt.s32.totalorder %v983, 1
        %vm1003 = vcmp.lt.s32.totalorder %v983, 2
        %vm1004 = vcmp.lt.s32.totalorder %v983, 3
        %vm1005 = vcmp.lt.s32.totalorder %v983, 4
        %v1006 = vsel %vm1002, %v986, %v989
        %v1007 = vsel %vm1005, %v995, 2102212464
        %v1008 = vsel %vm1004, %v992, %v1007
        %v1009 = vsel %vm1003, %v1006, %v1008
        %v1010 = vsel %vm1002, %v989, %v992
        %v1011 = vsel %vm1005, %v998, 920167782
        %v1012 = vsel %vm1004, %v995, %v1011
        %v1013 = vsel %vm1003, %v1010, %v1012
        %v1014 = vsel %vm1002, %v992, %v995
        %v1015 = vsel %vm1005, %v1001, 1326507024
        %v1016 = vsel %vm1004, %v998, %v1015
        %v1017 = vsel %vm1003, %v1014, %v1016
        %v1018 = vshll.u32 %v978, 8
        %v1019 = vmul.u32.u64.compose %v1018, %v1017
        %v1020 = vextract.low.u32 %v1019
        %v1021 = vextract.high.u32 %v1019
        %v1022 = vmul.u32.u64.compose %v1018, %v1013
        %v1023 = vextract.low.u32 %v1022
        %v1024 = vextract.high.u32 %v1022
        %v1025 = vmul.u32 %v1018, %v1009
        %v1026 = vadd.s32 %v1021, %v1023
        %vm1027 = vc.u32 %v1021, %v1023
        %v1028 = vadd.s32 %v1024, 1
        %v1029 = vsel %vm1027, %v1028, %v1024
        %v1030 = vadd.s32 %v1025, %v1029
        %v1031 = vadd.s32 %v1030, 536870912
        %v1032 = vshrl.u32 %v1031, 30
        %v1033 = vshll.u32 %v1032, 30
        %v1034 = vsub.s32 %v1030, %v1033
        %vm1035 = vcmp.lt.s32.totalorder %v1034, 0
        %v1036 = vsub.s32 0, %v1034
        %v1037 = vsel %vm1035, %v1036, %v1034
        %v1038 = vclz %v1037
        %v1039 = vsub.s32 %v1038, 2
        %vm1040 = vcmp.gt.s32.totalorder 0, %v1039
        %v1041 = vsel %vm1040, 0, %v1039
        %v1042 = vsub.s32 32, %v1041
        %v1043 = vshll.u32 %v1034, %v1041
        %v1044 = vshrl.u32 %v1026, %v1042
        %v1045 = vor.u32 %v1043, %v1044
        %v1046 = vsub.s32 4294967266, %v1041
        %v1047 = vadd.s32 %v1046, 127
        %v1048 = vshll.u32 %v1047, 23
        %v1049 = vor.u32 4788187, %v1048
        %v1050 = vand.u32 2147483647, %v1049
        %v1052 = vcvt.s32.f32 %v1045
        %v1053 = vmul.f32 %v1052, %v1050
        %v1054 = vxor.u32 %v1053, 2147483648
        %v1055 = vsel %vm972, %v1054, %v1053
        %v1056 = vsub.s32 4, %v1032
        %v1057 = vsel %vm972, %v1056, %v1032
        %v1058 = vsel %vm971, %v323, %v1055
        %v1059 = vsel %vm971, 0, %v1057
        %v1060 = vcosq.f32.pop %v1058
        %v1061 = vsinq.f32.pop %v1058
        %vm1062 = vweird.f32 %v323
        %v1063 = vand.u32 %v1059, 3
        %vm1064 = vcmp.lt.s32.totalorder %v1063, 2
        %vm1065 = vcmp.eq.s32.totalorder %v1063, 0
        %v1066 = vxor.u32 %v1061, 2147483648
        %v1067 = vsel %vm1065, %v1060, %v1066
        %vm1068 = vcmp.eq.s32.totalorder %v1063, 2
        %v1069 = vxor.u32 %v1060, 2147483648
        %v1070 = vsel %vm1068, %v1069, %v1061
        %v1071 = vsel %vm1064, %v1067, %v1070
        %v1072 = vsel %vm1062, nan, %v1071
        %v1073 = vand.u32 2147483647, %v326
        %vm1074 = vcmp.le.f32.partialorder %v1073, 0.7853982
        %vm1075 = vcmp.lt.s32.totalorder %v326, 0
        %v1076 = vand.u32 %v326, 2139095040
        %v1077 = vshrl.u32 %v1076, 23
        %v1078 = vsub.s32 %v1077, 127
        %v1079 = vand.u32 2147483647, %v326
        %v1080 = vand.u32 %v1079, 8388607
        %v1081 = vor.u32 %v1080, 8388608
        %v1082 = vsub.s32 0, %v1081
        %v1083 = vadd.s32 %v1078, 1
        %vm1084 = vcmp.gt.s32.totalorder %v1083, 0
        %v1085 = vsel %vm1084, %v1083, 0
        %v1086 = vshrl.u32 %v1085, 5
        %v1087 = vand.u32 %v1085, 31
        %v1088 = vsub.s32 32, %v1087
        %v1089 = vshrl.u32 683565275, %v1088
        %v1090 = vshll.u32 683565275, %v1087
        %v1091 = vshrl.u32 2475754826, %v1088
        %v1092 = vor.u32 %v1090, %v1091
        %v1093 = vshll.u32 2475754826, %v1087
        %v1094 = vshrl.u32 2131351028, %v1088
        %v1095 = vor.u32 %v1093, %v1094
        %v1096 = vshll.u32 2131351028, %v1087
        %v1097 = vshrl.u32 2102212464, %v1088
        %v1098 = vor.u32 %v1096, %v1097
        %v1099 = vshll.u32 2102212464, %v1087
        %v1100 = vshrl.u32 920167782, %v1088
        %v1101 = vor.u32 %v1099, %v1100
        %v1102 = vshll.u32 920167782, %v1087
        %v1103 = vshrl.u32 1326507024, %v1088
        %v1104 = vor.u32 %v1102, %v1103
        %vm1105 = vcmp.lt.s32.totalorder %v1086, 1
        %vm1106 = vcmp.lt.s32.totalorder %v1086, 2
        %vm1107 = vcmp.lt.s32.totalorder %v1086, 3
        %vm1108 = vcmp.lt.s32.totalorder %v1086, 4
        %v1109 = vsel %vm1105, %v1089, %v1092
        %v1110 = vsel %vm1108, %v1098, 2102212464
        %v1111 = vsel %vm1107, %v1095, %v1110
        %v1112 = vsel %vm1106, %v1109, %v1111
        %v1113 = vsel %vm1105, %v1092, %v1095
        %v1114 = vsel %vm1108, %v1101, 920167782
        %v1115 = vsel %vm1107, %v1098, %v1114
        %v1116 = vsel %vm1106, %v1113, %v1115
        %v1117 = vsel %vm1105, %v1095, %v1098
        %v1118 = vsel %vm1108, %v1104, 1326507024
        %v1119 = vsel %vm1107, %v1101, %v1118
        %v1120 = vsel %vm1106, %v1117, %v1119
        %v1121 = vshll.u32 %v1081, 8
        %v1122 = vmul.u32.u64.compose %v1121, %v1120
        %v1123 = vextract.low.u32 %v1122
        %v1124 = vextract.high.u32 %v1122
        %v1125 = vmul.u32.u64.compose %v1121, %v1116
        %v1126 = vextract.low.u32 %v1125
        %v1127 = vextract.high.u32 %v1125
        %v1128 = vmul.u32 %v1121, %v1112
        %v1129 = vadd.s32 %v1124, %v1126
        %vm1130 = vc.u32 %v1124, %v1126
        %v1131 = vadd.s32 %v1127, 1
        %v1132 = vsel %vm1130, %v1131, %v1127
        %v1133 = vadd.s32 %v1128, %v1132
        %v1134 = vadd.s32 %v1133, 536870912
        %v1135 = vshrl.u32 %v1134, 30
        %v1136 = vshll.u32 %v1135, 30
        %v1137 = vsub.s32 %v1133, %v1136
        %vm1138 = vcmp.lt.s32.totalorder %v1137, 0
        %v1139 = vsub.s32 0, %v1137
        %v1140 = vsel %vm1138, %v1139, %v1137
        %v1141 = vclz %v1140
        %v1142 = vsub.s32 %v1141, 2
        %vm1143 = vcmp.gt.s32.totalorder 0, %v1142
        %v1144 = vsel %vm1143, 0, %v1142
        %v1145 = vsub.s32 32, %v1144
        %v1146 = vshll.u32 %v1137, %v1144
        %v1147 = vshrl.u32 %v1129, %v1145
        %v1148 = vor.u32 %v1146, %v1147
        %v1149 = vsub.s32 4294967266, %v1144
        %v1150 = vadd.s32 %v1149, 127
        %v1151 = vshll.u32 %v1150, 23
        %v1152 = vor.u32 4788187, %v1151
        %v1153 = vand.u32 2147483647, %v1152
        %v1155 = vcvt.s32.f32 %v1148
        %v1156 = vmul.f32 %v1155, %v1153
        %v1157 = vxor.u32 %v1156, 2147483648
        %v1158 = vsel %vm1075, %v1157, %v1156
        %v1159 = vsub.s32 4, %v1135
        %v1160 = vsel %vm1075, %v1159, %v1135
        %v1161 = vsel %vm1074, %v326, %v1158
        %v1162 = vsel %vm1074, 0, %v1160
        %v1163 = vcosq.f32.pop %v1161
        %v1164 = vsinq.f32.pop %v1161
        %vm1165 = vweird.f32 %v326
        %v1166 = vand.u32 %v1162, 3
        %vm1167 = vcmp.lt.s32.totalorder %v1166, 2
        %vm1168 = vcmp.eq.s32.totalorder %v1166, 0
        %v1169 = vxor.u32 %v1164, 2147483648
        %v1170 = vsel %vm1168, %v1163, %v1169
        %vm1171 = vcmp.eq.s32.totalorder %v1166, 2
        %v1172 = vxor.u32 %v1163, 2147483648
        %v1173 = vsel %vm1171, %v1172, %v1164
        %v1174 = vsel %vm1167, %v1170, %v1173
        %v1175 = vsel %vm1165, nan, %v1174
        %v1176 = vand.u32 2147483647, %v331
        %vm1177 = vcmp.le.f32.partialorder %v1176, 0.7853982
        %vm1178 = vcmp.lt.s32.totalorder %v331, 0
        %v1179 = vand.u32 %v331, 2139095040
        %v1180 = vshrl.u32 %v1179, 23
        %v1181 = vsub.s32 %v1180, 127
        %v1182 = vand.u32 2147483647, %v331
        %v1183 = vand.u32 %v1182, 8388607
        %v1184 = vor.u32 %v1183, 8388608
        %v1185 = vsub.s32 0, %v1184
        %v1186 = vadd.s32 %v1181, 1
        %vm1187 = vcmp.gt.s32.totalorder %v1186, 0
        %v1188 = vsel %vm1187, %v1186, 0
        %v1189 = vshrl.u32 %v1188, 5
        %v1190 = vand.u32 %v1188, 31
        %v1191 = vsub.s32 32, %v1190
        %v1192 = vshrl.u32 683565275, %v1191
        %v1193 = vshll.u32 683565275, %v1190
        %v1194 = vshrl.u32 2475754826, %v1191
        %v1195 = vor.u32 %v1193, %v1194
        %v1196 = vshll.u32 2475754826, %v1190
        %v1197 = vshrl.u32 2131351028, %v1191
        %v1198 = vor.u32 %v1196, %v1197
        %v1199 = vshll.u32 2131351028, %v1190
        %v1200 = vshrl.u32 2102212464, %v1191
        %v1201 = vor.u32 %v1199, %v1200
        %v1202 = vshll.u32 2102212464, %v1190
        %v1203 = vshrl.u32 920167782, %v1191
        %v1204 = vor.u32 %v1202, %v1203
        %v1205 = vshll.u32 920167782, %v1190
        %v1206 = vshrl.u32 1326507024, %v1191
        %v1207 = vor.u32 %v1205, %v1206
        %vm1208 = vcmp.lt.s32.totalorder %v1189, 1
        %vm1209 = vcmp.lt.s32.totalorder %v1189, 2
        %vm1210 = vcmp.lt.s32.totalorder %v1189, 3
        %vm1211 = vcmp.lt.s32.totalorder %v1189, 4
        %v1212 = vsel %vm1208, %v1192, %v1195
        %v1213 = vsel %vm1211, %v1201, 2102212464
        %v1214 = vsel %vm1210, %v1198, %v1213
        %v1215 = vsel %vm1209, %v1212, %v1214
        %v1216 = vsel %vm1208, %v1195, %v1198
        %v1217 = vsel %vm1211, %v1204, 920167782
        %v1218 = vsel %vm1210, %v1201, %v1217
        %v1219 = vsel %vm1209, %v1216, %v1218
        %v1220 = vsel %vm1208, %v1198, %v1201
        %v1221 = vsel %vm1211, %v1207, 1326507024
        %v1222 = vsel %vm1210, %v1204, %v1221
        %v1223 = vsel %vm1209, %v1220, %v1222
        %v1224 = vshll.u32 %v1184, 8
        %v1225 = vmul.u32.u64.compose %v1224, %v1223
        %v1226 = vextract.low.u32 %v1225
        %v1227 = vextract.high.u32 %v1225
        %v1228 = vmul.u32.u64.compose %v1224, %v1219
        %v1229 = vextract.low.u32 %v1228
        %v1230 = vextract.high.u32 %v1228
        %v1231 = vmul.u32 %v1224, %v1215
        %v1232 = vadd.s32 %v1227, %v1229
        %vm1233 = vc.u32 %v1227, %v1229
        %v1234 = vadd.s32 %v1230, 1
        %v1235 = vsel %vm1233, %v1234, %v1230
        %v1236 = vadd.s32 %v1231, %v1235
        %v1237 = vadd.s32 %v1236, 536870912
        %v1238 = vshrl.u32 %v1237, 30
        %v1239 = vshll.u32 %v1238, 30
        %v1240 = vsub.s32 %v1236, %v1239
        %vm1241 = vcmp.lt.s32.totalorder %v1240, 0
        %v1242 = vsub.s32 0, %v1240
        %v1243 = vsel %vm1241, %v1242, %v1240
        %v1244 = vclz %v1243
        %v1245 = vsub.s32 %v1244, 2
        %vm1246 = vcmp.gt.s32.totalorder 0, %v1245
        %v1247 = vsel %vm1246, 0, %v1245
        %v1248 = vsub.s32 32, %v1247
        %v1249 = vshll.u32 %v1240, %v1247
        %v1250 = vshrl.u32 %v1232, %v1248
        %v1251 = vor.u32 %v1249, %v1250
        %v1252 = vsub.s32 4294967266, %v1247
        %v1253 = vadd.s32 %v1252, 127
        %v1254 = vshll.u32 %v1253, 23
        %v1255 = vor.u32 4788187, %v1254
        %v1256 = vand.u32 2147483647, %v1255
        %v1258 = vcvt.s32.f32 %v1251
        %v1259 = vmul.f32 %v1258, %v1256
        %v1260 = vxor.u32 %v1259, 2147483648
        %v1261 = vsel %vm1178, %v1260, %v1259
        %v1262 = vsub.s32 4, %v1238
        %v1263 = vsel %vm1178, %v1262, %v1238
        %v1264 = vsel %vm1177, %v331, %v1261
        %v1265 = vsel %vm1177, 0, %v1263
        %v1266 = vcosq.f32.pop %v1264
        %v1267 = vsinq.f32.pop %v1264
        %vm1268 = vweird.f32 %v331
        %v1269 = vand.u32 %v1265, 3
        %vm1270 = vcmp.lt.s32.totalorder %v1269, 2
        %vm1271 = vcmp.eq.s32.totalorder %v1269, 0
        %v1272 = vxor.u32 %v1267, 2147483648
        %v1273 = vsel %vm1271, %v1266, %v1272
        %vm1274 = vcmp.eq.s32.totalorder %v1269, 2
        %v1275 = vxor.u32 %v1266, 2147483648
        %v1276 = vsel %vm1274, %v1275, %v1267
        %v1277 = vsel %vm1270, %v1273, %v1276
        %v1278 = vsel %vm1268, nan, %v1277
        %v1279 = vand.u32 2147483647, %v334
        %vm1280 = vcmp.le.f32.partialorder %v1279, 0.7853982
        %vm1281 = vcmp.lt.s32.totalorder %v334, 0
        %v1282 = vand.u32 %v334, 2139095040
        %v1283 = vshrl.u32 %v1282, 23
        %v1284 = vsub.s32 %v1283, 127
        %v1285 = vand.u32 2147483647, %v334
        %v1286 = vand.u32 %v1285, 8388607
        %v1287 = vor.u32 %v1286, 8388608
        %v1288 = vsub.s32 0, %v1287
        %v1289 = vadd.s32 %v1284, 1
        %vm1290 = vcmp.gt.s32.totalorder %v1289, 0
        %v1291 = vsel %vm1290, %v1289, 0
        %v1292 = vshrl.u32 %v1291, 5
        %v1293 = vand.u32 %v1291, 31
        %v1294 = vsub.s32 32, %v1293
        %v1295 = vshrl.u32 683565275, %v1294
        %v1296 = vshll.u32 683565275, %v1293
        %v1297 = vshrl.u32 2475754826, %v1294
        %v1298 = vor.u32 %v1296, %v1297
        %v1299 = vshll.u32 2475754826, %v1293
        %v1300 = vshrl.u32 2131351028, %v1294
        %v1301 = vor.u32 %v1299, %v1300
        %v1302 = vshll.u32 2131351028, %v1293
        %v1303 = vshrl.u32 2102212464, %v1294
        %v1304 = vor.u32 %v1302, %v1303
        %v1305 = vshll.u32 2102212464, %v1293
        %v1306 = vshrl.u32 920167782, %v1294
        %v1307 = vor.u32 %v1305, %v1306
        %v1308 = vshll.u32 920167782, %v1293
        %v1309 = vshrl.u32 1326507024, %v1294
        %v1310 = vor.u32 %v1308, %v1309
        %vm1311 = vcmp.lt.s32.totalorder %v1292, 1
        %vm1312 = vcmp.lt.s32.totalorder %v1292, 2
        %vm1313 = vcmp.lt.s32.totalorder %v1292, 3
        %vm1314 = vcmp.lt.s32.totalorder %v1292, 4
        %v1315 = vsel %vm1311, %v1295, %v1298
        %v1316 = vsel %vm1314, %v1304, 2102212464
        %v1317 = vsel %vm1313, %v1301, %v1316
        %v1318 = vsel %vm1312, %v1315, %v1317
        %v1319 = vsel %vm1311, %v1298, %v1301
        %v1320 = vsel %vm1314, %v1307, 920167782
        %v1321 = vsel %vm1313, %v1304, %v1320
        %v1322 = vsel %vm1312, %v1319, %v1321
        %v1323 = vsel %vm1311, %v1301, %v1304
        %v1324 = vsel %vm1314, %v1310, 1326507024
        %v1325 = vsel %vm1313, %v1307, %v1324
        %v1326 = vsel %vm1312, %v1323, %v1325
        %v1327 = vshll.u32 %v1287, 8
        %v1328 = vmul.u32.u64.compose %v1327, %v1326
        %v1329 = vextract.low.u32 %v1328
        %v1330 = vextract.high.u32 %v1328
        %v1331 = vmul.u32.u64.compose %v1327, %v1322
        %v1332 = vextract.low.u32 %v1331
        %v1333 = vextract.high.u32 %v1331
        %v1334 = vmul.u32 %v1327, %v1318
        %v1335 = vadd.s32 %v1330, %v1332
        %vm1336 = vc.u32 %v1330, %v1332
        %v1337 = vadd.s32 %v1333, 1
        %v1338 = vsel %vm1336, %v1337, %v1333
        %v1339 = vadd.s32 %v1334, %v1338
        %v1340 = vadd.s32 %v1339, 536870912
        %v1341 = vshrl.u32 %v1340, 30
        %v1342 = vshll.u32 %v1341, 30
        %v1343 = vsub.s32 %v1339, %v1342
        %vm1344 = vcmp.lt.s32.totalorder %v1343, 0
        %v1345 = vsub.s32 0, %v1343
        %v1346 = vsel %vm1344, %v1345, %v1343
        %v1347 = vclz %v1346
        %v1348 = vsub.s32 %v1347, 2
        %vm1349 = vcmp.gt.s32.totalorder 0, %v1348
        %v1350 = vsel %vm1349, 0, %v1348
        %v1351 = vsub.s32 32, %v1350
        %v1352 = vshll.u32 %v1343, %v1350
        %v1353 = vshrl.u32 %v1335, %v1351
        %v1354 = vor.u32 %v1352, %v1353
        %v1355 = vsub.s32 4294967266, %v1350
        %v1356 = vadd.s32 %v1355, 127
        %v1357 = vshll.u32 %v1356, 23
        %v1358 = vor.u32 4788187, %v1357
        %v1359 = vand.u32 2147483647, %v1358
        %v1361 = vcvt.s32.f32 %v1354
        %v1362 = vmul.f32 %v1361, %v1359
        %v1363 = vxor.u32 %v1362, 2147483648
        %v1364 = vsel %vm1281, %v1363, %v1362
        %v1365 = vsub.s32 4, %v1341
        %v1366 = vsel %vm1281, %v1365, %v1341
        %v1367 = vsel %vm1280, %v334, %v1364
        %v1368 = vsel %vm1280, 0, %v1366
        %v1369 = vcosq.f32.pop %v1367
        %v1370 = vsinq.f32.pop %v1367
        %vm1371 = vweird.f32 %v334
        %v1372 = vand.u32 %v1368, 3
        %vm1373 = vcmp.lt.s32.totalorder %v1372, 2
        %vm1374 = vcmp.eq.s32.totalorder %v1372, 0
        %v1375 = vxor.u32 %v1370, 2147483648
        %v1376 = vsel %vm1374, %v1369, %v1375
        %vm1377 = vcmp.eq.s32.totalorder %v1372, 2
        %v1378 = vxor.u32 %v1369, 2147483648
        %v1379 = vsel %vm1377, %v1378, %v1370
        %v1380 = vsel %vm1373, %v1376, %v1379
        %v1381 = vsel %vm1371, nan, %v1380
        %v1382 = vand.u32 2147483647, %v339
        %vm1383 = vcmp.le.f32.partialorder %v1382, 0.7853982
        %vm1384 = vcmp.lt.s32.totalorder %v339, 0
        %v1385 = vand.u32 %v339, 2139095040
        %v1386 = vshrl.u32 %v1385, 23
        %v1387 = vsub.s32 %v1386, 127
        %v1388 = vand.u32 2147483647, %v339
        %v1389 = vand.u32 %v1388, 8388607
        %v1390 = vor.u32 %v1389, 8388608
        %v1391 = vsub.s32 0, %v1390
        %v1392 = vadd.s32 %v1387, 1
        %vm1393 = vcmp.gt.s32.totalorder %v1392, 0
        %v1394 = vsel %vm1393, %v1392, 0
        %v1395 = vshrl.u32 %v1394, 5
        %v1396 = vand.u32 %v1394, 31
        %v1397 = vsub.s32 32, %v1396
        %v1398 = vshrl.u32 683565275, %v1397
        %v1399 = vshll.u32 683565275, %v1396
        %v1400 = vshrl.u32 2475754826, %v1397
        %v1401 = vor.u32 %v1399, %v1400
        %v1402 = vshll.u32 2475754826, %v1396
        %v1403 = vshrl.u32 2131351028, %v1397
        %v1404 = vor.u32 %v1402, %v1403
        %v1405 = vshll.u32 2131351028, %v1396
        %v1406 = vshrl.u32 2102212464, %v1397
        %v1407 = vor.u32 %v1405, %v1406
        %v1408 = vshll.u32 2102212464, %v1396
        %v1409 = vshrl.u32 920167782, %v1397
        %v1410 = vor.u32 %v1408, %v1409
        %v1411 = vshll.u32 920167782, %v1396
        %v1412 = vshrl.u32 1326507024, %v1397
        %v1413 = vor.u32 %v1411, %v1412
        %vm1414 = vcmp.lt.s32.totalorder %v1395, 1
        %vm1415 = vcmp.lt.s32.totalorder %v1395, 2
        %vm1416 = vcmp.lt.s32.totalorder %v1395, 3
        %vm1417 = vcmp.lt.s32.totalorder %v1395, 4
        %v1418 = vsel %vm1414, %v1398, %v1401
        %v1419 = vsel %vm1417, %v1407, 2102212464
        %v1420 = vsel %vm1416, %v1404, %v1419
        %v1421 = vsel %vm1415, %v1418, %v1420
        %v1422 = vsel %vm1414, %v1401, %v1404
        %v1423 = vsel %vm1417, %v1410, 920167782
        %v1424 = vsel %vm1416, %v1407, %v1423
        %v1425 = vsel %vm1415, %v1422, %v1424
        %v1426 = vsel %vm1414, %v1404, %v1407
        %v1427 = vsel %vm1417, %v1413, 1326507024
        %v1428 = vsel %vm1416, %v1410, %v1427
        %v1429 = vsel %vm1415, %v1426, %v1428
        %v1430 = vshll.u32 %v1390, 8
        %v1431 = vmul.u32.u64.compose %v1430, %v1429
        %v1432 = vextract.low.u32 %v1431
        %v1433 = vextract.high.u32 %v1431
        %v1434 = vmul.u32.u64.compose %v1430, %v1425
        %v1435 = vextract.low.u32 %v1434
        %v1436 = vextract.high.u32 %v1434
        %v1437 = vmul.u32 %v1430, %v1421
        %v1438 = vadd.s32 %v1433, %v1435
        %vm1439 = vc.u32 %v1433, %v1435
        %v1440 = vadd.s32 %v1436, 1
        %v1441 = vsel %vm1439, %v1440, %v1436
        %v1442 = vadd.s32 %v1437, %v1441
        %v1443 = vadd.s32 %v1442, 536870912
        %v1444 = vshrl.u32 %v1443, 30
        %v1445 = vshll.u32 %v1444, 30
        %v1446 = vsub.s32 %v1442, %v1445
        %vm1447 = vcmp.lt.s32.totalorder %v1446, 0
        %v1448 = vsub.s32 0, %v1446
        %v1449 = vsel %vm1447, %v1448, %v1446
        %v1450 = vclz %v1449
        %v1451 = vsub.s32 %v1450, 2
        %vm1452 = vcmp.gt.s32.totalorder 0, %v1451
        %v1453 = vsel %vm1452, 0, %v1451
        %v1454 = vsub.s32 32, %v1453
        %v1455 = vshll.u32 %v1446, %v1453
        %v1456 = vshrl.u32 %v1438, %v1454
        %v1457 = vor.u32 %v1455, %v1456
        %v1458 = vsub.s32 4294967266, %v1453
        %v1459 = vadd.s32 %v1458, 127
        %v1460 = vshll.u32 %v1459, 23
        %v1461 = vor.u32 4788187, %v1460
        %v1462 = vand.u32 2147483647, %v1461
        %v1464 = vcvt.s32.f32 %v1457
        %v1465 = vmul.f32 %v1464, %v1462
        %v1466 = vxor.u32 %v1465, 2147483648
        %v1467 = vsel %vm1384, %v1466, %v1465
        %v1468 = vsub.s32 4, %v1444
        %v1469 = vsel %vm1384, %v1468, %v1444
        %v1470 = vsel %vm1383, %v339, %v1467
        %v1471 = vsel %vm1383, 0, %v1469
        %v1472 = vcosq.f32.pop %v1470
        %v1473 = vsinq.f32.pop %v1470
        %vm1474 = vweird.f32 %v339
        %v1475 = vand.u32 %v1471, 3
        %vm1476 = vcmp.lt.s32.totalorder %v1475, 2
        %vm1477 = vcmp.eq.s32.totalorder %v1475, 0
        %v1478 = vxor.u32 %v1473, 2147483648
        %v1479 = vsel %vm1477, %v1472, %v1478
        %vm1480 = vcmp.eq.s32.totalorder %v1475, 2
        %v1481 = vxor.u32 %v1472, 2147483648
        %v1482 = vsel %vm1480, %v1481, %v1473
        %v1483 = vsel %vm1476, %v1479, %v1482
        %v1484 = vsel %vm1474, nan, %v1483
        %v1485 = vand.u32 2147483647, %v342
        %vm1486 = vcmp.le.f32.partialorder %v1485, 0.7853982
        %vm1487 = vcmp.lt.s32.totalorder %v342, 0
        %v1488 = vand.u32 %v342, 2139095040
        %v1489 = vshrl.u32 %v1488, 23
        %v1490 = vsub.s32 %v1489, 127
        %v1491 = vand.u32 2147483647, %v342
        %v1492 = vand.u32 %v1491, 8388607
        %v1493 = vor.u32 %v1492, 8388608
        %v1494 = vsub.s32 0, %v1493
        %v1495 = vadd.s32 %v1490, 1
        %vm1496 = vcmp.gt.s32.totalorder %v1495, 0
        %v1497 = vsel %vm1496, %v1495, 0
        %v1498 = vshrl.u32 %v1497, 5
        %v1499 = vand.u32 %v1497, 31
        %v1500 = vsub.s32 32, %v1499
        %v1501 = vshrl.u32 683565275, %v1500
        %v1502 = vshll.u32 683565275, %v1499
        %v1503 = vshrl.u32 2475754826, %v1500
        %v1504 = vor.u32 %v1502, %v1503
        %v1505 = vshll.u32 2475754826, %v1499
        %v1506 = vshrl.u32 2131351028, %v1500
        %v1507 = vor.u32 %v1505, %v1506
        %v1508 = vshll.u32 2131351028, %v1499
        %v1509 = vshrl.u32 2102212464, %v1500
        %v1510 = vor.u32 %v1508, %v1509
        %v1511 = vshll.u32 2102212464, %v1499
        %v1512 = vshrl.u32 920167782, %v1500
        %v1513 = vor.u32 %v1511, %v1512
        %v1514 = vshll.u32 920167782, %v1499
        %v1515 = vshrl.u32 1326507024, %v1500
        %v1516 = vor.u32 %v1514, %v1515
        %vm1517 = vcmp.lt.s32.totalorder %v1498, 1
        %vm1518 = vcmp.lt.s32.totalorder %v1498, 2
        %vm1519 = vcmp.lt.s32.totalorder %v1498, 3
        %vm1520 = vcmp.lt.s32.totalorder %v1498, 4
        %v1521 = vsel %vm1517, %v1501, %v1504
        %v1522 = vsel %vm1520, %v1510, 2102212464
        %v1523 = vsel %vm1519, %v1507, %v1522
        %v1524 = vsel %vm1518, %v1521, %v1523
        %v1525 = vsel %vm1517, %v1504, %v1507
        %v1526 = vsel %vm1520, %v1513, 920167782
        %v1527 = vsel %vm1519, %v1510, %v1526
        %v1528 = vsel %vm1518, %v1525, %v1527
        %v1529 = vsel %vm1517, %v1507, %v1510
        %v1530 = vsel %vm1520, %v1516, 1326507024
        %v1531 = vsel %vm1519, %v1513, %v1530
        %v1532 = vsel %vm1518, %v1529, %v1531
        %v1533 = vshll.u32 %v1493, 8
        %v1534 = vmul.u32.u64.compose %v1533, %v1532
        %v1535 = vextract.low.u32 %v1534
        %v1536 = vextract.high.u32 %v1534
        %v1537 = vmul.u32.u64.compose %v1533, %v1528
        %v1538 = vextract.low.u32 %v1537
        %v1539 = vextract.high.u32 %v1537
        %v1540 = vmul.u32 %v1533, %v1524
        %v1541 = vadd.s32 %v1536, %v1538
        %vm1542 = vc.u32 %v1536, %v1538
        %v1543 = vadd.s32 %v1539, 1
        %v1544 = vsel %vm1542, %v1543, %v1539
        %v1545 = vadd.s32 %v1540, %v1544
        %v1546 = vadd.s32 %v1545, 536870912
        %v1547 = vshrl.u32 %v1546, 30
        %v1548 = vshll.u32 %v1547, 30
        %v1549 = vsub.s32 %v1545, %v1548
        %vm1550 = vcmp.lt.s32.totalorder %v1549, 0
        %v1551 = vsub.s32 0, %v1549
        %v1552 = vsel %vm1550, %v1551, %v1549
        %v1553 = vclz %v1552
        %v1554 = vsub.s32 %v1553, 2
        %vm1555 = vcmp.gt.s32.totalorder 0, %v1554
        %v1556 = vsel %vm1555, 0, %v1554
        %v1557 = vsub.s32 32, %v1556
        %v1558 = vshll.u32 %v1549, %v1556
        %v1559 = vshrl.u32 %v1541, %v1557
        %v1560 = vor.u32 %v1558, %v1559
        %v1561 = vsub.s32 4294967266, %v1556
        %v1562 = vadd.s32 %v1561, 127
        %v1563 = vshll.u32 %v1562, 23
        %v1564 = vor.u32 4788187, %v1563
        %v1565 = vand.u32 2147483647, %v1564
        %v1567 = vcvt.s32.f32 %v1560
        %v1568 = vmul.f32 %v1567, %v1565
        %v1569 = vxor.u32 %v1568, 2147483648
        %v1570 = vsel %vm1487, %v1569, %v1568
        %v1571 = vsub.s32 4, %v1547
        %v1572 = vsel %vm1487, %v1571, %v1547
        %v1573 = vsel %vm1486, %v342, %v1570
        %v1574 = vsel %vm1486, 0, %v1572
        %v1575 = vcosq.f32.pop %v1573
        %v1576 = vsinq.f32.pop %v1573
        %vm1577 = vweird.f32 %v342
        %v1578 = vand.u32 %v1574, 3
        %vm1579 = vcmp.lt.s32.totalorder %v1578, 2
        %vm1580 = vcmp.eq.s32.totalorder %v1578, 0
        %v1581 = vxor.u32 %v1576, 2147483648
        %v1582 = vsel %vm1580, %v1575, %v1581
        %vm1583 = vcmp.eq.s32.totalorder %v1578, 2
        %v1584 = vxor.u32 %v1575, 2147483648
        %v1585 = vsel %vm1583, %v1584, %v1576
        %v1586 = vsel %vm1579, %v1582, %v1585
        %v1587 = vsel %vm1577, nan, %v1586
        %v1588 = vand.u32 2147483647, %v347
        %vm1589 = vcmp.le.f32.partialorder %v1588, 0.7853982
        %vm1590 = vcmp.lt.s32.totalorder %v347, 0
        %v1591 = vand.u32 %v347, 2139095040
        %v1592 = vshrl.u32 %v1591, 23
        %v1593 = vsub.s32 %v1592, 127
        %v1594 = vand.u32 2147483647, %v347
        %v1595 = vand.u32 %v1594, 8388607
        %v1596 = vor.u32 %v1595, 8388608
        %v1597 = vsub.s32 0, %v1596
        %v1598 = vadd.s32 %v1593, 1
        %vm1599 = vcmp.gt.s32.totalorder %v1598, 0
        %v1600 = vsel %vm1599, %v1598, 0
        %v1601 = vshrl.u32 %v1600, 5
        %v1602 = vand.u32 %v1600, 31
        %v1603 = vsub.s32 32, %v1602
        %v1604 = vshrl.u32 683565275, %v1603
        %v1605 = vshll.u32 683565275, %v1602
        %v1606 = vshrl.u32 2475754826, %v1603
        %v1607 = vor.u32 %v1605, %v1606
        %v1608 = vshll.u32 2475754826, %v1602
        %v1609 = vshrl.u32 2131351028, %v1603
        %v1610 = vor.u32 %v1608, %v1609
        %v1611 = vshll.u32 2131351028, %v1602
        %v1612 = vshrl.u32 2102212464, %v1603
        %v1613 = vor.u32 %v1611, %v1612
        %v1614 = vshll.u32 2102212464, %v1602
        %v1615 = vshrl.u32 920167782, %v1603
        %v1616 = vor.u32 %v1614, %v1615
        %v1617 = vshll.u32 920167782, %v1602
        %v1618 = vshrl.u32 1326507024, %v1603
        %v1619 = vor.u32 %v1617, %v1618
        %vm1620 = vcmp.lt.s32.totalorder %v1601, 1
        %vm1621 = vcmp.lt.s32.totalorder %v1601, 2
        %vm1622 = vcmp.lt.s32.totalorder %v1601, 3
        %vm1623 = vcmp.lt.s32.totalorder %v1601, 4
        %v1624 = vsel %vm1620, %v1604, %v1607
        %v1625 = vsel %vm1623, %v1613, 2102212464
        %v1626 = vsel %vm1622, %v1610, %v1625
        %v1627 = vsel %vm1621, %v1624, %v1626
        %v1628 = vsel %vm1620, %v1607, %v1610
        %v1629 = vsel %vm1623, %v1616, 920167782
        %v1630 = vsel %vm1622, %v1613, %v1629
        %v1631 = vsel %vm1621, %v1628, %v1630
        %v1632 = vsel %vm1620, %v1610, %v1613
        %v1633 = vsel %vm1623, %v1619, 1326507024
        %v1634 = vsel %vm1622, %v1616, %v1633
        %v1635 = vsel %vm1621, %v1632, %v1634
        %v1636 = vshll.u32 %v1596, 8
        %v1637 = vmul.u32.u64.compose %v1636, %v1635
        %v1638 = vextract.low.u32 %v1637
        %v1639 = vextract.high.u32 %v1637
        %v1640 = vmul.u32.u64.compose %v1636, %v1631
        %v1641 = vextract.low.u32 %v1640
        %v1642 = vextract.high.u32 %v1640
        %v1643 = vmul.u32 %v1636, %v1627
        %v1644 = vadd.s32 %v1639, %v1641
        %vm1645 = vc.u32 %v1639, %v1641
        %v1646 = vadd.s32 %v1642, 1
        %v1647 = vsel %vm1645, %v1646, %v1642
        %v1648 = vadd.s32 %v1643, %v1647
        %v1649 = vadd.s32 %v1648, 536870912
        %v1650 = vshrl.u32 %v1649, 30
        %v1651 = vshll.u32 %v1650, 30
        %v1652 = vsub.s32 %v1648, %v1651
        %vm1653 = vcmp.lt.s32.totalorder %v1652, 0
        %v1654 = vsub.s32 0, %v1652
        %v1655 = vsel %vm1653, %v1654, %v1652
        %v1656 = vclz %v1655
        %v1657 = vsub.s32 %v1656, 2
        %vm1658 = vcmp.gt.s32.totalorder 0, %v1657
        %v1659 = vsel %vm1658, 0, %v1657
        %v1660 = vsub.s32 32, %v1659
        %v1661 = vshll.u32 %v1652, %v1659
        %v1662 = vshrl.u32 %v1644, %v1660
        %v1663 = vor.u32 %v1661, %v1662
        %v1664 = vsub.s32 4294967266, %v1659
        %v1665 = vadd.s32 %v1664, 127
        %v1666 = vshll.u32 %v1665, 23
        %v1667 = vor.u32 4788187, %v1666
        %v1668 = vand.u32 2147483647, %v1667
        %v1670 = vcvt.s32.f32 %v1663
        %v1671 = vmul.f32 %v1670, %v1668
        %v1672 = vxor.u32 %v1671, 2147483648
        %v1673 = vsel %vm1590, %v1672, %v1671
        %v1674 = vsub.s32 4, %v1650
        %v1675 = vsel %vm1590, %v1674, %v1650
        %v1676 = vsel %vm1589, %v347, %v1673
        %v1677 = vsel %vm1589, 0, %v1675
        %v1678 = vcosq.f32.pop %v1676
        %v1679 = vsinq.f32.pop %v1676
        %vm1680 = vweird.f32 %v347
        %v1681 = vand.u32 %v1677, 3
        %vm1682 = vcmp.lt.s32.totalorder %v1681, 2
        %vm1683 = vcmp.eq.s32.totalorder %v1681, 0
        %v1684 = vxor.u32 %v1679, 2147483648
        %v1685 = vsel %vm1683, %v1678, %v1684
        %vm1686 = vcmp.eq.s32.totalorder %v1681, 2
        %v1687 = vxor.u32 %v1678, 2147483648
        %v1688 = vsel %vm1686, %v1687, %v1679
        %v1689 = vsel %vm1682, %v1685, %v1688
        %v1690 = vsel %vm1680, nan, %v1689
        %v1691 = vmul.f32 %v454, 0.15811388
        %v1692 = vmul.f32 %v557, 0.15811388
        %v1693 = vmul.f32 %v660, 0.15811388
        %v1694 = vmul.f32 %v763, 0.15811388
        %v1695 = vmul.f32 %v866, 0.15811388
        %v1696 = vmul.f32 %v969, 0.15811388
        %v1697 = vmul.f32 %v1072, 0.15811388
        %v1698 = vmul.f32 %v1175, 0.15811388
        %v1699 = vmul.f32 %v1278, 0.15811388
        %v1700 = vmul.f32 %v1381, 0.15811388
        %v1701 = vmul.f32 %v1484, 0.15811388
        %v1702 = vmul.f32 %v1587, 0.15811388
        %v1703 = vmul.f32 %v1690, 0.15811388
        %1704 = vst [vmem:[%s164] sm:$0xff] %v1691
        %1705 = vst [vmem:[%s164 + $0x8] sm:$0xff] %v1692
        %1706 = vst [vmem:[%s164 + $0x10] sm:$0xff] %v1693
        %1707 = vst [vmem:[%s164 + $0x18] sm:$0xff] %v1694
        %1708 = vst [vmem:[%s164 + $0x20] sm:$0xff] %v1695
        %1709 = vst [vmem:[%s164 + $0x28] sm:$0xff] %v1696
        %1710 = vst [vmem:[%s164 + $0x30] sm:$0xff] %v1697
        %1711 = vst [vmem:[%s164 + $0x38] sm:$0xff] %v1698
        %1712 = vst [vmem:[%s164 + $0x40] sm:$0xff] %v1699
        %1713 = vst [vmem:[%s164 + $0x48] sm:$0xff] %v1700
        %1714 = vst [vmem:[%s164 + $0x50] sm:$0xff] %v1701
        %1715 = vst [vmem:[%s164 + $0x58] sm:$0xff] %v1702
        %1716 = vst [vmem:[%s164 + $0x60] sm:$0xff] %v1703
        %s1717 = sand.u32 %s93, 1
        %s1718 = scalar_lea.sflag [#allocation3], %s1717
        %s1719 = sand.u32 %s93, 1
        %s1720 = smul.addr %s1719, 104
        %s1721 = scalar_lea.vmem [#allocation2], %s1720
        // Predicated region
        $region33: #{tpu_custom_call.1} parent=31 // pred_check
          %p1722 = pneg %p103
        $region34: #{tpu_custom_call.1} parent=31 // pred_check_branch
          %1724 = sbr.rel (%p1722) target = $region36
        $region35: #{tpu_custom_call.1} parent=31 // pred_region
          %s1725 = smul.u32 13, %s17
          %s1727 = ssub.s32 1664, 1664
          %1728 = vsyncadd %s1718, %s1727
          %s1729 = smul.addr %s1725, 128
          %s1730 = scalar_lea.hbm %s3, %s1729
          %s1731 = sshll.u32 %s1721, 4
          %s1732 = int_to_ptr.vmem [resolvable:$true] %s1731
          %1737 = dma.vmem_to_hbm [thread:$0]  %s1732, 1664, %s1730, %s1718, 128, 128, 8
        $region36: #{tpu_custom_call.1} parent=31 // pred_fallthru
          _
      $region32: #{tpu_custom_call.1} parent=5 // pred_fallthru
        _
      %p1738 = scmp.le.s32.totalorder 2, %s12
      // Predicated region
      $region37: #{tpu_custom_call.1} parent=5 // pred_check
        %p1739 = pneg %p1738
      $region38: #{tpu_custom_call.1} parent=5 // pred_check_branch
        %1741 = sbr.rel (%p1739) target = $region40
      $region39: #{tpu_custom_call.1} parent=5 // pred_region
        %s1742 = ssub.s32 %s12, 2
        // Predicated region
        $region41: #{tpu_custom_call.1} parent=39 // pred_check
          %p1743 = pneg %p109
        $region42: #{tpu_custom_call.1} parent=39 // pred_check_branch
          %1745 = sbr.rel (%p1743) target = $region44
        $region43: #{tpu_custom_call.1} parent=39 // pred_region
          %s1746 = sand.u32 %s94, 1
          %s1747 = scalar_lea.sflag [#allocation3], %s1746
          %s1748 = sand.u32 %s94, 1
          %s1749 = smul.addr %s1748, 104
          %s1750 = scalar_lea.vmem [#allocation2], %s1749
          %1751 = dma.done %s1747, 1664
        $region44: #{tpu_custom_call.1} parent=39 // pred_fallthru
          _
      $region40: #{tpu_custom_call.1} parent=5 // pred_fallthru
        _
    $region6: #{tpu_custom_call.1} parent=1 // loop_footer
      %s16 = sadd.s32 1, %s12
    $region7: #{tpu_custom_call.1} parent=1 // loop_footer_branch
      %11 = sbr.rel target = $region3
    $region8: #{tpu_custom_call.1} parent=1 // loop_exit
      _
    %1752 = vsyncpa [#allocation3], 1
    %s1753 = scalar_lea.sflag [#allocation3], 1
    %1754 = vsyncpa %s1753, 1

</llo_original>
